<compile_context>
chip_gen: v5e
topology: v5e:2x2
jax: 0.10.0
libtpu: 0.0.40
codegen_flags: <defaults>
</compile_context>

<pallas_src>
import functools

import jax
import jax.numpy as jnp
from jax.experimental import pallas as pl
from jax.experimental.pallas import tpu as pltpu

_LANE = 128


def _round_up(n, m):
    return ((n + m - 1) // m) * m


def _tpu_generation():
    try:
        kind = jax.devices()[0].device_kind.lower()
    except Exception:
        return None
    for gen in ("v7", "v6", "v5", "v4", "v3"):
        if gen in kind:
            return gen
    return None


def _default_budget():
    gen = _tpu_generation()
    if gen in ("v5", "v6"):
        # 128 MiB physical VMEM: big tiles amortize per-step overhead and
        # shrink the halo/tile recompute ratio at high dilation.
        return 1024, 96 * 1024 * 1024
    # v7x (64 MiB per TC) or unknown: conservative budget.
    return 512, 48 * 1024 * 1024


def _default_collapse_taps():
    # Collapsed K*C contraction matches the 256x256 MXU on v6e/v7x; on v5e
    # (128-deep MXU) use K accumulated dots to skip the lane-concat copy.
    return _tpu_generation() in ("v6", "v7")


def _estimate_vmem_bytes(T, *, halo, h1, cin, cout, K, ba, bm, collapse):
    """Rough per-grid-step VMEM footprint for the fused block kernel."""
    act = 2 * T * (cin + cout) * ba                           # dbl-buffered x/out blocks
    scratch = ((T + halo) * cin + (T + h1) * cout + max(halo, 8) * cin) * bm
    inter = ((T + h1) * cout + 2 * T * cout) * 4              # f32 accumulators
    if collapse:
        inter += (K * (T + h1) * cin + K * T * cout) * bm     # lane-concat copies
    weights = 2 * (K * cin * cout + K * cout * cout + cin * cout + 2 * cout) * bm
    return act + scratch + inter + weights


def _choose_l_tile(L, *, halo, h1, cin, cout, K, ba, bm, collapse, target,
                   vmem_budget):
    """Largest multiple-of-8 divisor of L that is <= target and fits VMEM.

    The carried-halo scheme has no "tile >= halo" requirement, so deep
    dilation layers never need a full-L fallback for correctness.
    """
    cands = [t for t in range(8, min(L, target) + 1, 8) if L % t == 0]
    if not cands:
        cands = [L]          # full-length block (allowed when it equals the dim)
    fits = [t for t in cands
            if _estimate_vmem_bytes(t, halo=halo, h1=h1, cin=cin, cout=cout,
                                    K=K, ba=ba, bm=bm, collapse=collapse)
            <= vmem_budget]
    return max(fits) if fits else min(cands)


# ---------------------------------------------------------------------------
# Fused TemporalBlock kernel (conv1+ReLU, conv2+ReLU, residual, final ReLU)
# ---------------------------------------------------------------------------

def _temporal_block_kernel(x_ref, w1_ref, b1_ref, w2_ref, b2_ref, *rest,
                           K, dilation, T, has_downsample, collapse_taps):
    """One (batch, L-tile) grid step of a TemporalBlock.

    x_ref            : (1, T, Cin)          current activation tile
    w1_ref           : (K*Cin, C) or (K, Cin, C)
    w2_ref           : (K*C,  C) or (K, C,  C)
    b*_ref           : (1, C) f32
    wd_ref, bd_ref   : (Cin, C), (1, C)     optional 1x1 downsample
    o_ref            : (1, T, C)
    xh_ref  (scratch): (1, T + 2*h1, Cin)   causally haloed input window
    y1_ref  (scratch): (1, T + h1, C)       conv1 output (+ conv2 history)
    carry_ref(scratch): (1, 2*h1, Cin)      halo carried to the next L-tile
    """
    if has_downsample:
        wd_ref, bd_ref, o_ref, xh_ref, y1_ref, carry_ref = rest
    else:
        o_ref, xh_ref, y1_ref, carry_ref = rest

    d = dilation
    h1 = (K - 1) * d             # causal history of a single conv
    H = 2 * h1                   # history of conv1 o conv2
    Cin = x_ref.shape[-1]
    li = pl.program_id(1)        # position along the (sequential) L axis
    mxu_dtype = xh_ref.dtype

    x_cur = x_ref[...]                       # activation dtype (f32 typically)
    x_mxu = x_cur.astype(mxu_dtype)          # MXU operand dtype (bf16 default)

    # ---- assemble the haloed window: rows [t0 - 2*h1, t0 + T) ---------------
    if H > 0:
        @pl.when(li == 0)
        def _():                              # causal zero padding (t < 0)
            xh_ref[:, :H, :] = jnp.zeros((1, H, Cin), mxu_dtype)

        @pl.when(li > 0)
        def _():                              # last H rows seen so far
            xh_ref[:, :H, :] = carry_ref[...]
    xh_ref[:, H:, :] = x_mxu
    if H > 0:
        # Carry the last H rows of the window to the next tile.  Correct even
        # when T < H (deep dilations): the carry then reuses part of itself,
        # i.e. always holds the last H rows of the sequence so far, and the
        # zeros written at tile 0 propagate for all global rows t < 0.
        carry_ref[...] = xh_ref[:, T:, :]

    def conv(src_ref, w_ref, rows):
        # Dilated causal conv as MXU contractions; tap k applies to x[t - k*d].
        if collapse_taps:
            xcat = jnp.concatenate(
                [src_ref[:, h1 - k * d: h1 - k * d + rows, :] for k in range(K)],
                axis=-1) if K > 1 else src_ref[:, h1: h1 + rows, :]
            return jax.lax.dot_general(
                xcat, w_ref[...], dimension_numbers=(((2,), (0,)), ((), ())),
                preferred_element_type=jnp.float32)
        acc = jax.lax.dot_general(
            src_ref[:, h1: h1 + rows, :], w_ref[0],
            dimension_numbers=(((2,), (0,)), ((), ())),
            preferred_element_type=jnp.float32)
        for k in range(1, K):
            acc = acc + jax.lax.dot_general(
                src_ref[:, h1 - k * d: h1 - k * d + rows, :], w_ref[k],
                dimension_numbers=(((2,), (0,)), ((), ())),
                preferred_element_type=jnp.float32)
        return acc

    # ---- conv1 + bias + ReLU over T + h1 rows (extra h1 = conv2 history) ----
    y1 = conv(xh_ref, w1_ref, T + h1)
    y1 = jnp.maximum(y1 + b1_ref[...].astype(jnp.float32), 0.0)
    y1_ref[...] = y1.astype(y1_ref.dtype)
    if h1 > 0:
        # Rows of y1 at global t < 0 are conv2's causal zero padding, but
        # ReLU(b1) != 0 there.  Only tiles with t0 < h1 are affected, so gate
        # with pl.when (steady-state tiles pay nothing) and touch only the
        # first h1 rows of the scratch.
        @pl.when(li * T < h1)
        def _():
            head = y1_ref[:, :h1, :]
            row = jax.lax.broadcasted_iota(jnp.int32, head.shape, 1)
            y1_ref[:, :h1, :] = jnp.where(row < (h1 - li * T),
                                          jnp.zeros_like(head), head)

    # ---- conv2 + bias + ReLU -------------------------------------------------
    y2 = conv(y1_ref, w2_ref, T)
    y2 = jnp.maximum(y2 + b2_ref[...].astype(jnp.float32), 0.0)

    # ---- residual branch (identity or fused 1x1 downsample) + final ReLU ----
    if has_downsample:
        res = jax.lax.dot_general(x_mxu, wd_ref[...],
                                  dimension_numbers=(((2,), (0,)), ((), ())),
                                  preferred_element_type=jnp.float32)
        res = res + bd_ref[...].astype(jnp.float32)
    else:
        res = x_cur.astype(jnp.float32)

    o_ref[...] = jnp.maximum(y2 + res, 0.0).astype(o_ref.dtype)


# ---------------------------------------------------------------------------
# pallas_call wrapper for one TemporalBlock
# ---------------------------------------------------------------------------

def temporal_block(x_nlc, layer, dilation, *, mxu_dtype=None, l_tile_target=None,
                   vmem_limit_bytes=None, collapse_taps=None):
    """x_nlc: (B, L, Cin) channel-last; returns (B, L, Cout)."""
    B, L, Cin = x_nlc.shape
    K, _, Cout = layer["w1"].shape
    h1 = (K - 1) * dilation
    halo = 2 * h1

    if mxu_dtype is None:
        mxu_dtype = jnp.bfloat16 if x_nlc.dtype == jnp.float32 else x_nlc.dtype
    if collapse_taps is None:
        collapse_taps = _default_collapse_taps()
    tile_default, vmem_default = _default_budget()
    if l_tile_target is None:
        l_tile_target = tile_default
    if vmem_limit_bytes is None:
        vmem_limit_bytes = vmem_default

    ba = jnp.dtype(x_nlc.dtype).itemsize
    bm = jnp.dtype(mxu_dtype).itemsize
    collapsed = bool(collapse_taps) and K > 1
    T = _choose_l_tile(L, halo=halo, h1=h1, cin=Cin, cout=Cout, K=K, ba=ba,
                       bm=bm, collapse=collapsed, target=l_tile_target,
                       vmem_budget=int(0.6 * vmem_limit_bytes))
    n_tiles = L // T

    w1 = layer["w1"].astype(mxu_dtype)           # (K, Cin, Cout)
    w2 = layer["w2"].astype(mxu_dtype)           # (K, Cout, Cout)
    if collapsed:                                # collapse taps for one MXU pass
        w1 = w1.reshape(K * Cin, Cout)
        w2 = w2.reshape(K * Cout, Cout)
    b1 = layer["b1"].reshape(1, Cout).astype(jnp.float32)
    b2 = layer["b2"].reshape(1, Cout).astype(jnp.float32)
    has_downsample = "wd" in layer

    kernel = functools.partial(
        _temporal_block_kernel, K=K, dilation=dilation, T=T,
        has_downsample=has_downsample, collapse_taps=collapsed)

    def resident(arr):   # weights/biases stay in VMEM across the whole grid
        nd = arr.ndim
        # TODO(synk): pipeline_mode=pl.Buffered(1) would stop double-buffering
        # these never-changing blocks (a few MiB of v7x VMEM for wide layers).
        return pl.BlockSpec(arr.shape, lambda *_, _nd=nd: (0,) * _nd)

    in_specs = [
        pl.BlockSpec((1, T, Cin), lambda b, i: (b, i, 0)),   # single read of x
        resident(w1), resident(b1), resident(w2), resident(b2),
    ]
    args = [x_nlc, w1, b1, w2, b2]
    if has_downsample:
        wd = layer["wd"].astype(mxu_dtype)                   # (Cin, Cout)
        bd = layer["bd"].reshape(1, Cout).astype(jnp.float32)
        in_specs += [resident(wd), resident(bd)]
        args += [wd, bd]

    return pl.pallas_call(
        kernel,
        out_shape=jax.ShapeDtypeStruct((B, L, Cout), x_nlc.dtype),
        grid=(B, n_tiles),
        in_specs=in_specs,
        out_specs=pl.BlockSpec((1, T, Cout), lambda b, i: (b, i, 0)),
        scratch_shapes=[
            pltpu.VMEM((1, T + halo, Cin), mxu_dtype),            # haloed window
            pltpu.VMEM((1, T + h1, Cout), mxu_dtype),              # conv1 output
            pltpu.VMEM((1, halo if halo > 0 else 8, Cin), mxu_dtype),  # carried halo
        ],
        compiler_params=pltpu.CompilerParams(
            # batch shards over cores; L must stay sequential for the carry.
            dimension_semantics=("parallel", "arbitrary"),
            vmem_limit_bytes=vmem_limit_bytes),
    )(*args)


# ---------------------------------------------------------------------------
# Parameter init, lane padding, and the full TemporalConvNet forward
# ---------------------------------------------------------------------------

def init_tcn_params(key, num_inputs, num_channels, kernel_size=2):
    """Deterministic init; weight_norm at init == raw weight.

    Layout: w1/w2 are (K, Cin, Cout) with tap k applying to x[t - k*dilation];
    downsample wd is (Cin, Cout).
    """
    params = []
    for i, out_ch in enumerate(num_channels):
        in_ch = num_inputs if i == 0 else num_channels[i - 1]
        key, k1, k2, k3, k4, k5, k6 = jax.random.split(key, 7)
        layer = {
            "w1": 0.1 * jax.random.normal(k1, (kernel_size, in_ch, out_ch), jnp.float32),
            "b1": 0.1 * jax.random.normal(k2, (out_ch,), jnp.float32),
            "w2": 0.1 * jax.random.normal(k3, (kernel_size, out_ch, out_ch), jnp.float32),
            "b2": 0.1 * jax.random.normal(k4, (out_ch,), jnp.float32),
        }
        if in_ch != out_ch:   # downsample = Conv1d(in, out, 1)
            layer["wd"] = 0.1 * jax.random.normal(k5, (in_ch, out_ch), jnp.float32)
            layer["bd"] = 0.1 * jax.random.normal(k6, (out_ch,), jnp.float32)
        params.append(layer)
    return params


def _pad_params_for_lanes(params, lane=_LANE):
    """Zero-pad channel dims to multiples of 128 -> lane-dense loads/stores.

    Padded channels stay exactly zero through every layer (zero weight
    rows/cols + zero bias + ReLU(0) = 0).
    """
    padded = []
    for layer in params:
        K, cin, cout = layer["w1"].shape
        cin_p, cout_p = _round_up(cin, lane), _round_up(cout, lane)
        new = {
            "w1": jnp.pad(layer["w1"], ((0, 0), (0, cin_p - cin), (0, cout_p - cout))),
            "b1": jnp.pad(layer["b1"], (0, cout_p - cout)),
            "w2": jnp.pad(layer["w2"], ((0, 0), (0, cout_p - cout), (0, cout_p - cout))),
            "b2": jnp.pad(layer["b2"], (0, cout_p - cout)),
        }
        if "wd" in layer:
            new["wd"] = jnp.pad(layer["wd"], ((0, cin_p - cin), (0, cout_p - cout)))
            new["bd"] = jnp.pad(layer["bd"], (0, cout_p - cout))
        padded.append(new)
    return padded


def temporal_conv_net(x_ncl, params, *, mxu_dtype=None, l_tile_target=None,
                      pad_channels=True, collapse_taps=None):
    """x_ncl: (B, C, L) like PyTorch; returns (B, C_last, L)."""
    B, c_in, L = x_ncl.shape
    c_out_final = params[-1]["b1"].shape[0]
    x = jnp.transpose(x_ncl, (0, 2, 1))          # NCL -> NLC (channels on lanes)
    if pad_channels:
        # TODO(synk): for very narrow channel counts, packing several blocks'
        # channels (or batch) onto the lane axis would avoid the 128x padding
        # blow-up; not implemented here.
        c_in_p = _round_up(c_in, _LANE)
        x = jnp.pad(x, ((0, 0), (0, 0), (0, c_in_p - c_in)))
        params = _pad_params_for_lanes(params)
    # TODO(synk): fusing pairs of early blocks (dilation 1+2, 4+8) into one
    # pallas_call would remove one more activation round trip per pair.
    for i, layer in enumerate(params):
        x = temporal_block(x, layer, dilation=2 ** i, mxu_dtype=mxu_dtype,
                           l_tile_target=l_tile_target,
                           collapse_taps=collapse_taps)
    if pad_channels:
        x = x[..., :c_out_final]
    return jnp.transpose(x, (0, 2, 1))           # back to NCL


# ---------------------------------------------------------------------------
# Pure-JAX reference (for a correctness cross-check in main)
# ---------------------------------------------------------------------------

def _ref_causal_conv(x_nlc, w, b, dilation):
    K = w.shape[0]
    B, L, _ = x_nlc.shape
    pad = (K - 1) * dilation
    xp = jnp.pad(x_nlc, ((0, 0), (pad, 0), (0, 0)))
    acc = jnp.zeros((B, L, w.shape[-1]), jnp.float32)
    for k in range(K):
        acc = acc + jnp.einsum("blc,cd->bld",
                               xp[:, pad - k * dilation: pad - k * dilation + L, :],
                               w[k])
    return acc + b[None, None, :]


def reference_tcn(x_ncl, params):
    x = jnp.transpose(x_ncl, (0, 2, 1)).astype(jnp.float32)
    for i, layer in enumerate(params):
        d = 2 ** i
        y = jax.nn.relu(_ref_causal_conv(x, layer["w1"], layer["b1"], d))
        y = jax.nn.relu(_ref_causal_conv(y, layer["w2"], layer["b2"], d))
        if "wd" in layer:
            res = jnp.einsum("blc,cd->bld", x, layer["wd"]) + layer["bd"][None, None, :]
        else:
            res = x
        x = jax.nn.relu(y + res)
    return jnp.transpose(x, (0, 2, 1))


# ---------------------------------------------------------------------------
# main
# ---------------------------------------------------------------------------

if __name__ == "__main__":
    key = jax.random.PRNGKey(0)
    k_x, k_p = jax.random.split(key)

    B, C_in, L = 2, 4, 32
    # dilations 1,2,4,8,16: exercises identity and 1x1 residuals, the carried
    # halo with halo <= tile, halo == 2*tile, and halo > 2*tile (T < h1).
    num_channels = [8, 8, 16, 16, 16]
    kernel_size = 2

    x = jax.random.normal(k_x, (B, C_in, L), jnp.float32)   # NCL, like PyTorch
    params = init_tcn_params(k_p, C_in, num_channels, kernel_size)

    y_ref = reference_tcn(x, params)

    # Tiny l_tile_target so the demo exercises the L-grid + carried-halo path
    # (4 tiles of 8 rows); realistic lengths use the device-dependent defaults.
    fwd_exact = jax.jit(functools.partial(                  # exact f32-MXU path
        temporal_conv_net, mxu_dtype=jnp.float32, l_tile_target=8,
        collapse_taps=True))
    fwd_fast = jax.jit(functools.partial(                   # default bf16-MXU path
        temporal_conv_net, mxu_dtype=jnp.bfloat16, l_tile_target=8))

    y = fwd_exact(x, params)
    jax.block_until_ready(y)
    assert y.shape == (B, num_channels[-1], L), y.shape
    err = float(jnp.max(jnp.abs(y - y_ref)))
    assert err < 1e-4, f"f32-MXU kernel/reference mismatch: {err}"

    y_fast = fwd_fast(x, params)
    jax.block_until_ready(y_fast)
    err_fast = float(jnp.max(jnp.abs(y_fast - y_ref)))
    assert err_fast < 5e-2, f"bf16-MXU kernel/reference mismatch: {err_fast}"

    print("KERNEL_OK")
</pallas_src>

<mosaic_0001>
module attributes {stable_mosaic.version = 11 : i64} {
  func.func @_temporal_block_kernel(%arg0: i32, %arg1: i32, %arg2: memref<1x8x128xf32, #tpu.memory_space<vmem>>, %arg3: memref<256x128xf32, #tpu.memory_space<vmem>>, %arg4: memref<1x128xf32, #tpu.memory_space<vmem>>, %arg5: memref<256x128xf32, #tpu.memory_space<vmem>>, %arg6: memref<1x128xf32, #tpu.memory_space<vmem>>, %arg7: memref<128x128xf32, #tpu.memory_space<vmem>>, %arg8: memref<1x128xf32, #tpu.memory_space<vmem>>, %arg9: memref<1x8x128xf32, #tpu.memory_space<vmem>>, %arg10: memref<1x10x128xf32, #tpu.memory_space<vmem>>, %arg11: memref<1x9x128xf32, #tpu.memory_space<vmem>>, %arg12: memref<1x2x128xf32, #tpu.memory_space<vmem>>) attributes {dimension_semantics = [#tpu.dimension_semantics<parallel>, #tpu.dimension_semantics<arbitrary>], iteration_bounds = array<i64: 2, 4>, scalar_prefetch = 0 : i64, scratch_operands = 3 : i64, tpu.core_type = #tpu.core_type<tc>, window_params = [{transform_indices = @transform_0, window_bounds = array<i64: 1, 8, 128>}, {pipeline_mode = #tpu.pipeline_mode<synchronous>, transform_indices = @transform_1, window_bounds = array<i64: 256, 128>}, {pipeline_mode = #tpu.pipeline_mode<synchronous>, transform_indices = @transform_2, window_bounds = array<i64: 1, 128>}, {pipeline_mode = #tpu.pipeline_mode<synchronous>, transform_indices = @transform_3, window_bounds = array<i64: 256, 128>}, {pipeline_mode = #tpu.pipeline_mode<synchronous>, transform_indices = @transform_4, window_bounds = array<i64: 1, 128>}, {pipeline_mode = #tpu.pipeline_mode<synchronous>, transform_indices = @transform_5, window_bounds = array<i64: 128, 128>}, {pipeline_mode = #tpu.pipeline_mode<synchronous>, transform_indices = @transform_6, window_bounds = array<i64: 1, 128>}, {transform_indices = @transform_7, window_bounds = array<i64: 1, 8, 128>}]} {
    %c0 = arith.constant 0 : index
    %c0_0 = arith.constant 0 : index
    %c0_1 = arith.constant 0 : index
    %0 = vector.load %arg2[%c0, %c0_0, %c0_1] : memref<1x8x128xf32, #tpu.memory_space<vmem>>, vector<1x8x128xf32>
    %c0_i32 = arith.constant 0 : i32
    %1 = arith.cmpi eq, %arg1, %c0_i32 : i32
    %2 = arith.extui %1 : i1 to i32
    %c0_i32_2 = arith.constant 0 : i32
    %3 = arith.cmpi ne, %2, %c0_i32_2 : i32
    scf.if %3 {
      %cst_47 = arith.constant 0.000000e+00 : f32
      %47 = vector.broadcast %cst_47 : f32 to vector<1x2x128xf32>
      %c0_48 = arith.constant 0 : index
      %c0_49 = arith.constant 0 : index
      %c0_50 = arith.constant 0 : index
      %48 = vector.load %arg10[%c0_48, %c0_49, %c0_50] : memref<1x10x128xf32, #tpu.memory_space<vmem>>, vector<1x2x128xf32>
      tpu.vector_store %arg10[%c0_48, %c0_49, %c0_50], %47 {strides = array<i32>} : memref<1x10x128xf32, #tpu.memory_space<vmem>>, vector<1x2x128xf32>,
    } else {
    }
    %c0_i32_3 = arith.constant 0 : i32
    %4 = arith.cmpi sgt, %arg1, %c0_i32_3 : i32
    %5 = arith.extui %4 : i1 to i32
    %c0_i32_4 = arith.constant 0 : i32
    %6 = arith.cmpi ne, %5, %c0_i32_4 : i32
    scf.if %6 {
      %c0_47 = arith.constant 0 : index
      %c0_48 = arith.constant 0 : index
      %c0_49 = arith.constant 0 : index
      %47 = vector.load %arg12[%c0_47, %c0_48, %c0_49] : memref<1x2x128xf32, #tpu.memory_space<vmem>>, vector<1x2x128xf32>
      %c0_50 = arith.constant 0 : index
      %c0_51 = arith.constant 0 : index
      %c0_52 = arith.constant 0 : index
      %48 = vector.load %arg10[%c0_50, %c0_51, %c0_52] : memref<1x10x128xf32, #tpu.memory_space<vmem>>, vector<1x2x128xf32>
      tpu.vector_store %arg10[%c0_50, %c0_51, %c0_52], %47 {strides = array<i32>} : memref<1x10x128xf32, #tpu.memory_space<vmem>>, vector<1x2x128xf32>,
    } else {
    }
    %c0_5 = arith.constant 0 : index
    %c2 = arith.constant 2 : index
    %c0_6 = arith.constant 0 : index
    %7 = vector.load %arg10[%c0_5, %c2, %c0_6] : memref<1x10x128xf32, #tpu.memory_space<vmem>>, vector<1x8x128xf32>
    tpu.vector_store %arg10[%c0_5, %c2, %c0_6], %0 {strides = array<i32>} : memref<1x10x128xf32, #tpu.memory_space<vmem>>, vector<1x8x128xf32>,
    %c0_7 = arith.constant 0 : index
    %c8 = arith.constant 8 : index
    %c0_8 = arith.constant 0 : index
    %8 = vector.load %arg10[%c0_7, %c8, %c0_8] : memref<1x10x128xf32, #tpu.memory_space<vmem>>, vector<1x2x128xf32>
    %c0_9 = arith.constant 0 : index
    %c0_10 = arith.constant 0 : index
    %c0_11 = arith.constant 0 : index
    %9 = vector.load %arg12[%c0_9, %c0_10, %c0_11] : memref<1x2x128xf32, #tpu.memory_space<vmem>>, vector<1x2x128xf32>
    tpu.vector_store %arg12[%c0_9, %c0_10, %c0_11], %8 {strides = array<i32>} : memref<1x2x128xf32, #tpu.memory_space<vmem>>, vector<1x2x128xf32>,
    %c0_12 = arith.constant 0 : index
    %c1 = arith.constant 1 : index
    %c0_13 = arith.constant 0 : index
    %10 = vector.load %arg10[%c0_12, %c1, %c0_13] : memref<1x10x128xf32, #tpu.memory_space<vmem>>, vector<1x9x128xf32>
    %c0_14 = arith.constant 0 : index
    %c0_15 = arith.constant 0 : index
    %c0_16 = arith.constant 0 : index
    %11 = vector.load %arg10[%c0_14, %c0_15, %c0_16] : memref<1x10x128xf32, #tpu.memory_space<vmem>>, vector<1x9x128xf32>
    %12 = tpu.concatenate %10, %11 in 2 : vector<1x9x128xf32>, vector<1x9x128xf32> -> vector<1x9x256xf32>
    %c0_17 = arith.constant 0 : index
    %c0_18 = arith.constant 0 : index
    %13 = vector.load %arg3[%c0_17, %c0_18] : memref<256x128xf32, #tpu.memory_space<vmem>>, vector<256x128xf32>
    %cst = arith.constant dense<0.000000e+00> : vector<1x9x128xf32>
    %14 = tpu.matmul %12, %13, %cst {dimension_numbers = #tpu.dot_dimension_numbers<[2], [0], [0, 1], [1], [0, 0, 0, 1, 1, 1], [], []>} : vector<1x9x256xf32>, vector<256x128xf32>, vector<1x9x128xf32> -> vector<1x9x128xf32>
    %c0_19 = arith.constant 0 : index
    %c0_20 = arith.constant 0 : index
    %15 = vector.load %arg4[%c0_19, %c0_20] : memref<1x128xf32, #tpu.memory_space<vmem>>, vector<1x128xf32>
    %16 = vector.shape_cast %15 : vector<1x128xf32> to vector<1x1x128xf32>
    %17 = vector.broadcast %16 : vector<1x1x128xf32> to vector<1x9x128xf32>
    %18 = arith.addf %14, %17 : vector<1x9x128xf32>
    %cst_21 = arith.constant 0.000000e+00 : f32
    %19 = vector.broadcast %cst_21 : f32 to vector<1x9x128xf32>
    %20 = arith.maximumf %18, %19 : vector<1x9x128xf32>
    %c0_22 = arith.constant 0 : index
    %c0_23 = arith.constant 0 : index
    %c0_24 = arith.constant 0 : index
    %21 = vector.load %arg11[%c0_22, %c0_23, %c0_24] : memref<1x9x128xf32, #tpu.memory_space<vmem>>, vector<1x9x128xf32>
    tpu.vector_store %arg11[%c0_22, %c0_23, %c0_24], %20 {strides = array<i32>} : memref<1x9x128xf32, #tpu.memory_space<vmem>>, vector<1x9x128xf32>,
    %c8_i32 = arith.constant 8 : i32
    %22 = arith.muli %arg1, %c8_i32 : i32
    %c1_i32 = arith.constant 1 : i32
    %23 = arith.cmpi slt, %22, %c1_i32 : i32
    %24 = arith.extui %23 : i1 to i32
    %c0_i32_25 = arith.constant 0 : i32
    %25 = arith.cmpi ne, %24, %c0_i32_25 : i32
    scf.if %25 {
      %c0_47 = arith.constant 0 : index
      %c0_48 = arith.constant 0 : index
      %c0_49 = arith.constant 0 : index
      %47 = vector.load %arg11[%c0_47, %c0_48, %c0_49] : memref<1x9x128xf32, #tpu.memory_space<vmem>>, vector<1x1x128xf32>
      %48 = tpu.iota {dimensions = array<i32: 1>} : vector<1x1x128xi32>
      %c8_i32_50 = arith.constant 8 : i32
      %49 = arith.muli %arg1, %c8_i32_50 : i32
      %c1_i32_51 = arith.constant 1 : i32
      %50 = arith.subi %c1_i32_51, %49 : i32
      %51 = vector.broadcast %50 : i32 to vector<1x1x128xi32>
      %52 = arith.cmpi slt, %48, %51 : vector<1x1x128xi32>
      %cst_52 = arith.constant 0.000000e+00 : f32
      %53 = vector.broadcast %cst_52 : f32 to vector<1x1x128xf32>
      %54 = arith.select %52, %53, %47 : vector<1x1x128xi1>, vector<1x1x128xf32>
      %c0_53 = arith.constant 0 : index
      %c0_54 = arith.constant 0 : index
      %c0_55 = arith.constant 0 : index
      %55 = vector.load %arg11[%c0_53, %c0_54, %c0_55] : memref<1x9x128xf32, #tpu.memory_space<vmem>>, vector<1x1x128xf32>
      tpu.vector_store %arg11[%c0_53, %c0_54, %c0_55], %54 {strides = array<i32>} : memref<1x9x128xf32, #tpu.memory_space<vmem>>, vector<1x1x128xf32>,
    } else {
    }
    %c0_26 = arith.constant 0 : index
    %c1_27 = arith.constant 1 : index
    %c0_28 = arith.constant 0 : index
    %26 = vector.load %arg11[%c0_26, %c1_27, %c0_28] : memref<1x9x128xf32, #tpu.memory_space<vmem>>, vector<1x8x128xf32>
    %c0_29 = arith.constant 0 : index
    %c0_30 = arith.constant 0 : index
    %c0_31 = arith.constant 0 : index
    %27 = vector.load %arg11[%c0_29, %c0_30, %c0_31] : memref<1x9x128xf32, #tpu.memory_space<vmem>>, vector<1x8x128xf32>
    %28 = tpu.concatenate %26, %27 in 2 : vector<1x8x128xf32>, vector<1x8x128xf32> -> vector<1x8x256xf32>
    %c0_32 = arith.constant 0 : index
    %c0_33 = arith.constant 0 : index
    %29 = vector.load %arg5[%c0_32, %c0_33] : memref<256x128xf32, #tpu.memory_space<vmem>>, vector<256x128xf32>
    %cst_34 = arith.constant dense<0.000000e+00> : vector<1x8x128xf32>
    %30 = tpu.matmul %28, %29, %cst_34 {dimension_numbers = #tpu.dot_dimension_numbers<[2], [0], [0, 1], [1], [0, 0, 0, 1, 1, 1], [], []>} : vector<1x8x256xf32>, vector<256x128xf32>, vector<1x8x128xf32> -> vector<1x8x128xf32>
    %c0_35 = arith.constant 0 : index
    %c0_36 = arith.constant 0 : index
    %31 = vector.load %arg6[%c0_35, %c0_36] : memref<1x128xf32, #tpu.memory_space<vmem>>, vector<1x128xf32>
    %32 = vector.shape_cast %31 : vector<1x128xf32> to vector<1x1x128xf32>
    %33 = vector.broadcast %32 : vector<1x1x128xf32> to vector<1x8x128xf32>
    %34 = arith.addf %30, %33 : vector<1x8x128xf32>
    %cst_37 = arith.constant 0.000000e+00 : f32
    %35 = vector.broadcast %cst_37 : f32 to vector<1x8x128xf32>
    %36 = arith.maximumf %34, %35 : vector<1x8x128xf32>
    %c0_38 = arith.constant 0 : index
    %c0_39 = arith.constant 0 : index
    %37 = vector.load %arg7[%c0_38, %c0_39] : memref<128x128xf32, #tpu.memory_space<vmem>>, vector<128x128xf32>
    %cst_40 = arith.constant dense<0.000000e+00> : vector<1x8x128xf32>
    %38 = tpu.matmul %0, %37, %cst_40 {dimension_numbers = #tpu.dot_dimension_numbers<[2], [0], [0, 1], [1], [0, 0, 0, 1, 1, 1], [], []>} : vector<1x8x128xf32>, vector<128x128xf32>, vector<1x8x128xf32> -> vector<1x8x128xf32>
    %c0_41 = arith.constant 0 : index
    %c0_42 = arith.constant 0 : index
    %39 = vector.load %arg8[%c0_41, %c0_42] : memref<1x128xf32, #tpu.memory_space<vmem>>, vector<1x128xf32>
    %40 = vector.shape_cast %39 : vector<1x128xf32> to vector<1x1x128xf32>
    %41 = vector.broadcast %40 : vector<1x1x128xf32> to vector<1x8x128xf32>
    %42 = arith.addf %38, %41 : vector<1x8x128xf32>
    %43 = arith.addf %36, %42 : vector<1x8x128xf32>
    %cst_43 = arith.constant 0.000000e+00 : f32
    %44 = vector.broadcast %cst_43 : f32 to vector<1x8x128xf32>
    %45 = arith.maximumf %43, %44 : vector<1x8x128xf32>
    %c0_44 = arith.constant 0 : index
    %c0_45 = arith.constant 0 : index
    %c0_46 = arith.constant 0 : index
    %46 = vector.load %arg9[%c0_44, %c0_45, %c0_46] : memref<1x8x128xf32, #tpu.memory_space<vmem>>, vector<1x8x128xf32>
    tpu.vector_store %arg9[%c0_44, %c0_45, %c0_46], %45 {strides = array<i32>} : memref<1x8x128xf32, #tpu.memory_space<vmem>>, vector<1x8x128xf32>,
    return
  }
  func.func @transform_0(%arg0: i32, %arg1: i32) -> (i32, i32, i32) {
    %c0_i32 = arith.constant 0 : i32
    %c0_i32_0 = arith.constant 0 : i32
    return %arg0, %arg1, %c0_i32 : i32, i32, i32
  }
  func.func @transform_1(%arg0: i32, %arg1: i32) -> (i32, i32) {
    %c0_i32 = arith.constant 0 : i32
    %c0_i32_0 = arith.constant 0 : i32
    %c0_i32_1 = arith.constant 0 : i32
    return %c0_i32, %c0_i32_0 : i32, i32
  }
  func.func @transform_2(%arg0: i32, %arg1: i32) -> (i32, i32) {
    %c0_i32 = arith.constant 0 : i32
    %c0_i32_0 = arith.constant 0 : i32
    %c0_i32_1 = arith.constant 0 : i32
    return %c0_i32, %c0_i32_0 : i32, i32
  }
  func.func @transform_3(%arg0: i32, %arg1: i32) -> (i32, i32) {
    %c0_i32 = arith.constant 0 : i32
    %c0_i32_0 = arith.constant 0 : i32
    %c0_i32_1 = arith.constant 0 : i32
    return %c0_i32, %c0_i32_0 : i32, i32
  }
  func.func @transform_4(%arg0: i32, %arg1: i32) -> (i32, i32) {
    %c0_i32 = arith.constant 0 : i32
    %c0_i32_0 = arith.constant 0 : i32
    %c0_i32_1 = arith.constant 0 : i32
    return %c0_i32, %c0_i32_0 : i32, i32
  }
  func.func @transform_5(%arg0: i32, %arg1: i32) -> (i32, i32) {
    %c0_i32 = arith.constant 0 : i32
    %c0_i32_0 = arith.constant 0 : i32
    %c0_i32_1 = arith.constant 0 : i32
    return %c0_i32, %c0_i32_0 : i32, i32
  }
  func.func @transform_6(%arg0: i32, %arg1: i32) -> (i32, i32) {
    %c0_i32 = arith.constant 0 : i32
    %c0_i32_0 = arith.constant 0 : i32
    %c0_i32_1 = arith.constant 0 : i32
    return %c0_i32, %c0_i32_0 : i32, i32
  }
  func.func @transform_7(%arg0: i32, %arg1: i32) -> (i32, i32, i32) {
    %c0_i32 = arith.constant 0 : i32
    %c0_i32_0 = arith.constant 0 : i32
    return %arg0, %arg1, %c0_i32 : i32, i32, i32
  }
}

module attributes {stable_mosaic.version = 11 : i64} {
  func.func @_temporal_block_kernel(%arg0: i32, %arg1: i32, %arg2: memref<1x8x128xf32, #tpu.memory_space<vmem>>, %arg3: memref<256x128xf32, #tpu.memory_space<vmem>>, %arg4: memref<1x128xf32, #tpu.memory_space<vmem>>, %arg5: memref<256x128xf32, #tpu.memory_space<vmem>>, %arg6: memref<1x128xf32, #tpu.memory_space<vmem>>, %arg7: memref<1x8x128xf32, #tpu.memory_space<vmem>>, %arg8: memref<1x12x128xf32, #tpu.memory_space<vmem>>, %arg9: memref<1x10x128xf32, #tpu.memory_space<vmem>>, %arg10: memref<1x4x128xf32, #tpu.memory_space<vmem>>) attributes {dimension_semantics = [#tpu.dimension_semantics<parallel>, #tpu.dimension_semantics<arbitrary>], iteration_bounds = array<i64: 2, 4>, scalar_prefetch = 0 : i64, scratch_operands = 3 : i64, tpu.core_type = #tpu.core_type<tc>, window_params = [{transform_indices = @transform_0, window_bounds = array<i64: 1, 8, 128>}, {pipeline_mode = #tpu.pipeline_mode<synchronous>, transform_indices = @transform_1, window_bounds = array<i64: 256, 128>}, {pipeline_mode = #tpu.pipeline_mode<synchronous>, transform_indices = @transform_2, window_bounds = array<i64: 1, 128>}, {pipeline_mode = #tpu.pipeline_mode<synchronous>, transform_indices = @transform_3, window_bounds = array<i64: 256, 128>}, {pipeline_mode = #tpu.pipeline_mode<synchronous>, transform_indices = @transform_4, window_bounds = array<i64: 1, 128>}, {transform_indices = @transform_5, window_bounds = array<i64: 1, 8, 128>}]} {
    %c0 = arith.constant 0 : index
    %c0_0 = arith.constant 0 : index
    %c0_1 = arith.constant 0 : index
    %0 = vector.load %arg2[%c0, %c0_0, %c0_1] : memref<1x8x128xf32, #tpu.memory_space<vmem>>, vector<1x8x128xf32>
    %c0_i32 = arith.constant 0 : i32
    %1 = arith.cmpi eq, %arg1, %c0_i32 : i32
    %2 = arith.extui %1 : i1 to i32
    %c0_i32_2 = arith.constant 0 : i32
    %3 = arith.cmpi ne, %2, %c0_i32_2 : i32
    scf.if %3 {
      %cst_42 = arith.constant 0.000000e+00 : f32
      %41 = vector.broadcast %cst_42 : f32 to vector<1x4x128xf32>
      %c0_43 = arith.constant 0 : index
      %c0_44 = arith.constant 0 : index
      %c0_45 = arith.constant 0 : index
      %42 = vector.load %arg8[%c0_43, %c0_44, %c0_45] : memref<1x12x128xf32, #tpu.memory_space<vmem>>, vector<1x4x128xf32>
      tpu.vector_store %arg8[%c0_43, %c0_44, %c0_45], %41 {strides = array<i32>} : memref<1x12x128xf32, #tpu.memory_space<vmem>>, vector<1x4x128xf32>,
    } else {
    }
    %c0_i32_3 = arith.constant 0 : i32
    %4 = arith.cmpi sgt, %arg1, %c0_i32_3 : i32
    %5 = arith.extui %4 : i1 to i32
    %c0_i32_4 = arith.constant 0 : i32
    %6 = arith.cmpi ne, %5, %c0_i32_4 : i32
    scf.if %6 {
      %c0_42 = arith.constant 0 : index
      %c0_43 = arith.constant 0 : index
      %c0_44 = arith.constant 0 : index
      %41 = vector.load %arg10[%c0_42, %c0_43, %c0_44] : memref<1x4x128xf32, #tpu.memory_space<vmem>>, vector<1x4x128xf32>
      %c0_45 = arith.constant 0 : index
      %c0_46 = arith.constant 0 : index
      %c0_47 = arith.constant 0 : index
      %42 = vector.load %arg8[%c0_45, %c0_46, %c0_47] : memref<1x12x128xf32, #tpu.memory_space<vmem>>, vector<1x4x128xf32>
      tpu.vector_store %arg8[%c0_45, %c0_46, %c0_47], %41 {strides = array<i32>} : memref<1x12x128xf32, #tpu.memory_space<vmem>>, vector<1x4x128xf32>,
    } else {
    }
    %c0_5 = arith.constant 0 : index
    %c4 = arith.constant 4 : index
    %c0_6 = arith.constant 0 : index
    %7 = vector.load %arg8[%c0_5, %c4, %c0_6] : memref<1x12x128xf32, #tpu.memory_space<vmem>>, vector<1x8x128xf32>
    tpu.vector_store %arg8[%c0_5, %c4, %c0_6], %0 {strides = array<i32>} : memref<1x12x128xf32, #tpu.memory_space<vmem>>, vector<1x8x128xf32>,
    %c0_7 = arith.constant 0 : index
    %c8 = arith.constant 8 : index
    %c0_8 = arith.constant 0 : index
    %8 = vector.load %arg8[%c0_7, %c8, %c0_8] : memref<1x12x128xf32, #tpu.memory_space<vmem>>, vector<1x4x128xf32>
    %c0_9 = arith.constant 0 : index
    %c0_10 = arith.constant 0 : index
    %c0_11 = arith.constant 0 : index
    %9 = vector.load %arg10[%c0_9, %c0_10, %c0_11] : memref<1x4x128xf32, #tpu.memory_space<vmem>>, vector<1x4x128xf32>
    tpu.vector_store %arg10[%c0_9, %c0_10, %c0_11], %8 {strides = array<i32>} : memref<1x4x128xf32, #tpu.memory_space<vmem>>, vector<1x4x128xf32>,
    %c0_12 = arith.constant 0 : index
    %c2 = arith.constant 2 : index
    %c0_13 = arith.constant 0 : index
    %10 = vector.load %arg8[%c0_12, %c2, %c0_13] : memref<1x12x128xf32, #tpu.memory_space<vmem>>, vector<1x10x128xf32>
    %c0_14 = arith.constant 0 : index
    %c0_15 = arith.constant 0 : index
    %c0_16 = arith.constant 0 : index
    %11 = vector.load %arg8[%c0_14, %c0_15, %c0_16] : memref<1x12x128xf32, #tpu.memory_space<vmem>>, vector<1x10x128xf32>
    %12 = tpu.concatenate %10, %11 in 2 : vector<1x10x128xf32>, vector<1x10x128xf32> -> vector<1x10x256xf32>
    %c0_17 = arith.constant 0 : index
    %c0_18 = arith.constant 0 : index
    %13 = vector.load %arg3[%c0_17, %c0_18] : memref<256x128xf32, #tpu.memory_space<vmem>>, vector<256x128xf32>
    %cst = arith.constant dense<0.000000e+00> : vector<1x10x128xf32>
    %14 = tpu.matmul %12, %13, %cst {dimension_numbers = #tpu.dot_dimension_numbers<[2], [0], [0, 1], [1], [0, 0, 0, 1, 1, 1], [], []>} : vector<1x10x256xf32>, vector<256x128xf32>, vector<1x10x128xf32> -> vector<1x10x128xf32>
    %c0_19 = arith.constant 0 : index
    %c0_20 = arith.constant 0 : index
    %15 = vector.load %arg4[%c0_19, %c0_20] : memref<1x128xf32, #tpu.memory_space<vmem>>, vector<1x128xf32>
    %16 = vector.shape_cast %15 : vector<1x128xf32> to vector<1x1x128xf32>
    %17 = vector.broadcast %16 : vector<1x1x128xf32> to vector<1x10x128xf32>
    %18 = arith.addf %14, %17 : vector<1x10x128xf32>
    %cst_21 = arith.constant 0.000000e+00 : f32
    %19 = vector.broadcast %cst_21 : f32 to vector<1x10x128xf32>
    %20 = arith.maximumf %18, %19 : vector<1x10x128xf32>
    %c0_22 = arith.constant 0 : index
    %c0_23 = arith.constant 0 : index
    %c0_24 = arith.constant 0 : index
    %21 = vector.load %arg9[%c0_22, %c0_23, %c0_24] : memref<1x10x128xf32, #tpu.memory_space<vmem>>, vector<1x10x128xf32>
    tpu.vector_store %arg9[%c0_22, %c0_23, %c0_24], %20 {strides = array<i32>} : memref<1x10x128xf32, #tpu.memory_space<vmem>>, vector<1x10x128xf32>,
    %c8_i32 = arith.constant 8 : i32
    %22 = arith.muli %arg1, %c8_i32 : i32
    %c2_i32 = arith.constant 2 : i32
    %23 = arith.cmpi slt, %22, %c2_i32 : i32
    %24 = arith.extui %23 : i1 to i32
    %c0_i32_25 = arith.constant 0 : i32
    %25 = arith.cmpi ne, %24, %c0_i32_25 : i32
    scf.if %25 {
      %c0_42 = arith.constant 0 : index
      %c0_43 = arith.constant 0 : index
      %c0_44 = arith.constant 0 : index
      %41 = vector.load %arg9[%c0_42, %c0_43, %c0_44] : memref<1x10x128xf32, #tpu.memory_space<vmem>>, vector<1x2x128xf32>
      %42 = tpu.iota {dimensions = array<i32: 1>} : vector<1x2x128xi32>
      %c8_i32_45 = arith.constant 8 : i32
      %43 = arith.muli %arg1, %c8_i32_45 : i32
      %c2_i32_46 = arith.constant 2 : i32
      %44 = arith.subi %c2_i32_46, %43 : i32
      %45 = vector.broadcast %44 : i32 to vector<1x2x128xi32>
      %46 = arith.cmpi slt, %42, %45 : vector<1x2x128xi32>
      %cst_47 = arith.constant 0.000000e+00 : f32
      %47 = vector.broadcast %cst_47 : f32 to vector<1x2x128xf32>
      %48 = arith.select %46, %47, %41 : vector<1x2x128xi1>, vector<1x2x128xf32>
      %c0_48 = arith.constant 0 : index
      %c0_49 = arith.constant 0 : index
      %c0_50 = arith.constant 0 : index
      %49 = vector.load %arg9[%c0_48, %c0_49, %c0_50] : memref<1x10x128xf32, #tpu.memory_space<vmem>>, vector<1x2x128xf32>
      tpu.vector_store %arg9[%c0_48, %c0_49, %c0_50], %48 {strides = array<i32>} : memref<1x10x128xf32, #tpu.memory_space<vmem>>, vector<1x2x128xf32>,
    } else {
    }
    %c0_26 = arith.constant 0 : index
    %c2_27 = arith.constant 2 : index
    %c0_28 = arith.constant 0 : index
    %26 = vector.load %arg9[%c0_26, %c2_27, %c0_28] : memref<1x10x128xf32, #tpu.memory_space<vmem>>, vector<1x8x128xf32>
    %c0_29 = arith.constant 0 : index
    %c0_30 = arith.constant 0 : index
    %c0_31 = arith.constant 0 : index
    %27 = vector.load %arg9[%c0_29, %c0_30, %c0_31] : memref<1x10x128xf32, #tpu.memory_space<vmem>>, vector<1x8x128xf32>
    %28 = tpu.concatenate %26, %27 in 2 : vector<1x8x128xf32>, vector<1x8x128xf32> -> vector<1x8x256xf32>
    %c0_32 = arith.constant 0 : index
    %c0_33 = arith.constant 0 : index
    %29 = vector.load %arg5[%c0_32, %c0_33] : memref<256x128xf32, #tpu.memory_space<vmem>>, vector<256x128xf32>
    %cst_34 = arith.constant dense<0.000000e+00> : vector<1x8x128xf32>
    %30 = tpu.matmul %28, %29, %cst_34 {dimension_numbers = #tpu.dot_dimension_numbers<[2], [0], [0, 1], [1], [0, 0, 0, 1, 1, 1], [], []>} : vector<1x8x256xf32>, vector<256x128xf32>, vector<1x8x128xf32> -> vector<1x8x128xf32>
    %c0_35 = arith.constant 0 : index
    %c0_36 = arith.constant 0 : index
    %31 = vector.load %arg6[%c0_35, %c0_36] : memref<1x128xf32, #tpu.memory_space<vmem>>, vector<1x128xf32>
    %32 = vector.shape_cast %31 : vector<1x128xf32> to vector<1x1x128xf32>
    %33 = vector.broadcast %32 : vector<1x1x128xf32> to vector<1x8x128xf32>
    %34 = arith.addf %30, %33 : vector<1x8x128xf32>
    %cst_37 = arith.constant 0.000000e+00 : f32
    %35 = vector.broadcast %cst_37 : f32 to vector<1x8x128xf32>
    %36 = arith.maximumf %34, %35 : vector<1x8x128xf32>
    %37 = arith.addf %36, %0 : vector<1x8x128xf32>
    %cst_38 = arith.constant 0.000000e+00 : f32
    %38 = vector.broadcast %cst_38 : f32 to vector<1x8x128xf32>
    %39 = arith.maximumf %37, %38 : vector<1x8x128xf32>
    %c0_39 = arith.constant 0 : index
    %c0_40 = arith.constant 0 : index
    %c0_41 = arith.constant 0 : index
    %40 = vector.load %arg7[%c0_39, %c0_40, %c0_41] : memref<1x8x128xf32, #tpu.memory_space<vmem>>, vector<1x8x128xf32>
    tpu.vector_store %arg7[%c0_39, %c0_40, %c0_41], %39 {strides = array<i32>} : memref<1x8x128xf32, #tpu.memory_space<vmem>>, vector<1x8x128xf32>,
    return
  }
  func.func @transform_0(%arg0: i32, %arg1: i32) -> (i32, i32, i32) {
    %c0_i32 = arith.constant 0 : i32
    %c0_i32_0 = arith.constant 0 : i32
    return %arg0, %arg1, %c0_i32 : i32, i32, i32
  }
  func.func @transform_1(%arg0: i32, %arg1: i32) -> (i32, i32) {
    %c0_i32 = arith.constant 0 : i32
    %c0_i32_0 = arith.constant 0 : i32
    %c0_i32_1 = arith.constant 0 : i32
    return %c0_i32, %c0_i32_0 : i32, i32
  }
  func.func @transform_2(%arg0: i32, %arg1: i32) -> (i32, i32) {
    %c0_i32 = arith.constant 0 : i32
    %c0_i32_0 = arith.constant 0 : i32
    %c0_i32_1 = arith.constant 0 : i32
    return %c0_i32, %c0_i32_0 : i32, i32
  }
  func.func @transform_3(%arg0: i32, %arg1: i32) -> (i32, i32) {
    %c0_i32 = arith.constant 0 : i32
    %c0_i32_0 = arith.constant 0 : i32
    %c0_i32_1 = arith.constant 0 : i32
    return %c0_i32, %c0_i32_0 : i32, i32
  }
  func.func @transform_4(%arg0: i32, %arg1: i32) -> (i32, i32) {
    %c0_i32 = arith.constant 0 : i32
    %c0_i32_0 = arith.constant 0 : i32
    %c0_i32_1 = arith.constant 0 : i32
    return %c0_i32, %c0_i32_0 : i32, i32
  }
  func.func @transform_5(%arg0: i32, %arg1: i32) -> (i32, i32, i32) {
    %c0_i32 = arith.constant 0 : i32
    %c0_i32_0 = arith.constant 0 : i32
    return %arg0, %arg1, %c0_i32 : i32, i32, i32
  }
}

module attributes {stable_mosaic.version = 11 : i64} {
  func.func @_temporal_block_kernel(%arg0: i32, %arg1: i32, %arg2: memref<1x8x128xf32, #tpu.memory_space<vmem>>, %arg3: memref<256x128xf32, #tpu.memory_space<vmem>>, %arg4: memref<1x128xf32, #tpu.memory_space<vmem>>, %arg5: memref<256x128xf32, #tpu.memory_space<vmem>>, %arg6: memref<1x128xf32, #tpu.memory_space<vmem>>, %arg7: memref<128x128xf32, #tpu.memory_space<vmem>>, %arg8: memref<1x128xf32, #tpu.memory_space<vmem>>, %arg9: memref<1x8x128xf32, #tpu.memory_space<vmem>>, %arg10: memref<1x16x128xf32, #tpu.memory_space<vmem>>, %arg11: memref<1x12x128xf32, #tpu.memory_space<vmem>>, %arg12: memref<1x8x128xf32, #tpu.memory_space<vmem>>) attributes {dimension_semantics = [#tpu.dimension_semantics<parallel>, #tpu.dimension_semantics<arbitrary>], iteration_bounds = array<i64: 2, 4>, scalar_prefetch = 0 : i64, scratch_operands = 3 : i64, tpu.core_type = #tpu.core_type<tc>, window_params = [{transform_indices = @transform_0, window_bounds = array<i64: 1, 8, 128>}, {pipeline_mode = #tpu.pipeline_mode<synchronous>, transform_indices = @transform_1, window_bounds = array<i64: 256, 128>}, {pipeline_mode = #tpu.pipeline_mode<synchronous>, transform_indices = @transform_2, window_bounds = array<i64: 1, 128>}, {pipeline_mode = #tpu.pipeline_mode<synchronous>, transform_indices = @transform_3, window_bounds = array<i64: 256, 128>}, {pipeline_mode = #tpu.pipeline_mode<synchronous>, transform_indices = @transform_4, window_bounds = array<i64: 1, 128>}, {pipeline_mode = #tpu.pipeline_mode<synchronous>, transform_indices = @transform_5, window_bounds = array<i64: 128, 128>}, {pipeline_mode = #tpu.pipeline_mode<synchronous>, transform_indices = @transform_6, window_bounds = array<i64: 1, 128>}, {transform_indices = @transform_7, window_bounds = array<i64: 1, 8, 128>}]} {
    %c0 = arith.constant 0 : index
    %c0_0 = arith.constant 0 : index
    %c0_1 = arith.constant 0 : index
    %0 = vector.load %arg2[%c0, %c0_0, %c0_1] : memref<1x8x128xf32, #tpu.memory_space<vmem>>, vector<1x8x128xf32>
    %c0_i32 = arith.constant 0 : i32
    %1 = arith.cmpi eq, %arg1, %c0_i32 : i32
    %2 = arith.extui %1 : i1 to i32
    %c0_i32_2 = arith.constant 0 : i32
    %3 = arith.cmpi ne, %2, %c0_i32_2 : i32
    scf.if %3 {
      %cst_48 = arith.constant 0.000000e+00 : f32
      %47 = vector.broadcast %cst_48 : f32 to vector<1x8x128xf32>
      %c0_49 = arith.constant 0 : index
      %c0_50 = arith.constant 0 : index
      %c0_51 = arith.constant 0 : index
      %48 = vector.load %arg10[%c0_49, %c0_50, %c0_51] : memref<1x16x128xf32, #tpu.memory_space<vmem>>, vector<1x8x128xf32>
      tpu.vector_store %arg10[%c0_49, %c0_50, %c0_51], %47 {strides = array<i32>} : memref<1x16x128xf32, #tpu.memory_space<vmem>>, vector<1x8x128xf32>,
    } else {
    }
    %c0_i32_3 = arith.constant 0 : i32
    %4 = arith.cmpi sgt, %arg1, %c0_i32_3 : i32
    %5 = arith.extui %4 : i1 to i32
    %c0_i32_4 = arith.constant 0 : i32
    %6 = arith.cmpi ne, %5, %c0_i32_4 : i32
    scf.if %6 {
      %c0_48 = arith.constant 0 : index
      %c0_49 = arith.constant 0 : index
      %c0_50 = arith.constant 0 : index
      %47 = vector.load %arg12[%c0_48, %c0_49, %c0_50] : memref<1x8x128xf32, #tpu.memory_space<vmem>>, vector<1x8x128xf32>
      %c0_51 = arith.constant 0 : index
      %c0_52 = arith.constant 0 : index
      %c0_53 = arith.constant 0 : index
      %48 = vector.load %arg10[%c0_51, %c0_52, %c0_53] : memref<1x16x128xf32, #tpu.memory_space<vmem>>, vector<1x8x128xf32>
      tpu.vector_store %arg10[%c0_51, %c0_52, %c0_53], %47 {strides = array<i32>} : memref<1x16x128xf32, #tpu.memory_space<vmem>>, vector<1x8x128xf32>,
    } else {
    }
    %c0_5 = arith.constant 0 : index
    %c8 = arith.constant 8 : index
    %c0_6 = arith.constant 0 : index
    %7 = vector.load %arg10[%c0_5, %c8, %c0_6] : memref<1x16x128xf32, #tpu.memory_space<vmem>>, vector<1x8x128xf32>
    tpu.vector_store %arg10[%c0_5, %c8, %c0_6], %0 {strides = array<i32>} : memref<1x16x128xf32, #tpu.memory_space<vmem>>, vector<1x8x128xf32>,
    %c0_7 = arith.constant 0 : index
    %c8_8 = arith.constant 8 : index
    %c0_9 = arith.constant 0 : index
    %8 = vector.load %arg10[%c0_7, %c8_8, %c0_9] : memref<1x16x128xf32, #tpu.memory_space<vmem>>, vector<1x8x128xf32>
    %c0_10 = arith.constant 0 : index
    %c0_11 = arith.constant 0 : index
    %c0_12 = arith.constant 0 : index
    %9 = vector.load %arg12[%c0_10, %c0_11, %c0_12] : memref<1x8x128xf32, #tpu.memory_space<vmem>>, vector<1x8x128xf32>
    tpu.vector_store %arg12[%c0_10, %c0_11, %c0_12], %8 {strides = array<i32>} : memref<1x8x128xf32, #tpu.memory_space<vmem>>, vector<1x8x128xf32>,
    %c0_13 = arith.constant 0 : index
    %c4 = arith.constant 4 : index
    %c0_14 = arith.constant 0 : index
    %10 = vector.load %arg10[%c0_13, %c4, %c0_14] : memref<1x16x128xf32, #tpu.memory_space<vmem>>, vector<1x12x128xf32>
    %c0_15 = arith.constant 0 : index
    %c0_16 = arith.constant 0 : index
    %c0_17 = arith.constant 0 : index
    %11 = vector.load %arg10[%c0_15, %c0_16, %c0_17] : memref<1x16x128xf32, #tpu.memory_space<vmem>>, vector<1x12x128xf32>
    %12 = tpu.concatenate %10, %11 in 2 : vector<1x12x128xf32>, vector<1x12x128xf32> -> vector<1x12x256xf32>
    %c0_18 = arith.constant 0 : index
    %c0_19 = arith.constant 0 : index
    %13 = vector.load %arg3[%c0_18, %c0_19] : memref<256x128xf32, #tpu.memory_space<vmem>>, vector<256x128xf32>
    %cst = arith.constant dense<0.000000e+00> : vector<1x12x128xf32>
    %14 = tpu.matmul %12, %13, %cst {dimension_numbers = #tpu.dot_dimension_numbers<[2], [0], [0, 1], [1], [0, 0, 0, 1, 1, 1], [], []>} : vector<1x12x256xf32>, vector<256x128xf32>, vector<1x12x128xf32> -> vector<1x12x128xf32>
    %c0_20 = arith.constant 0 : index
    %c0_21 = arith.constant 0 : index
    %15 = vector.load %arg4[%c0_20, %c0_21] : memref<1x128xf32, #tpu.memory_space<vmem>>, vector<1x128xf32>
    %16 = vector.shape_cast %15 : vector<1x128xf32> to vector<1x1x128xf32>
    %17 = vector.broadcast %16 : vector<1x1x128xf32> to vector<1x12x128xf32>
    %18 = arith.addf %14, %17 : vector<1x12x128xf32>
    %cst_22 = arith.constant 0.000000e+00 : f32
    %19 = vector.broadcast %cst_22 : f32 to vector<1x12x128xf32>
    %20 = arith.maximumf %18, %19 : vector<1x12x128xf32>
    %c0_23 = arith.constant 0 : index
    %c0_24 = arith.constant 0 : index
    %c0_25 = arith.constant 0 : index
    %21 = vector.load %arg11[%c0_23, %c0_24, %c0_25] : memref<1x12x128xf32, #tpu.memory_space<vmem>>, vector<1x12x128xf32>
    tpu.vector_store %arg11[%c0_23, %c0_24, %c0_25], %20 {strides = array<i32>} : memref<1x12x128xf32, #tpu.memory_space<vmem>>, vector<1x12x128xf32>,
    %c8_i32 = arith.constant 8 : i32
    %22 = arith.muli %arg1, %c8_i32 : i32
    %c4_i32 = arith.constant 4 : i32
    %23 = arith.cmpi slt, %22, %c4_i32 : i32
    %24 = arith.extui %23 : i1 to i32
    %c0_i32_26 = arith.constant 0 : i32
    %25 = arith.cmpi ne, %24, %c0_i32_26 : i32
    scf.if %25 {
      %c0_48 = arith.constant 0 : index
      %c0_49 = arith.constant 0 : index
      %c0_50 = arith.constant 0 : index
      %47 = vector.load %arg11[%c0_48, %c0_49, %c0_50] : memref<1x12x128xf32, #tpu.memory_space<vmem>>, vector<1x4x128xf32>
      %48 = tpu.iota {dimensions = array<i32: 1>} : vector<1x4x128xi32>
      %c8_i32_51 = arith.constant 8 : i32
      %49 = arith.muli %arg1, %c8_i32_51 : i32
      %c4_i32_52 = arith.constant 4 : i32
      %50 = arith.subi %c4_i32_52, %49 : i32
      %51 = vector.broadcast %50 : i32 to vector<1x4x128xi32>
      %52 = arith.cmpi slt, %48, %51 : vector<1x4x128xi32>
      %cst_53 = arith.constant 0.000000e+00 : f32
      %53 = vector.broadcast %cst_53 : f32 to vector<1x4x128xf32>
      %54 = arith.select %52, %53, %47 : vector<1x4x128xi1>, vector<1x4x128xf32>
      %c0_54 = arith.constant 0 : index
      %c0_55 = arith.constant 0 : index
      %c0_56 = arith.constant 0 : index
      %55 = vector.load %arg11[%c0_54, %c0_55, %c0_56] : memref<1x12x128xf32, #tpu.memory_space<vmem>>, vector<1x4x128xf32>
      tpu.vector_store %arg11[%c0_54, %c0_55, %c0_56], %54 {strides = array<i32>} : memref<1x12x128xf32, #tpu.memory_space<vmem>>, vector<1x4x128xf32>,
    } else {
    }
    %c0_27 = arith.constant 0 : index
    %c4_28 = arith.constant 4 : index
    %c0_29 = arith.constant 0 : index
    %26 = vector.load %arg11[%c0_27, %c4_28, %c0_29] : memref<1x12x128xf32, #tpu.memory_space<vmem>>, vector<1x8x128xf32>
    %c0_30 = arith.constant 0 : index
    %c0_31 = arith.constant 0 : index
    %c0_32 = arith.constant 0 : index
    %27 = vector.load %arg11[%c0_30, %c0_31, %c0_32] : memref<1x12x128xf32, #tpu.memory_space<vmem>>, vector<1x8x128xf32>
    %28 = tpu.concatenate %26, %27 in 2 : vector<1x8x128xf32>, vector<1x8x128xf32> -> vector<1x8x256xf32>
    %c0_33 = arith.constant 0 : index
    %c0_34 = arith.constant 0 : index
    %29 = vector.load %arg5[%c0_33, %c0_34] : memref<256x128xf32, #tpu.memory_space<vmem>>, vector<256x128xf32>
    %cst_35 = arith.constant dense<0.000000e+00> : vector<1x8x128xf32>
    %30 = tpu.matmul %28, %29, %cst_35 {dimension_numbers = #tpu.dot_dimension_numbers<[2], [0], [0, 1], [1], [0, 0, 0, 1, 1, 1], [], []>} : vector<1x8x256xf32>, vector<256x128xf32>, vector<1x8x128xf32> -> vector<1x8x128xf32>
    %c0_36 = arith.constant 0 : index
    %c0_37 = arith.constant 0 : index
    %31 = vector.load %arg6[%c0_36, %c0_37] : memref<1x128xf32, #tpu.memory_space<vmem>>, vector<1x128xf32>
    %32 = vector.shape_cast %31 : vector<1x128xf32> to vector<1x1x128xf32>
    %33 = vector.broadcast %32 : vector<1x1x128xf32> to vector<1x8x128xf32>
    %34 = arith.addf %30, %33 : vector<1x8x128xf32>
    %cst_38 = arith.constant 0.000000e+00 : f32
    %35 = vector.broadcast %cst_38 : f32 to vector<1x8x128xf32>
    %36 = arith.maximumf %34, %35 : vector<1x8x128xf32>
    %c0_39 = arith.constant 0 : index
    %c0_40 = arith.constant 0 : index
    %37 = vector.load %arg7[%c0_39, %c0_40] : memref<128x128xf32, #tpu.memory_space<vmem>>, vector<128x128xf32>
    %cst_41 = arith.constant dense<0.000000e+00> : vector<1x8x128xf32>
    %38 = tpu.matmul %0, %37, %cst_41 {dimension_numbers = #tpu.dot_dimension_numbers<[2], [0], [0, 1], [1], [0, 0, 0, 1, 1, 1], [], []>} : vector<1x8x128xf32>, vector<128x128xf32>, vector<1x8x128xf32> -> vector<1x8x128xf32>
    %c0_42 = arith.constant 0 : index
    %c0_43 = arith.constant 0 : index
    %39 = vector.load %arg8[%c0_42, %c0_43] : memref<1x128xf32, #tpu.memory_space<vmem>>, vector<1x128xf32>
    %40 = vector.shape_cast %39 : vector<1x128xf32> to vector<1x1x128xf32>
    %41 = vector.broadcast %40 : vector<1x1x128xf32> to vector<1x8x128xf32>
    %42 = arith.addf %38, %41 : vector<1x8x128xf32>
    %43 = arith.addf %36, %42 : vector<1x8x128xf32>
    %cst_44 = arith.constant 0.000000e+00 : f32
    %44 = vector.broadcast %cst_44 : f32 to vector<1x8x128xf32>
    %45 = arith.maximumf %43, %44 : vector<1x8x128xf32>
    %c0_45 = arith.constant 0 : index
    %c0_46 = arith.constant 0 : index
    %c0_47 = arith.constant 0 : index
    %46 = vector.load %arg9[%c0_45, %c0_46, %c0_47] : memref<1x8x128xf32, #tpu.memory_space<vmem>>, vector<1x8x128xf32>
    tpu.vector_store %arg9[%c0_45, %c0_46, %c0_47], %45 {strides = array<i32>} : memref<1x8x128xf32, #tpu.memory_space<vmem>>, vector<1x8x128xf32>,
    return
  }
  func.func @transform_0(%arg0: i32, %arg1: i32) -> (i32, i32, i32) {
    %c0_i32 = arith.constant 0 : i32
    %c0_i32_0 = arith.constant 0 : i32
    return %arg0, %arg1, %c0_i32 : i32, i32, i32
  }
  func.func @transform_1(%arg0: i32, %arg1: i32) -> (i32, i32) {
    %c0_i32 = arith.constant 0 : i32
    %c0_i32_0 = arith.constant 0 : i32
    %c0_i32_1 = arith.constant 0 : i32
    return %c0_i32, %c0_i32_0 : i32, i32
  }
  func.func @transform_2(%arg0: i32, %arg1: i32) -> (i32, i32) {
    %c0_i32 = arith.constant 0 : i32
    %c0_i32_0 = arith.constant 0 : i32
    %c0_i32_1 = arith.constant 0 : i32
    return %c0_i32, %c0_i32_0 : i32, i32
  }
  func.func @transform_3(%arg0: i32, %arg1: i32) -> (i32, i32) {
    %c0_i32 = arith.constant 0 : i32
    %c0_i32_0 = arith.constant 0 : i32
    %c0_i32_1 = arith.constant 0 : i32
    return %c0_i32, %c0_i32_0 : i32, i32
  }
  func.func @transform_4(%arg0: i32, %arg1: i32) -> (i32, i32) {
    %c0_i32 = arith.constant 0 : i32
    %c0_i32_0 = arith.constant 0 : i32
    %c0_i32_1 = arith.constant 0 : i32
    return %c0_i32, %c0_i32_0 : i32, i32
  }
  func.func @transform_5(%arg0: i32, %arg1: i32) -> (i32, i32) {
    %c0_i32 = arith.constant 0 : i32
    %c0_i32_0 = arith.constant 0 : i32
    %c0_i32_1 = arith.constant 0 : i32
    return %c0_i32, %c0_i32_0 : i32, i32
  }
  func.func @transform_6(%arg0: i32, %arg1: i32) -> (i32, i32) {
    %c0_i32 = arith.constant 0 : i32
    %c0_i32_0 = arith.constant 0 : i32
    %c0_i32_1 = arith.constant 0 : i32
    return %c0_i32, %c0_i32_0 : i32, i32
  }
  func.func @transform_7(%arg0: i32, %arg1: i32) -> (i32, i32, i32) {
    %c0_i32 = arith.constant 0 : i32
    %c0_i32_0 = arith.constant 0 : i32
    return %arg0, %arg1, %c0_i32 : i32, i32, i32
  }
}

module attributes {stable_mosaic.version = 11 : i64} {
  func.func @_temporal_block_kernel(%arg0: i32, %arg1: i32, %arg2: memref<1x8x128xf32, #tpu.memory_space<vmem>>, %arg3: memref<256x128xf32, #tpu.memory_space<vmem>>, %arg4: memref<1x128xf32, #tpu.memory_space<vmem>>, %arg5: memref<256x128xf32, #tpu.memory_space<vmem>>, %arg6: memref<1x128xf32, #tpu.memory_space<vmem>>, %arg7: memref<1x8x128xf32, #tpu.memory_space<vmem>>, %arg8: memref<1x24x128xf32, #tpu.memory_space<vmem>>, %arg9: memref<1x16x128xf32, #tpu.memory_space<vmem>>, %arg10: memref<1x16x128xf32, #tpu.memory_space<vmem>>) attributes {dimension_semantics = [#tpu.dimension_semantics<parallel>, #tpu.dimension_semantics<arbitrary>], iteration_bounds = array<i64: 2, 4>, scalar_prefetch = 0 : i64, scratch_operands = 3 : i64, tpu.core_type = #tpu.core_type<tc>, window_params = [{transform_indices = @transform_0, window_bounds = array<i64: 1, 8, 128>}, {pipeline_mode = #tpu.pipeline_mode<synchronous>, transform_indices = @transform_1, window_bounds = array<i64: 256, 128>}, {pipeline_mode = #tpu.pipeline_mode<synchronous>, transform_indices = @transform_2, window_bounds = array<i64: 1, 128>}, {pipeline_mode = #tpu.pipeline_mode<synchronous>, transform_indices = @transform_3, window_bounds = array<i64: 256, 128>}, {pipeline_mode = #tpu.pipeline_mode<synchronous>, transform_indices = @transform_4, window_bounds = array<i64: 1, 128>}, {transform_indices = @transform_5, window_bounds = array<i64: 1, 8, 128>}]} {
    %c0 = arith.constant 0 : index
    %c0_0 = arith.constant 0 : index
    %c0_1 = arith.constant 0 : index
    %0 = vector.load %arg2[%c0, %c0_0, %c0_1] : memref<1x8x128xf32, #tpu.memory_space<vmem>>, vector<1x8x128xf32>
    %c0_i32 = arith.constant 0 : i32
    %1 = arith.cmpi eq, %arg1, %c0_i32 : i32
    %2 = arith.extui %1 : i1 to i32
    %c0_i32_2 = arith.constant 0 : i32
    %3 = arith.cmpi ne, %2, %c0_i32_2 : i32
    scf.if %3 {
      %cst_44 = arith.constant 0.000000e+00 : f32
      %41 = vector.broadcast %cst_44 : f32 to vector<1x16x128xf32>
      %c0_45 = arith.constant 0 : index
      %c0_46 = arith.constant 0 : index
      %c0_47 = arith.constant 0 : index
      %42 = vector.load %arg8[%c0_45, %c0_46, %c0_47] : memref<1x24x128xf32, #tpu.memory_space<vmem>>, vector<1x16x128xf32>
      tpu.vector_store %arg8[%c0_45, %c0_46, %c0_47], %41 {strides = array<i32>} : memref<1x24x128xf32, #tpu.memory_space<vmem>>, vector<1x16x128xf32>,
    } else {
    }
    %c0_i32_3 = arith.constant 0 : i32
    %4 = arith.cmpi sgt, %arg1, %c0_i32_3 : i32
    %5 = arith.extui %4 : i1 to i32
    %c0_i32_4 = arith.constant 0 : i32
    %6 = arith.cmpi ne, %5, %c0_i32_4 : i32
    scf.if %6 {
      %c0_44 = arith.constant 0 : index
      %c0_45 = arith.constant 0 : index
      %c0_46 = arith.constant 0 : index
      %41 = vector.load %arg10[%c0_44, %c0_45, %c0_46] : memref<1x16x128xf32, #tpu.memory_space<vmem>>, vector<1x16x128xf32>
      %c0_47 = arith.constant 0 : index
      %c0_48 = arith.constant 0 : index
      %c0_49 = arith.constant 0 : index
      %42 = vector.load %arg8[%c0_47, %c0_48, %c0_49] : memref<1x24x128xf32, #tpu.memory_space<vmem>>, vector<1x16x128xf32>
      tpu.vector_store %arg8[%c0_47, %c0_48, %c0_49], %41 {strides = array<i32>} : memref<1x24x128xf32, #tpu.memory_space<vmem>>, vector<1x16x128xf32>,
    } else {
    }
    %c0_5 = arith.constant 0 : index
    %c16 = arith.constant 16 : index
    %c0_6 = arith.constant 0 : index
    %7 = vector.load %arg8[%c0_5, %c16, %c0_6] : memref<1x24x128xf32, #tpu.memory_space<vmem>>, vector<1x8x128xf32>
    tpu.vector_store %arg8[%c0_5, %c16, %c0_6], %0 {strides = array<i32>} : memref<1x24x128xf32, #tpu.memory_space<vmem>>, vector<1x8x128xf32>,
    %c0_7 = arith.constant 0 : index
    %c8 = arith.constant 8 : index
    %c0_8 = arith.constant 0 : index
    %8 = vector.load %arg8[%c0_7, %c8, %c0_8] : memref<1x24x128xf32, #tpu.memory_space<vmem>>, vector<1x16x128xf32>
    %c0_9 = arith.constant 0 : index
    %c0_10 = arith.constant 0 : index
    %c0_11 = arith.constant 0 : index
    %9 = vector.load %arg10[%c0_9, %c0_10, %c0_11] : memref<1x16x128xf32, #tpu.memory_space<vmem>>, vector<1x16x128xf32>
    tpu.vector_store %arg10[%c0_9, %c0_10, %c0_11], %8 {strides = array<i32>} : memref<1x16x128xf32, #tpu.memory_space<vmem>>, vector<1x16x128xf32>,
    %c0_12 = arith.constant 0 : index
    %c8_13 = arith.constant 8 : index
    %c0_14 = arith.constant 0 : index
    %10 = vector.load %arg8[%c0_12, %c8_13, %c0_14] : memref<1x24x128xf32, #tpu.memory_space<vmem>>, vector<1x16x128xf32>
    %c0_15 = arith.constant 0 : index
    %c0_16 = arith.constant 0 : index
    %c0_17 = arith.constant 0 : index
    %11 = vector.load %arg8[%c0_15, %c0_16, %c0_17] : memref<1x24x128xf32, #tpu.memory_space<vmem>>, vector<1x16x128xf32>
    %12 = tpu.concatenate %10, %11 in 2 : vector<1x16x128xf32>, vector<1x16x128xf32> -> vector<1x16x256xf32>
    %c0_18 = arith.constant 0 : index
    %c0_19 = arith.constant 0 : index
    %13 = vector.load %arg3[%c0_18, %c0_19] : memref<256x128xf32, #tpu.memory_space<vmem>>, vector<256x128xf32>
    %cst = arith.constant dense<0.000000e+00> : vector<1x16x128xf32>
    %14 = tpu.matmul %12, %13, %cst {dimension_numbers = #tpu.dot_dimension_numbers<[2], [0], [0, 1], [1], [0, 0, 0, 1, 1, 1], [], []>} : vector<1x16x256xf32>, vector<256x128xf32>, vector<1x16x128xf32> -> vector<1x16x128xf32>
    %c0_20 = arith.constant 0 : index
    %c0_21 = arith.constant 0 : index
    %15 = vector.load %arg4[%c0_20, %c0_21] : memref<1x128xf32, #tpu.memory_space<vmem>>, vector<1x128xf32>
    %16 = vector.shape_cast %15 : vector<1x128xf32> to vector<1x1x128xf32>
    %17 = vector.broadcast %16 : vector<1x1x128xf32> to vector<1x16x128xf32>
    %18 = arith.addf %14, %17 : vector<1x16x128xf32>
    %cst_22 = arith.constant 0.000000e+00 : f32
    %19 = vector.broadcast %cst_22 : f32 to vector<1x16x128xf32>
    %20 = arith.maximumf %18, %19 : vector<1x16x128xf32>
    %c0_23 = arith.constant 0 : index
    %c0_24 = arith.constant 0 : index
    %c0_25 = arith.constant 0 : index
    %21 = vector.load %arg9[%c0_23, %c0_24, %c0_25] : memref<1x16x128xf32, #tpu.memory_space<vmem>>, vector<1x16x128xf32>
    tpu.vector_store %arg9[%c0_23, %c0_24, %c0_25], %20 {strides = array<i32>} : memref<1x16x128xf32, #tpu.memory_space<vmem>>, vector<1x16x128xf32>,
    %c8_i32 = arith.constant 8 : i32
    %22 = arith.muli %arg1, %c8_i32 : i32
    %c8_i32_26 = arith.constant 8 : i32
    %23 = arith.cmpi slt, %22, %c8_i32_26 : i32
    %24 = arith.extui %23 : i1 to i32
    %c0_i32_27 = arith.constant 0 : i32
    %25 = arith.cmpi ne, %24, %c0_i32_27 : i32
    scf.if %25 {
      %c0_44 = arith.constant 0 : index
      %c0_45 = arith.constant 0 : index
      %c0_46 = arith.constant 0 : index
      %41 = vector.load %arg9[%c0_44, %c0_45, %c0_46] : memref<1x16x128xf32, #tpu.memory_space<vmem>>, vector<1x8x128xf32>
      %42 = tpu.iota {dimensions = array<i32: 1>} : vector<1x8x128xi32>
      %c8_i32_47 = arith.constant 8 : i32
      %43 = arith.muli %arg1, %c8_i32_47 : i32
      %c8_i32_48 = arith.constant 8 : i32
      %44 = arith.subi %c8_i32_48, %43 : i32
      %45 = vector.broadcast %44 : i32 to vector<1x8x128xi32>
      %46 = arith.cmpi slt, %42, %45 : vector<1x8x128xi32>
      %cst_49 = arith.constant 0.000000e+00 : f32
      %47 = vector.broadcast %cst_49 : f32 to vector<1x8x128xf32>
      %48 = arith.select %46, %47, %41 : vector<1x8x128xi1>, vector<1x8x128xf32>
      %c0_50 = arith.constant 0 : index
      %c0_51 = arith.constant 0 : index
      %c0_52 = arith.constant 0 : index
      %49 = vector.load %arg9[%c0_50, %c0_51, %c0_52] : memref<1x16x128xf32, #tpu.memory_space<vmem>>, vector<1x8x128xf32>
      tpu.vector_store %arg9[%c0_50, %c0_51, %c0_52], %48 {strides = array<i32>} : memref<1x16x128xf32, #tpu.memory_space<vmem>>, vector<1x8x128xf32>,
    } else {
    }
    %c0_28 = arith.constant 0 : index
    %c8_29 = arith.constant 8 : index
    %c0_30 = arith.constant 0 : index
    %26 = vector.load %arg9[%c0_28, %c8_29, %c0_30] : memref<1x16x128xf32, #tpu.memory_space<vmem>>, vector<1x8x128xf32>
    %c0_31 = arith.constant 0 : index
    %c0_32 = arith.constant 0 : index
    %c0_33 = arith.constant 0 : index
    %27 = vector.load %arg9[%c0_31, %c0_32, %c0_33] : memref<1x16x128xf32, #tpu.memory_space<vmem>>, vector<1x8x128xf32>
    %28 = tpu.concatenate %26, %27 in 2 : vector<1x8x128xf32>, vector<1x8x128xf32> -> vector<1x8x256xf32>
    %c0_34 = arith.constant 0 : index
    %c0_35 = arith.constant 0 : index
    %29 = vector.load %arg5[%c0_34, %c0_35] : memref<256x128xf32, #tpu.memory_space<vmem>>, vector<256x128xf32>
    %cst_36 = arith.constant dense<0.000000e+00> : vector<1x8x128xf32>
    %30 = tpu.matmul %28, %29, %cst_36 {dimension_numbers = #tpu.dot_dimension_numbers<[2], [0], [0, 1], [1], [0, 0, 0, 1, 1, 1], [], []>} : vector<1x8x256xf32>, vector<256x128xf32>, vector<1x8x128xf32> -> vector<1x8x128xf32>
    %c0_37 = arith.constant 0 : index
    %c0_38 = arith.constant 0 : index
    %31 = vector.load %arg6[%c0_37, %c0_38] : memref<1x128xf32, #tpu.memory_space<vmem>>, vector<1x128xf32>
    %32 = vector.shape_cast %31 : vector<1x128xf32> to vector<1x1x128xf32>
    %33 = vector.broadcast %32 : vector<1x1x128xf32> to vector<1x8x128xf32>
    %34 = arith.addf %30, %33 : vector<1x8x128xf32>
    %cst_39 = arith.constant 0.000000e+00 : f32
    %35 = vector.broadcast %cst_39 : f32 to vector<1x8x128xf32>
    %36 = arith.maximumf %34, %35 : vector<1x8x128xf32>
    %37 = arith.addf %36, %0 : vector<1x8x128xf32>
    %cst_40 = arith.constant 0.000000e+00 : f32
    %38 = vector.broadcast %cst_40 : f32 to vector<1x8x128xf32>
    %39 = arith.maximumf %37, %38 : vector<1x8x128xf32>
    %c0_41 = arith.constant 0 : index
    %c0_42 = arith.constant 0 : index
    %c0_43 = arith.constant 0 : index
    %40 = vector.load %arg7[%c0_41, %c0_42, %c0_43] : memref<1x8x128xf32, #tpu.memory_space<vmem>>, vector<1x8x128xf32>
    tpu.vector_store %arg7[%c0_41, %c0_42, %c0_43], %39 {strides = array<i32>} : memref<1x8x128xf32, #tpu.memory_space<vmem>>, vector<1x8x128xf32>,
    return
  }
  func.func @transform_0(%arg0: i32, %arg1: i32) -> (i32, i32, i32) {
    %c0_i32 = arith.constant 0 : i32
    %c0_i32_0 = arith.constant 0 : i32
    return %arg0, %arg1, %c0_i32 : i32, i32, i32
  }
  func.func @transform_1(%arg0: i32, %arg1: i32) -> (i32, i32) {
    %c0_i32 = arith.constant 0 : i32
    %c0_i32_0 = arith.constant 0 : i32
    %c0_i32_1 = arith.constant 0 : i32
    return %c0_i32, %c0_i32_0 : i32, i32
  }
  func.func @transform_2(%arg0: i32, %arg1: i32) -> (i32, i32) {
    %c0_i32 = arith.constant 0 : i32
    %c0_i32_0 = arith.constant 0 : i32
    %c0_i32_1 = arith.constant 0 : i32
    return %c0_i32, %c0_i32_0 : i32, i32
  }
  func.func @transform_3(%arg0: i32, %arg1: i32) -> (i32, i32) {
    %c0_i32 = arith.constant 0 : i32
    %c0_i32_0 = arith.constant 0 : i32
    %c0_i32_1 = arith.constant 0 : i32
    return %c0_i32, %c0_i32_0 : i32, i32
  }
  func.func @transform_4(%arg0: i32, %arg1: i32) -> (i32, i32) {
    %c0_i32 = arith.constant 0 : i32
    %c0_i32_0 = arith.constant 0 : i32
    %c0_i32_1 = arith.constant 0 : i32
    return %c0_i32, %c0_i32_0 : i32, i32
  }
  func.func @transform_5(%arg0: i32, %arg1: i32) -> (i32, i32, i32) {
    %c0_i32 = arith.constant 0 : i32
    %c0_i32_0 = arith.constant 0 : i32
    return %arg0, %arg1, %c0_i32 : i32, i32, i32
  }
}

module attributes {stable_mosaic.version = 11 : i64} {
  func.func @_temporal_block_kernel(%arg0: i32, %arg1: i32, %arg2: memref<1x8x128xf32, #tpu.memory_space<vmem>>, %arg3: memref<256x128xf32, #tpu.memory_space<vmem>>, %arg4: memref<1x128xf32, #tpu.memory_space<vmem>>, %arg5: memref<256x128xf32, #tpu.memory_space<vmem>>, %arg6: memref<1x128xf32, #tpu.memory_space<vmem>>, %arg7: memref<1x8x128xf32, #tpu.memory_space<vmem>>, %arg8: memref<1x40x128xf32, #tpu.memory_space<vmem>>, %arg9: memref<1x24x128xf32, #tpu.memory_space<vmem>>, %arg10: memref<1x32x128xf32, #tpu.memory_space<vmem>>) attributes {dimension_semantics = [#tpu.dimension_semantics<parallel>, #tpu.dimension_semantics<arbitrary>], iteration_bounds = array<i64: 2, 4>, scalar_prefetch = 0 : i64, scratch_operands = 3 : i64, tpu.core_type = #tpu.core_type<tc>, window_params = [{transform_indices = @transform_0, window_bounds = array<i64: 1, 8, 128>}, {pipeline_mode = #tpu.pipeline_mode<synchronous>, transform_indices = @transform_1, window_bounds = array<i64: 256, 128>}, {pipeline_mode = #tpu.pipeline_mode<synchronous>, transform_indices = @transform_2, window_bounds = array<i64: 1, 128>}, {pipeline_mode = #tpu.pipeline_mode<synchronous>, transform_indices = @transform_3, window_bounds = array<i64: 256, 128>}, {pipeline_mode = #tpu.pipeline_mode<synchronous>, transform_indices = @transform_4, window_bounds = array<i64: 1, 128>}, {transform_indices = @transform_5, window_bounds = array<i64: 1, 8, 128>}]} {
    %c0 = arith.constant 0 : index
    %c0_0 = arith.constant 0 : index
    %c0_1 = arith.constant 0 : index
    %0 = vector.load %arg2[%c0, %c0_0, %c0_1] : memref<1x8x128xf32, #tpu.memory_space<vmem>>, vector<1x8x128xf32>
    %c0_i32 = arith.constant 0 : i32
    %1 = arith.cmpi eq, %arg1, %c0_i32 : i32
    %2 = arith.extui %1 : i1 to i32
    %c0_i32_2 = arith.constant 0 : i32
    %3 = arith.cmpi ne, %2, %c0_i32_2 : i32
    scf.if %3 {
      %cst_42 = arith.constant 0.000000e+00 : f32
      %41 = vector.broadcast %cst_42 : f32 to vector<1x32x128xf32>
      %c0_43 = arith.constant 0 : index
      %c0_44 = arith.constant 0 : index
      %c0_45 = arith.constant 0 : index
      %42 = vector.load %arg8[%c0_43, %c0_44, %c0_45] : memref<1x40x128xf32, #tpu.memory_space<vmem>>, vector<1x32x128xf32>
      tpu.vector_store %arg8[%c0_43, %c0_44, %c0_45], %41 {strides = array<i32>} : memref<1x40x128xf32, #tpu.memory_space<vmem>>, vector<1x32x128xf32>,
    } else {
    }
    %c0_i32_3 = arith.constant 0 : i32
    %4 = arith.cmpi sgt, %arg1, %c0_i32_3 : i32
    %5 = arith.extui %4 : i1 to i32
    %c0_i32_4 = arith.constant 0 : i32
    %6 = arith.cmpi ne, %5, %c0_i32_4 : i32
    scf.if %6 {
      %c0_42 = arith.constant 0 : index
      %c0_43 = arith.constant 0 : index
      %c0_44 = arith.constant 0 : index
      %41 = vector.load %arg10[%c0_42, %c0_43, %c0_44] : memref<1x32x128xf32, #tpu.memory_space<vmem>>, vector<1x32x128xf32>
      %c0_45 = arith.constant 0 : index
      %c0_46 = arith.constant 0 : index
      %c0_47 = arith.constant 0 : index
      %42 = vector.load %arg8[%c0_45, %c0_46, %c0_47] : memref<1x40x128xf32, #tpu.memory_space<vmem>>, vector<1x32x128xf32>
      tpu.vector_store %arg8[%c0_45, %c0_46, %c0_47], %41 {strides = array<i32>} : memref<1x40x128xf32, #tpu.memory_space<vmem>>, vector<1x32x128xf32>,
    } else {
    }
    %c0_5 = arith.constant 0 : index
    %c32 = arith.constant 32 : index
    %c0_6 = arith.constant 0 : index
    %7 = vector.load %arg8[%c0_5, %c32, %c0_6] : memref<1x40x128xf32, #tpu.memory_space<vmem>>, vector<1x8x128xf32>
    tpu.vector_store %arg8[%c0_5, %c32, %c0_6], %0 {strides = array<i32>} : memref<1x40x128xf32, #tpu.memory_space<vmem>>, vector<1x8x128xf32>,
    %c0_7 = arith.constant 0 : index
    %c8 = arith.constant 8 : index
    %c0_8 = arith.constant 0 : index
    %8 = vector.load %arg8[%c0_7, %c8, %c0_8] : memref<1x40x128xf32, #tpu.memory_space<vmem>>, vector<1x32x128xf32>
    %c0_9 = arith.constant 0 : index
    %c0_10 = arith.constant 0 : index
    %c0_11 = arith.constant 0 : index
    %9 = vector.load %arg10[%c0_9, %c0_10, %c0_11] : memref<1x32x128xf32, #tpu.memory_space<vmem>>, vector<1x32x128xf32>
    tpu.vector_store %arg10[%c0_9, %c0_10, %c0_11], %8 {strides = array<i32>} : memref<1x32x128xf32, #tpu.memory_space<vmem>>, vector<1x32x128xf32>,
    %c0_12 = arith.constant 0 : index
    %c16 = arith.constant 16 : index
    %c0_13 = arith.constant 0 : index
    %10 = vector.load %arg8[%c0_12, %c16, %c0_13] : memref<1x40x128xf32, #tpu.memory_space<vmem>>, vector<1x24x128xf32>
    %c0_14 = arith.constant 0 : index
    %c0_15 = arith.constant 0 : index
    %c0_16 = arith.constant 0 : index
    %11 = vector.load %arg8[%c0_14, %c0_15, %c0_16] : memref<1x40x128xf32, #tpu.memory_space<vmem>>, vector<1x24x128xf32>
    %12 = tpu.concatenate %10, %11 in 2 : vector<1x24x128xf32>, vector<1x24x128xf32> -> vector<1x24x256xf32>
    %c0_17 = arith.constant 0 : index
    %c0_18 = arith.constant 0 : index
    %13 = vector.load %arg3[%c0_17, %c0_18] : memref<256x128xf32, #tpu.memory_space<vmem>>, vector<256x128xf32>
    %cst = arith.constant dense<0.000000e+00> : vector<1x24x128xf32>
    %14 = tpu.matmul %12, %13, %cst {dimension_numbers = #tpu.dot_dimension_numbers<[2], [0], [0, 1], [1], [0, 0, 0, 1, 1, 1], [], []>} : vector<1x24x256xf32>, vector<256x128xf32>, vector<1x24x128xf32> -> vector<1x24x128xf32>
    %c0_19 = arith.constant 0 : index
    %c0_20 = arith.constant 0 : index
    %15 = vector.load %arg4[%c0_19, %c0_20] : memref<1x128xf32, #tpu.memory_space<vmem>>, vector<1x128xf32>
    %16 = vector.shape_cast %15 : vector<1x128xf32> to vector<1x1x128xf32>
    %17 = vector.broadcast %16 : vector<1x1x128xf32> to vector<1x24x128xf32>
    %18 = arith.addf %14, %17 : vector<1x24x128xf32>
    %cst_21 = arith.constant 0.000000e+00 : f32
    %19 = vector.broadcast %cst_21 : f32 to vector<1x24x128xf32>
    %20 = arith.maximumf %18, %19 : vector<1x24x128xf32>
    %c0_22 = arith.constant 0 : index
    %c0_23 = arith.constant 0 : index
    %c0_24 = arith.constant 0 : index
    %21 = vector.load %arg9[%c0_22, %c0_23, %c0_24] : memref<1x24x128xf32, #tpu.memory_space<vmem>>, vector<1x24x128xf32>
    tpu.vector_store %arg9[%c0_22, %c0_23, %c0_24], %20 {strides = array<i32>} : memref<1x24x128xf32, #tpu.memory_space<vmem>>, vector<1x24x128xf32>,
    %c8_i32 = arith.constant 8 : i32
    %22 = arith.muli %arg1, %c8_i32 : i32
    %c16_i32 = arith.constant 16 : i32
    %23 = arith.cmpi slt, %22, %c16_i32 : i32
    %24 = arith.extui %23 : i1 to i32
    %c0_i32_25 = arith.constant 0 : i32
    %25 = arith.cmpi ne, %24, %c0_i32_25 : i32
    scf.if %25 {
      %c0_42 = arith.constant 0 : index
      %c0_43 = arith.constant 0 : index
      %c0_44 = arith.constant 0 : index
      %41 = vector.load %arg9[%c0_42, %c0_43, %c0_44] : memref<1x24x128xf32, #tpu.memory_space<vmem>>, vector<1x16x128xf32>
      %42 = tpu.iota {dimensions = array<i32: 1>} : vector<1x16x128xi32>
      %c8_i32_45 = arith.constant 8 : i32
      %43 = arith.muli %arg1, %c8_i32_45 : i32
      %c16_i32_46 = arith.constant 16 : i32
      %44 = arith.subi %c16_i32_46, %43 : i32
      %45 = vector.broadcast %44 : i32 to vector<1x16x128xi32>
      %46 = arith.cmpi slt, %42, %45 : vector<1x16x128xi32>
      %cst_47 = arith.constant 0.000000e+00 : f32
      %47 = vector.broadcast %cst_47 : f32 to vector<1x16x128xf32>
      %48 = arith.select %46, %47, %41 : vector<1x16x128xi1>, vector<1x16x128xf32>
      %c0_48 = arith.constant 0 : index
      %c0_49 = arith.constant 0 : index
      %c0_50 = arith.constant 0 : index
      %49 = vector.load %arg9[%c0_48, %c0_49, %c0_50] : memref<1x24x128xf32, #tpu.memory_space<vmem>>, vector<1x16x128xf32>
      tpu.vector_store %arg9[%c0_48, %c0_49, %c0_50], %48 {strides = array<i32>} : memref<1x24x128xf32, #tpu.memory_space<vmem>>, vector<1x16x128xf32>,
    } else {
    }
    %c0_26 = arith.constant 0 : index
    %c16_27 = arith.constant 16 : index
    %c0_28 = arith.constant 0 : index
    %26 = vector.load %arg9[%c0_26, %c16_27, %c0_28] : memref<1x24x128xf32, #tpu.memory_space<vmem>>, vector<1x8x128xf32>
    %c0_29 = arith.constant 0 : index
    %c0_30 = arith.constant 0 : index
    %c0_31 = arith.constant 0 : index
    %27 = vector.load %arg9[%c0_29, %c0_30, %c0_31] : memref<1x24x128xf32, #tpu.memory_space<vmem>>, vector<1x8x128xf32>
    %28 = tpu.concatenate %26, %27 in 2 : vector<1x8x128xf32>, vector<1x8x128xf32> -> vector<1x8x256xf32>
    %c0_32 = arith.constant 0 : index
    %c0_33 = arith.constant 0 : index
    %29 = vector.load %arg5[%c0_32, %c0_33] : memref<256x128xf32, #tpu.memory_space<vmem>>, vector<256x128xf32>
    %cst_34 = arith.constant dense<0.000000e+00> : vector<1x8x128xf32>
    %30 = tpu.matmul %28, %29, %cst_34 {dimension_numbers = #tpu.dot_dimension_numbers<[2], [0], [0, 1], [1], [0, 0, 0, 1, 1, 1], [], []>} : vector<1x8x256xf32>, vector<256x128xf32>, vector<1x8x128xf32> -> vector<1x8x128xf32>
    %c0_35 = arith.constant 0 : index
    %c0_36 = arith.constant 0 : index
    %31 = vector.load %arg6[%c0_35, %c0_36] : memref<1x128xf32, #tpu.memory_space<vmem>>, vector<1x128xf32>
    %32 = vector.shape_cast %31 : vector<1x128xf32> to vector<1x1x128xf32>
    %33 = vector.broadcast %32 : vector<1x1x128xf32> to vector<1x8x128xf32>
    %34 = arith.addf %30, %33 : vector<1x8x128xf32>
    %cst_37 = arith.constant 0.000000e+00 : f32
    %35 = vector.broadcast %cst_37 : f32 to vector<1x8x128xf32>
    %36 = arith.maximumf %34, %35 : vector<1x8x128xf32>
    %37 = arith.addf %36, %0 : vector<1x8x128xf32>
    %cst_38 = arith.constant 0.000000e+00 : f32
    %38 = vector.broadcast %cst_38 : f32 to vector<1x8x128xf32>
    %39 = arith.maximumf %37, %38 : vector<1x8x128xf32>
    %c0_39 = arith.constant 0 : index
    %c0_40 = arith.constant 0 : index
    %c0_41 = arith.constant 0 : index
    %40 = vector.load %arg7[%c0_39, %c0_40, %c0_41] : memref<1x8x128xf32, #tpu.memory_space<vmem>>, vector<1x8x128xf32>
    tpu.vector_store %arg7[%c0_39, %c0_40, %c0_41], %39 {strides = array<i32>} : memref<1x8x128xf32, #tpu.memory_space<vmem>>, vector<1x8x128xf32>,
    return
  }
  func.func @transform_0(%arg0: i32, %arg1: i32) -> (i32, i32, i32) {
    %c0_i32 = arith.constant 0 : i32
    %c0_i32_0 = arith.constant 0 : i32
    return %arg0, %arg1, %c0_i32 : i32, i32, i32
  }
  func.func @transform_1(%arg0: i32, %arg1: i32) -> (i32, i32) {
    %c0_i32 = arith.constant 0 : i32
    %c0_i32_0 = arith.constant 0 : i32
    %c0_i32_1 = arith.constant 0 : i32
    return %c0_i32, %c0_i32_0 : i32, i32
  }
  func.func @transform_2(%arg0: i32, %arg1: i32) -> (i32, i32) {
    %c0_i32 = arith.constant 0 : i32
    %c0_i32_0 = arith.constant 0 : i32
    %c0_i32_1 = arith.constant 0 : i32
    return %c0_i32, %c0_i32_0 : i32, i32
  }
  func.func @transform_3(%arg0: i32, %arg1: i32) -> (i32, i32) {
    %c0_i32 = arith.constant 0 : i32
    %c0_i32_0 = arith.constant 0 : i32
    %c0_i32_1 = arith.constant 0 : i32
    return %c0_i32, %c0_i32_0 : i32, i32
  }
  func.func @transform_4(%arg0: i32, %arg1: i32) -> (i32, i32) {
    %c0_i32 = arith.constant 0 : i32
    %c0_i32_0 = arith.constant 0 : i32
    %c0_i32_1 = arith.constant 0 : i32
    return %c0_i32, %c0_i32_0 : i32, i32
  }
  func.func @transform_5(%arg0: i32, %arg1: i32) -> (i32, i32, i32) {
    %c0_i32 = arith.constant 0 : i32
    %c0_i32_0 = arith.constant 0 : i32
    return %arg0, %arg1, %c0_i32 : i32, i32, i32
  }
}

</mosaic_0001>

<llo_original>
// kernel: temporal_conv_net.7
$region0: #{temporal_conv_net.7}
  #allocation0 [shape = 'u32[]', space=smem, size = 0x4, offset = 0x4, fixed_abs, tag = 'smem constant byte address 0x4 - core index']
  #allocation1 [shape = 'u32[72,128]{1,0:T(1,128)}', space=vmem, size = 0x9000, scoped, tag = 'internal scratch']
  #allocation2 [shape = 'f32[1,16,128]{2,1,0:T(8,128)}', space=vmem, size = 0x2000, scoped, tag = 'scratch operand']
  #allocation3 [shape = 'f32[1,12,128]{2,1,0:T(8,128)}', space=vmem, size = 0x2000, scoped, tag = 'scratch operand']
  #allocation4 [shape = 'f32[1,8,128]{2,1,0:T(8,128)}', space=vmem, size = 0x1000, scoped, tag = 'scratch operand']
  %s0 = inlined_call_operand.vmem [shape: f32[2,32,128], index: 0, kind: input, shape index: {}]
  %s1 = inlined_call_operand.vmem [shape: f32[256,128], index: 1, kind: input, shape index: {}]
  %s2 = inlined_call_operand.vmem [shape: f32[1,128], index: 2, kind: input, shape index: {}]
  %s3 = inlined_call_operand.vmem [shape: f32[256,128], index: 3, kind: input, shape index: {}]
  %s4 = inlined_call_operand.vmem [shape: f32[1,128], index: 4, kind: input, shape index: {}]
  %s5 = inlined_call_operand.vmem [shape: f32[128,128], index: 5, kind: input, shape index: {}]
  %s6 = inlined_call_operand.vmem [shape: f32[1,128], index: 6, kind: input, shape index: {}]
  %s7 = inlined_call_operand.vmem [shape: f32[2,32,128], index: 7, kind: output, shape index: {}]
  %s8 = sld [smem:[#allocation0]]
  $region73: #{temporal_conv_net.7} parent=0
    _
  %s10 = ssub.s32 1, %s8
  %s11 = scalar_select 0, %s10, %s8
  loop: start=0, step=1, limit=10
  $region2: #{temporal_conv_net.7} parent=0 // loop_pre_header
    _
  $region3: #{temporal_conv_net.7} parent=0 // loop_header
    %s13 = sphi 0, %s17
    %p14 = scmp.ge.s32.totalorder %s13, 10
    %s20 = sphi 0, %s32
    %s21 = sphi 0, %s28
    %s22 = sphi 0, %s20
    %s23 = sphi 0, %s21
    %s24 = sphi 0, %s22
    %s25 = sphi 0, %s23
    %s37 = sphi 0, %s39
    %s40 = sphi 0, %s37
    %s41 = sphi 0, %s40
    %s57 = sphi 0, %s41
    %s61 = sphi 0, %s61
    %s63 = sphi 0, %s61
    %s64 = sphi 0, %s63
    %s78 = sphi 0, %s64
    %s82 = sphi 0, %s82
    %s84 = sphi 0, %s82
    %s85 = sphi 0, %s84
    %s99 = sphi 0, %s85
    %s103 = sphi 0, %s103
    %s105 = sphi 0, %s103
    %s106 = sphi 0, %s105
    %s120 = sphi 0, %s106
    %s124 = sphi 0, %s124
    %s126 = sphi 0, %s124
    %s127 = sphi 0, %s126
    %s141 = sphi 0, %s127
    %s145 = sphi 0, %s145
    %s147 = sphi 0, %s145
    %s148 = sphi 0, %s147
    %s162 = sphi 0, %s148
    %s166 = sphi 0, %s166
    %s168 = sphi 0, %s166
    %s169 = sphi 0, %s168
    %s183 = sphi 0, %s169
    %s191 = sphi 0, %s193
    %s194 = sphi 0, %s191
    %s195 = sphi 0, %s194
    %s211 = sphi 0, %s195
  $region4: #{temporal_conv_net.7} parent=0 // loop_header_branch
    %16 = sbr.rel (%p14) target = $region8
  $region5: #{temporal_conv_net.7} parent=0 // loop_body
    %s18 = ssub.s32 %s13, 1
    %s19 = ssub.s32 %s13, 2
    %s26 = sadd.s32 1, %s21
    %p27 = scmp.ge.s32.totalorder %s26, 4
    %s28 = scalar_select %p27, 0, %s26
    %s29 = sadd.s32 1, %s20
    %s30 = scalar_select %p27, %s29, %s20
    %p31 = scmp.ge.s32.totalorder %s30, 2
    %s32 = scalar_select %p31, 0, %s30
    %s33 = ssub.s32 %s20, %s32
    %s34 = ssub.s32 %s21, %s28
    %s35 = sor.u32 %s33, %s34
    %p36 = scmp.eq.s32.totalorder %s35, 0
    %s38 = sadd.s32 %s37, 1
    %s39 = scalar_select %p36, %s37, %s38
    %p42 = pneg %p36
    %p43 = scmp.eq.s32.totalorder %s13, 7
    %p44 = por %p42, %p43
    %p45 = scmp.ne.s32.totalorder %s37, %s40
    %p46 = scmp.eq.s32.totalorder %s13, 0
    %p47 = por %p45, %p46
    %p48 = scmp.ne.s32.totalorder %s37, %s40
    %p49 = scmp.eq.s32.totalorder %s18, 7
    %p50 = por %p48, %p49
    %p51 = scmp.ne.s32.totalorder %s40, %s41
    %p52 = scmp.eq.s32.totalorder %s18, 0
    %p53 = por %p51, %p52
    %p54 = scmp.ne.s32.totalorder %s40, %s41
    %p55 = scmp.eq.s32.totalorder %s19, 7
    %p56 = por %p54, %p55
    %p58 = scmp.ne.s32.totalorder %s41, %s57
    %p59 = scmp.eq.s32.totalorder %s19, 0
    %p60 = por %p58, %p59
    %s62 = sadd.s32 %s61, 1
    %p65 = scmp.eq.s32.totalorder %s13, 7
    %p66 = scmp.ne.s32.totalorder %s61, %s63
    %p67 = scmp.eq.s32.totalorder %s13, 0
    %p68 = por %p66, %p67
    %p69 = scmp.ne.s32.totalorder %s61, %s63
    %p70 = scmp.eq.s32.totalorder %s18, 7
    %p71 = por %p69, %p70
    %p72 = scmp.ne.s32.totalorder %s63, %s64
    %p73 = scmp.eq.s32.totalorder %s18, 0
    %p74 = por %p72, %p73
    %p75 = scmp.ne.s32.totalorder %s63, %s64
    %p76 = scmp.eq.s32.totalorder %s19, 7
    %p77 = por %p75, %p76
    %p79 = scmp.ne.s32.totalorder %s64, %s78
    %p80 = scmp.eq.s32.totalorder %s19, 0
    %p81 = por %p79, %p80
    %s83 = sadd.s32 %s82, 1
    %p86 = scmp.eq.s32.totalorder %s13, 7
    %p87 = scmp.ne.s32.totalorder %s82, %s84
    %p88 = scmp.eq.s32.totalorder %s13, 0
    %p89 = por %p87, %p88
    %p90 = scmp.ne.s32.totalorder %s82, %s84
    %p91 = scmp.eq.s32.totalorder %s18, 7
    %p92 = por %p90, %p91
    %p93 = scmp.ne.s32.totalorder %s84, %s85
    %p94 = scmp.eq.s32.totalorder %s18, 0
    %p95 = por %p93, %p94
    %p96 = scmp.ne.s32.totalorder %s84, %s85
    %p97 = scmp.eq.s32.totalorder %s19, 7
    %p98 = por %p96, %p97
    %p100 = scmp.ne.s32.totalorder %s85, %s99
    %p101 = scmp.eq.s32.totalorder %s19, 0
    %p102 = por %p100, %p101
    %s104 = sadd.s32 %s103, 1
    %p107 = scmp.eq.s32.totalorder %s13, 7
    %p108 = scmp.ne.s32.totalorder %s103, %s105
    %p109 = scmp.eq.s32.totalorder %s13, 0
    %p110 = por %p108, %p109
    %p111 = scmp.ne.s32.totalorder %s103, %s105
    %p112 = scmp.eq.s32.totalorder %s18, 7
    %p113 = por %p111, %p112
    %p114 = scmp.ne.s32.totalorder %s105, %s106
    %p115 = scmp.eq.s32.totalorder %s18, 0
    %p116 = por %p114, %p115
    %p117 = scmp.ne.s32.totalorder %s105, %s106
    %p118 = scmp.eq.s32.totalorder %s19, 7
    %p119 = por %p117, %p118
    %p121 = scmp.ne.s32.totalorder %s106, %s120
    %p122 = scmp.eq.s32.totalorder %s19, 0
    %p123 = por %p121, %p122
    %s125 = sadd.s32 %s124, 1
    %p128 = scmp.eq.s32.totalorder %s13, 7
    %p129 = scmp.ne.s32.totalorder %s124, %s126
    %p130 = scmp.eq.s32.totalorder %s13, 0
    %p131 = por %p129, %p130
    %p132 = scmp.ne.s32.totalorder %s124, %s126
    %p133 = scmp.eq.s32.totalorder %s18, 7
    %p134 = por %p132, %p133
    %p135 = scmp.ne.s32.totalorder %s126, %s127
    %p136 = scmp.eq.s32.totalorder %s18, 0
    %p137 = por %p135, %p136
    %p138 = scmp.ne.s32.totalorder %s126, %s127
    %p139 = scmp.eq.s32.totalorder %s19, 7
    %p140 = por %p138, %p139
    %p142 = scmp.ne.s32.totalorder %s127, %s141
    %p143 = scmp.eq.s32.totalorder %s19, 0
    %p144 = por %p142, %p143
    %s146 = sadd.s32 %s145, 1
    %p149 = scmp.eq.s32.totalorder %s13, 7
    %p150 = scmp.ne.s32.totalorder %s145, %s147
    %p151 = scmp.eq.s32.totalorder %s13, 0
    %p152 = por %p150, %p151
    %p153 = scmp.ne.s32.totalorder %s145, %s147
    %p154 = scmp.eq.s32.totalorder %s18, 7
    %p155 = por %p153, %p154
    %p156 = scmp.ne.s32.totalorder %s147, %s148
    %p157 = scmp.eq.s32.totalorder %s18, 0
    %p158 = por %p156, %p157
    %p159 = scmp.ne.s32.totalorder %s147, %s148
    %p160 = scmp.eq.s32.totalorder %s19, 7
    %p161 = por %p159, %p160
    %p163 = scmp.ne.s32.totalorder %s148, %s162
    %p164 = scmp.eq.s32.totalorder %s19, 0
    %p165 = por %p163, %p164
    %s167 = sadd.s32 %s166, 1
    %p170 = scmp.eq.s32.totalorder %s13, 7
    %p171 = scmp.ne.s32.totalorder %s166, %s168
    %p172 = scmp.eq.s32.totalorder %s13, 0
    %p173 = por %p171, %p172
    %p174 = scmp.ne.s32.totalorder %s166, %s168
    %p175 = scmp.eq.s32.totalorder %s18, 7
    %p176 = por %p174, %p175
    %p177 = scmp.ne.s32.totalorder %s168, %s169
    %p178 = scmp.eq.s32.totalorder %s18, 0
    %p179 = por %p177, %p178
    %p180 = scmp.ne.s32.totalorder %s168, %s169
    %p181 = scmp.eq.s32.totalorder %s19, 7
    %p182 = por %p180, %p181
    %p184 = scmp.ne.s32.totalorder %s169, %s183
    %p185 = scmp.eq.s32.totalorder %s19, 0
    %p186 = por %p184, %p185
    %s187 = ssub.s32 %s20, %s32
    %s188 = ssub.s32 %s21, %s28
    %s189 = sor.u32 %s187, %s188
    %p190 = scmp.eq.s32.totalorder %s189, 0
    %s192 = sadd.s32 %s191, 1
    %s193 = scalar_select %p190, %s191, %s192
    %p196 = pneg %p190
    %p197 = scmp.eq.s32.totalorder %s13, 7
    %p198 = por %p196, %p197
    %p199 = scmp.ne.s32.totalorder %s191, %s194
    %p200 = scmp.eq.s32.totalorder %s13, 0
    %p201 = por %p199, %p200
    %p202 = scmp.ne.s32.totalorder %s191, %s194
    %p203 = scmp.eq.s32.totalorder %s18, 7
    %p204 = por %p202, %p203
    %p205 = scmp.ne.s32.totalorder %s194, %s195
    %p206 = scmp.eq.s32.totalorder %s18, 0
    %p207 = por %p205, %p206
    %p208 = scmp.ne.s32.totalorder %s194, %s195
    %p209 = scmp.eq.s32.totalorder %s19, 7
    %p210 = por %p208, %p209
    %p212 = scmp.ne.s32.totalorder %s195, %s211
    %p213 = scmp.eq.s32.totalorder %s19, 0
    %p214 = por %p212, %p213
    %p215 = scmp.le.s32.totalorder 1, %s13
    %p216 = scmp.lt.s32.totalorder %s13, 9
    %p217 = pnand %p215, %p216
    %p218 = pneg %p217
    // Predicated region
    $region9: #{temporal_conv_net.7} parent=5 // pred_check
      _
    $region10: #{temporal_conv_net.7} parent=5 // pred_check_branch
      %220 = sbr.rel (%p217) target = $region12
    $region11: #{temporal_conv_net.7} parent=5 // pred_region
      %s221 = ssub.s32 %s13, 1
      // Predicated region
      $region13: #{temporal_conv_net.7} parent=11 // pred_check
        %p222 = pneg %p74
      $region14: #{temporal_conv_net.7} parent=11 // pred_check_branch
        %224 = sbr.rel (%p222) target = $region16
      $region15: #{temporal_conv_net.7} parent=11 // pred_region
        _
      $region16: #{temporal_conv_net.7} parent=11 // pred_fallthru
        _
      // Predicated region
      $region17: #{temporal_conv_net.7} parent=11 // pred_check
        %p225 = pneg %p95
      $region18: #{temporal_conv_net.7} parent=11 // pred_check_branch
        %227 = sbr.rel (%p225) target = $region20
      $region19: #{temporal_conv_net.7} parent=11 // pred_region
        _
      $region20: #{temporal_conv_net.7} parent=11 // pred_fallthru
        _
      // Predicated region
      $region21: #{temporal_conv_net.7} parent=11 // pred_check
        %p228 = pneg %p116
      $region22: #{temporal_conv_net.7} parent=11 // pred_check_branch
        %230 = sbr.rel (%p228) target = $region24
      $region23: #{temporal_conv_net.7} parent=11 // pred_region
        _
      $region24: #{temporal_conv_net.7} parent=11 // pred_fallthru
        _
      // Predicated region
      $region25: #{temporal_conv_net.7} parent=11 // pred_check
        %p231 = pneg %p137
      $region26: #{temporal_conv_net.7} parent=11 // pred_check_branch
        %233 = sbr.rel (%p231) target = $region28
      $region27: #{temporal_conv_net.7} parent=11 // pred_region
        _
      $region28: #{temporal_conv_net.7} parent=11 // pred_fallthru
        _
      // Predicated region
      $region29: #{temporal_conv_net.7} parent=11 // pred_check
        %p234 = pneg %p158
      $region30: #{temporal_conv_net.7} parent=11 // pred_check_branch
        %236 = sbr.rel (%p234) target = $region32
      $region31: #{temporal_conv_net.7} parent=11 // pred_region
        _
      $region32: #{temporal_conv_net.7} parent=11 // pred_fallthru
        _
      // Predicated region
      $region33: #{temporal_conv_net.7} parent=11 // pred_check
        %p237 = pneg %p179
      $region34: #{temporal_conv_net.7} parent=11 // pred_check_branch
        %239 = sbr.rel (%p237) target = $region36
      $region35: #{temporal_conv_net.7} parent=11 // pred_region
        _
      $region36: #{temporal_conv_net.7} parent=11 // pred_fallthru
        _
    $region12: #{temporal_conv_net.7} parent=5 // pred_fallthru
      _
    %p240 = scmp.lt.s32.totalorder %s13, 8
    // Predicated region
    $region37: #{temporal_conv_net.7} parent=5 // pred_check
      %p241 = pneg %p240
    $region38: #{temporal_conv_net.7} parent=5 // pred_check_branch
      %243 = sbr.rel (%p241) target = $region40
    $region39: #{temporal_conv_net.7} parent=5 // pred_region
      // Predicated region
      $region41: #{temporal_conv_net.7} parent=39 // pred_check
        %p244 = pneg %p47
      $region42: #{temporal_conv_net.7} parent=39 // pred_check_branch
        %246 = sbr.rel (%p244) target = $region44
      $region43: #{temporal_conv_net.7} parent=39 // pred_region
        %p247 = scmp.lt.s32.totalorder %s20, 1
        %s248 = scalar_select %p247, %s20, 1
        %p249 = scmp.lt.s32.totalorder %s21, 3
        %s250 = scalar_select %p249, %s21, 3
        %s251 = smul.addr %s248, 4
        %s252 = sadd.s32 %s250, %s251
        %s253 = smul.addr %s252, 8
        %s254 = scalar_lea.vmem %s0, %s253
      $region44: #{temporal_conv_net.7} parent=39 // pred_fallthru
        _
    $region40: #{temporal_conv_net.7} parent=5 // pred_fallthru
      _
    %p255 = scmp.le.s32.totalorder 1, %s13
    %p256 = scmp.lt.s32.totalorder %s13, 9
    %p257 = pnand %p255, %p256
    %p258 = pneg %p257
    // Predicated region
    $region45: #{temporal_conv_net.7} parent=5 // pred_check
      _
    $region46: #{temporal_conv_net.7} parent=5 // pred_check_branch
      %260 = sbr.rel (%p257) target = $region48
    $region47: #{temporal_conv_net.7} parent=5 // pred_region
      %s261 = ssub.s32 %s13, 1
      %p262 = scmp.lt.s32.totalorder %s22, 1
      %s263 = scalar_select %p262, %s22, 1
      %p264 = scmp.lt.s32.totalorder %s23, 3
      %s265 = scalar_select %p264, %s23, 3
      %s266 = smul.addr %s263, 4
      %s267 = sadd.s32 %s265, %s266
      %s268 = smul.addr %s267, 8
      %s269 = scalar_lea.vmem %s0, %s268
      %p270 = pneg %p53
      %p271 = pneg %p50
      %p272 = pneg %p74
      %p273 = pneg %p71
      %p274 = pneg %p95
      %p275 = pneg %p92
      %p276 = pneg %p116
      %p277 = pneg %p113
      %p278 = pneg %p137
      %p279 = pneg %p134
      %p280 = pneg %p158
      %p281 = pneg %p155
      %p282 = pneg %p179
      %p283 = pneg %p176
      %p284 = pneg %p207
      %p285 = pneg %p204
      %p286 = scmp.lt.s32.totalorder %s22, 1
      %s287 = scalar_select %p286, %s22, 1
      %p288 = scmp.lt.s32.totalorder %s23, 3
      %s289 = scalar_select %p288, %s23, 3
      %s290 = smul.addr %s287, 4
      %s291 = sadd.s32 %s289, %s290
      %s292 = smul.addr %s291, 8
      %s293 = scalar_lea.vmem %s7, %s292
      %p294 = scmp.lt.s32.totalorder %s22, 1
      %s295 = scalar_select %p294, %s22, 1
      %p296 = scmp.lt.s32.totalorder %s23, 3
      %s297 = scalar_select %p296, %s23, 3
      %s298 = smul.addr %s295, 4
      %s299 = sadd.s32 %s297, %s298
      %s300 = smul.addr %s299, 8
      %s301 = scalar_lea.vmem %s0, %s300
      %p302 = scmp.lt.s32.totalorder %s22, 1
      %s303 = scalar_select %p302, %s22, 1
      %p304 = scmp.lt.s32.totalorder %s23, 3
      %s305 = scalar_select %p304, %s23, 3
      %s306 = smul.addr %s303, 4
      %s307 = sadd.s32 %s305, %s306
      %s308 = smul.addr %s307, 8
      %s309 = scalar_lea.vmem %s7, %s308
      %v310 = vld [vmem:[%s301] sm:$0xff]
      %p311 = scmp.eq.s32.totalorder %s23, 0
      // Predicated region
      $region49: #{temporal_conv_net.7} parent=47 // pred_check
        %p312 = pneg %p311
      $region50: #{temporal_conv_net.7} parent=47 // pred_check_branch
        %314 = sbr.rel (%p312) target = $region52
      $region51: #{temporal_conv_net.7} parent=47 // pred_region
        %315 = vst [vmem:[#allocation2] sm:$0xff] 0.0
      $region52: #{temporal_conv_net.7} parent=47 // pred_fallthru
        _
      %p316 = scmp.gt.s32.totalorder %s23, 0
      // Predicated region
      $region53: #{temporal_conv_net.7} parent=47 // pred_check
        %p317 = pneg %p316
      $region54: #{temporal_conv_net.7} parent=47 // pred_check_branch
        %319 = sbr.rel (%p317) target = $region56
      $region55: #{temporal_conv_net.7} parent=47 // pred_region
        %v320 = vld [vmem:[#allocation4] sm:$0xff]
        %321 = vst [vmem:[#allocation2] sm:$0xff] %v320
      $region56: #{temporal_conv_net.7} parent=47 // pred_fallthru
        _
      %322 = vst [vmem:[#allocation2 + $0x8] sm:$0xff] %v310
      %v323 = vld [vmem:[#allocation2 + $0x8] sm:$0xff]
      %324 = vst [vmem:[#allocation4] sm:$0xff] %v323
      %v325 = vld [vmem:[#allocation2 + $0x4] sm:$0xff]
      %v326 = vld [vmem:[#allocation2 + $0xc] sm:$0xf]
      %v327 = vld [vmem:[#allocation2] sm:$0xff]
      %v328 = vld [vmem:[#allocation2 + $0x8] sm:$0xf]
      %v329 = vld [vmem:[%s1] sm:$0xff]
      %v330 = vld [vmem:[%s1 + $0x8] sm:$0xff]
      %v331 = vld [vmem:[%s1 + $0x10] sm:$0xff]
      %v332 = vld [vmem:[%s1 + $0x18] sm:$0xff]
      %v333 = vld [vmem:[%s1 + $0x20] sm:$0xff]
      %v334 = vld [vmem:[%s1 + $0x28] sm:$0xff]
      %v335 = vld [vmem:[%s1 + $0x30] sm:$0xff]
      %v336 = vld [vmem:[%s1 + $0x38] sm:$0xff]
      %v337 = vld [vmem:[%s1 + $0x40] sm:$0xff]
      %v338 = vld [vmem:[%s1 + $0x48] sm:$0xff]
      %v339 = vld [vmem:[%s1 + $0x50] sm:$0xff]
      %v340 = vld [vmem:[%s1 + $0x58] sm:$0xff]
      %v341 = vld [vmem:[%s1 + $0x60] sm:$0xff]
      %v342 = vld [vmem:[%s1 + $0x68] sm:$0xff]
      %v343 = vld [vmem:[%s1 + $0x70] sm:$0xff]
      %v344 = vld [vmem:[%s1 + $0x78] sm:$0xff]
      %v345 = vld [vmem:[%s1 + $0x80] sm:$0xff]
      %v346 = vld [vmem:[%s1 + $0x88] sm:$0xff]
      %v347 = vld [vmem:[%s1 + $0x90] sm:$0xff]
      %v348 = vld [vmem:[%s1 + $0x98] sm:$0xff]
      %v349 = vld [vmem:[%s1 + $0xa0] sm:$0xff]
      %v350 = vld [vmem:[%s1 + $0xa8] sm:$0xff]
      %v351 = vld [vmem:[%s1 + $0xb0] sm:$0xff]
      %v352 = vld [vmem:[%s1 + $0xb8] sm:$0xff]
      %v353 = vld [vmem:[%s1 + $0xc0] sm:$0xff]
      %v354 = vld [vmem:[%s1 + $0xc8] sm:$0xff]
      %v355 = vld [vmem:[%s1 + $0xd0] sm:$0xff]
      %v356 = vld [vmem:[%s1 + $0xd8] sm:$0xff]
      %v357 = vld [vmem:[%s1 + $0xe0] sm:$0xff]
      %v358 = vld [vmem:[%s1 + $0xe8] sm:$0xff]
      %v359 = vld [vmem:[%s1 + $0xf0] sm:$0xff]
      %v360 = vld [vmem:[%s1 + $0xf8] sm:$0xff]
      %v361 = vld [vmem:[%s2] sm:$0x1]
      %v363 = vperm.slane %v361, 0
      %365 = vmatpush.msra.mxu0 %v344
      %366 = vmatpush.msra.mxu0 %v343
      %367 = vmatpush.msra.mxu0 %v342
      %368 = vmatpush.msra.mxu0 %v341
      %369 = vmatpush.msra.mxu0 %v340
      %370 = vmatpush.msra.mxu0 %v339
      %371 = vmatpush.msra.mxu0 %v338
      %372 = vmatpush.msra.mxu0 %v337
      %373 = vmatpush.msra.mxu0 %v336
      %374 = vmatpush.msra.mxu0 %v335
      %375 = vmatpush.msra.mxu0 %v334
      %376 = vmatpush.msra.mxu0 %v333
      %377 = vmatpush.msra.mxu0 %v332
      %378 = vmatpush.msra.mxu0 %v331
      %379 = vmatpush.msra.mxu0 %v330
      %380 = vmatpush.msra.mxu0 %v329
      %381 = vmatmul.f32.gmra.mxu0 %v325
      %v382 = vpop.f32.mrf.mxu0
      %v383 = vadd.f32 %v363, %v382
      %384 = vmatmul.f32.gmra.mxu0 %v326
      %v385 = vpop.f32.mrf.mxu0
      %v386 = vadd.f32 %v363, %v385
      %387 = vdwg.mxu0
      %388 = vmatpush.msra.mxu0 %v360
      %389 = vmatpush.msra.mxu0 %v359
      %390 = vmatpush.msra.mxu0 %v358
      %391 = vmatpush.msra.mxu0 %v357
      %392 = vmatpush.msra.mxu0 %v356
      %393 = vmatpush.msra.mxu0 %v355
      %394 = vmatpush.msra.mxu0 %v354
      %395 = vmatpush.msra.mxu0 %v353
      %396 = vmatpush.msra.mxu0 %v352
      %397 = vmatpush.msra.mxu0 %v351
      %398 = vmatpush.msra.mxu0 %v350
      %399 = vmatpush.msra.mxu0 %v349
      %400 = vmatpush.msra.mxu0 %v348
      %401 = vmatpush.msra.mxu0 %v347
      %402 = vmatpush.msra.mxu0 %v346
      %403 = vmatpush.msra.mxu0 %v345
      %404 = vmatmul.f32.gmra.mxu0 %v327
      %v405 = vpop.f32.mrf.mxu0
      %v406 = vadd.f32 %v383, %v405
      %407 = vmatmul.f32.gmra.mxu0 %v328
      %v408 = vpop.f32.mrf.mxu0
      %v409 = vadd.f32 %v386, %v408
      %410 = vdwg.mxu0
      %v411 = vmax.f32 %v406, 0.0
      %v412 = vmax.f32 %v409, 0.0
      %413 = vst [vmem:[#allocation3] sm:$0xff] %v411
      %414 = vst [vmem:[#allocation3 + $0x8] sm:$0xf] %v412
      %s415 = smul.u32 %s23, 8
      %p416 = scmp.lt.s32.totalorder %s415, 4
      // Predicated region
      $region57: #{temporal_conv_net.7} parent=47 // pred_check
        %p417 = pneg %p416
      $region58: #{temporal_conv_net.7} parent=47 // pred_check_branch
        %419 = sbr.rel (%p417) target = $region60
      $region59: #{temporal_conv_net.7} parent=47 // pred_region
        %v420 = vld [vmem:[#allocation3] sm:$0xf]
        %v421 = vlaneseq
        %v422 = vshrl.u32 %v421, 7
        %s423 = ssub.s32 4, %s415
        %v424 = vstv %s423
        %vm425 = vcmp.lt.s32.totalorder %v422, %v424
        %v426 = vsel %vm425, 0.0, %v420
        %427 = vst [vmem:[#allocation3] sm:$0xf] %v426
      $region60: #{temporal_conv_net.7} parent=47 // pred_fallthru
        _
      %v428 = vld [vmem:[#allocation3 + $0x4] sm:$0xff]
      %v429 = vld [vmem:[#allocation3] sm:$0xff]
      %v430 = vld [vmem:[%s3] sm:$0xff]
      %v431 = vld [vmem:[%s3 + $0x8] sm:$0xff]
      %v432 = vld [vmem:[%s3 + $0x10] sm:$0xff]
      %v433 = vld [vmem:[%s3 + $0x18] sm:$0xff]
      %v434 = vld [vmem:[%s3 + $0x20] sm:$0xff]
      %v435 = vld [vmem:[%s3 + $0x28] sm:$0xff]
      %v436 = vld [vmem:[%s3 + $0x30] sm:$0xff]
      %v437 = vld [vmem:[%s3 + $0x38] sm:$0xff]
      %v438 = vld [vmem:[%s3 + $0x40] sm:$0xff]
      %v439 = vld [vmem:[%s3 + $0x48] sm:$0xff]
      %v440 = vld [vmem:[%s3 + $0x50] sm:$0xff]
      %v441 = vld [vmem:[%s3 + $0x58] sm:$0xff]
      %v442 = vld [vmem:[%s3 + $0x60] sm:$0xff]
      %v443 = vld [vmem:[%s3 + $0x68] sm:$0xff]
      %v444 = vld [vmem:[%s3 + $0x70] sm:$0xff]
      %v445 = vld [vmem:[%s3 + $0x78] sm:$0xff]
      %v446 = vld [vmem:[%s3 + $0x80] sm:$0xff]
      %v447 = vld [vmem:[%s3 + $0x88] sm:$0xff]
      %v448 = vld [vmem:[%s3 + $0x90] sm:$0xff]
      %v449 = vld [vmem:[%s3 + $0x98] sm:$0xff]
      %v450 = vld [vmem:[%s3 + $0xa0] sm:$0xff]
      %v451 = vld [vmem:[%s3 + $0xa8] sm:$0xff]
      %v452 = vld [vmem:[%s3 + $0xb0] sm:$0xff]
      %v453 = vld [vmem:[%s3 + $0xb8] sm:$0xff]
      %v454 = vld [vmem:[%s3 + $0xc0] sm:$0xff]
      %v455 = vld [vmem:[%s3 + $0xc8] sm:$0xff]
      %v456 = vld [vmem:[%s3 + $0xd0] sm:$0xff]
      %v457 = vld [vmem:[%s3 + $0xd8] sm:$0xff]
      %v458 = vld [vmem:[%s3 + $0xe0] sm:$0xff]
      %v459 = vld [vmem:[%s3 + $0xe8] sm:$0xff]
      %v460 = vld [vmem:[%s3 + $0xf0] sm:$0xff]
      %v461 = vld [vmem:[%s3 + $0xf8] sm:$0xff]
      %v462 = vld [vmem:[%s4] sm:$0x1]
      %v464 = vperm.slane %v462, 0
      %466 = vmatpush.msra.mxu0 %v445
      %467 = vmatpush.msra.mxu0 %v444
      %468 = vmatpush.msra.mxu0 %v443
      %469 = vmatpush.msra.mxu0 %v442
      %470 = vmatpush.msra.mxu0 %v441
      %471 = vmatpush.msra.mxu0 %v440
      %472 = vmatpush.msra.mxu0 %v439
      %473 = vmatpush.msra.mxu0 %v438
      %474 = vmatpush.msra.mxu0 %v437
      %475 = vmatpush.msra.mxu0 %v436
      %476 = vmatpush.msra.mxu0 %v435
      %477 = vmatpush.msra.mxu0 %v434
      %478 = vmatpush.msra.mxu0 %v433
      %479 = vmatpush.msra.mxu0 %v432
      %480 = vmatpush.msra.mxu0 %v431
      %481 = vmatpush.msra.mxu0 %v430
      %482 = vmatmul.f32.gmra.mxu0 %v428
      %v483 = vpop.f32.mrf.mxu0
      %v484 = vadd.f32 %v464, %v483
      %485 = vdwg.mxu0
      %486 = vmatpush.msra.mxu0 %v461
      %487 = vmatpush.msra.mxu0 %v460
      %488 = vmatpush.msra.mxu0 %v459
      %489 = vmatpush.msra.mxu0 %v458
      %490 = vmatpush.msra.mxu0 %v457
      %491 = vmatpush.msra.mxu0 %v456
      %492 = vmatpush.msra.mxu0 %v455
      %493 = vmatpush.msra.mxu0 %v454
      %494 = vmatpush.msra.mxu0 %v453
      %495 = vmatpush.msra.mxu0 %v452
      %496 = vmatpush.msra.mxu0 %v451
      %497 = vmatpush.msra.mxu0 %v450
      %498 = vmatpush.msra.mxu0 %v449
      %499 = vmatpush.msra.mxu0 %v448
      %500 = vmatpush.msra.mxu0 %v447
      %501 = vmatpush.msra.mxu0 %v446
      %502 = vmatmul.f32.gmra.mxu0 %v429
      %v503 = vpop.f32.mrf.mxu0
      %v504 = vadd.f32 %v484, %v503
      %505 = vdwg.mxu0
      %v506 = vmax.f32 %v504, 0.0
      %v507 = vld [vmem:[%s5] sm:$0xff]
      %v508 = vld [vmem:[%s5 + $0x8] sm:$0xff]
      %v509 = vld [vmem:[%s5 + $0x10] sm:$0xff]
      %v510 = vld [vmem:[%s5 + $0x18] sm:$0xff]
      %v511 = vld [vmem:[%s5 + $0x20] sm:$0xff]
      %v512 = vld [vmem:[%s5 + $0x28] sm:$0xff]
      %v513 = vld [vmem:[%s5 + $0x30] sm:$0xff]
      %v514 = vld [vmem:[%s5 + $0x38] sm:$0xff]
      %v515 = vld [vmem:[%s5 + $0x40] sm:$0xff]
      %v516 = vld [vmem:[%s5 + $0x48] sm:$0xff]
      %v517 = vld [vmem:[%s5 + $0x50] sm:$0xff]
      %v518 = vld [vmem:[%s5 + $0x58] sm:$0xff]
      %v519 = vld [vmem:[%s5 + $0x60] sm:$0xff]
      %v520 = vld [vmem:[%s5 + $0x68] sm:$0xff]
      %v521 = vld [vmem:[%s5 + $0x70] sm:$0xff]
      %v522 = vld [vmem:[%s5 + $0x78] sm:$0xff]
      %v523 = vld [vmem:[%s6] sm:$0x1]
      %v525 = vperm.slane %v523, 0
      %527 = vmatpush.msra.mxu0 %v522
      %528 = vmatpush.msra.mxu0 %v521
      %529 = vmatpush.msra.mxu0 %v520
      %530 = vmatpush.msra.mxu0 %v519
      %531 = vmatpush.msra.mxu0 %v518
      %532 = vmatpush.msra.mxu0 %v517
      %533 = vmatpush.msra.mxu0 %v516
      %534 = vmatpush.msra.mxu0 %v515
      %535 = vmatpush.msra.mxu0 %v514
      %536 = vmatpush.msra.mxu0 %v513
      %537 = vmatpush.msra.mxu0 %v512
      %538 = vmatpush.msra.mxu0 %v511
      %539 = vmatpush.msra.mxu0 %v510
      %540 = vmatpush.msra.mxu0 %v509
      %541 = vmatpush.msra.mxu0 %v508
      %542 = vmatpush.msra.mxu0 %v507
      %543 = vmatmul.f32.gmra.mxu0 %v310
      %v544 = vpop.f32.mrf.mxu0
      %v545 = vadd.f32 %v525, %v544
      %546 = vdwg.mxu0
      %v547 = vadd.f32 %v506, %v545
      %v548 = vmax.f32 %v547, 0.0
      %549 = vst [vmem:[%s309] sm:$0xff] %v548
      %p550 = scmp.lt.s32.totalorder %s22, 1
      %s551 = scalar_select %p550, %s22, 1
      %p552 = scmp.lt.s32.totalorder %s23, 3
      %s553 = scalar_select %p552, %s23, 3
      %s554 = smul.addr %s551, 4
      %s555 = sadd.s32 %s553, %s554
      %s556 = smul.addr %s555, 8
      %s557 = scalar_lea.vmem %s7, %s556
      // Predicated region
      $region61: #{temporal_conv_net.7} parent=47 // pred_check
        %p558 = pneg %p204
      $region62: #{temporal_conv_net.7} parent=47 // pred_check_branch
        %560 = sbr.rel (%p558) target = $region64
      $region63: #{temporal_conv_net.7} parent=47 // pred_region
        _
      $region64: #{temporal_conv_net.7} parent=47 // pred_fallthru
        _
    $region48: #{temporal_conv_net.7} parent=5 // pred_fallthru
      _
    %p561 = scmp.le.s32.totalorder 2, %s13
    // Predicated region
    $region65: #{temporal_conv_net.7} parent=5 // pred_check
      %p562 = pneg %p561
    $region66: #{temporal_conv_net.7} parent=5 // pred_check_branch
      %564 = sbr.rel (%p562) target = $region68
    $region67: #{temporal_conv_net.7} parent=5 // pred_region
      %s565 = ssub.s32 %s13, 2
      // Predicated region
      $region69: #{temporal_conv_net.7} parent=67 // pred_check
        %p566 = pneg %p210
      $region70: #{temporal_conv_net.7} parent=67 // pred_check_branch
        %568 = sbr.rel (%p566) target = $region72
      $region71: #{temporal_conv_net.7} parent=67 // pred_region
        %p569 = scmp.lt.s32.totalorder %s24, 1
        %s570 = scalar_select %p569, %s24, 1
        %p571 = scmp.lt.s32.totalorder %s25, 3
        %s572 = scalar_select %p571, %s25, 3
        %s573 = smul.addr %s570, 4
        %s574 = sadd.s32 %s572, %s573
        %s575 = smul.addr %s574, 8
        %s576 = scalar_lea.vmem %s7, %s575
      $region72: #{temporal_conv_net.7} parent=67 // pred_fallthru
        _
    $region68: #{temporal_conv_net.7} parent=5 // pred_fallthru
      _
  $region6: #{temporal_conv_net.7} parent=0 // loop_footer
    %s17 = sadd.s32 1, %s13
  $region7: #{temporal_conv_net.7} parent=0 // loop_footer_branch
    %12 = sbr.rel target = $region3
  $region8: #{temporal_conv_net.7} parent=0 // loop_exit
    _

// kernel: temporal_conv_net.8
$region0: #{temporal_conv_net.8}
  #allocation0 [shape = 'u32[]', space=smem, size = 0x4, offset = 0x4, fixed_abs, tag = 'smem constant byte address 0x4 - core index']
  #allocation1 [shape = 'u32[72,128]{1,0:T(1,128)}', space=vmem, size = 0x9000, scoped, tag = 'internal scratch']
  #allocation2 [shape = 'f32[1,24,128]{2,1,0:T(8,128)}', space=vmem, size = 0x3000, scoped, tag = 'scratch operand']
  #allocation3 [shape = 'f32[1,16,128]{2,1,0:T(8,128)}', space=vmem, size = 0x2000, scoped, tag = 'scratch operand']
  #allocation4 [shape = 'f32[1,16,128]{2,1,0:T(8,128)}', space=vmem, size = 0x2000, scoped, tag = 'scratch operand']
  %s0 = inlined_call_operand.vmem [shape: f32[2,32,128], index: 0, kind: input, shape index: {}]
  %s1 = inlined_call_operand.vmem [shape: f32[256,128], index: 1, kind: input, shape index: {}]
  %s2 = inlined_call_operand.vmem [shape: f32[1,128], index: 2, kind: input, shape index: {}]
  %s3 = inlined_call_operand.vmem [shape: f32[256,128], index: 3, kind: input, shape index: {}]
  %s4 = inlined_call_operand.vmem [shape: f32[1,128], index: 4, kind: input, shape index: {}]
  %s5 = inlined_call_operand.vmem [shape: f32[2,32,128], index: 5, kind: output, shape index: {}]
  %s6 = sld [smem:[#allocation0]]
  $region65: #{temporal_conv_net.8} parent=0
    _
  %s8 = ssub.s32 1, %s6
  %s9 = scalar_select 0, %s8, %s6
  loop: start=0, step=1, limit=10
  $region2: #{temporal_conv_net.8} parent=0 // loop_pre_header
    _
  $region3: #{temporal_conv_net.8} parent=0 // loop_header
    %s11 = sphi 0, %s15
    %p12 = scmp.ge.s32.totalorder %s11, 10
    %s18 = sphi 0, %s30
    %s19 = sphi 0, %s26
    %s20 = sphi 0, %s18
    %s21 = sphi 0, %s19
    %s22 = sphi 0, %s20
    %s23 = sphi 0, %s21
    %s35 = sphi 0, %s37
    %s38 = sphi 0, %s35
    %s39 = sphi 0, %s38
    %s55 = sphi 0, %s39
    %s59 = sphi 0, %s59
    %s61 = sphi 0, %s59
    %s62 = sphi 0, %s61
    %s76 = sphi 0, %s62
    %s80 = sphi 0, %s80
    %s82 = sphi 0, %s80
    %s83 = sphi 0, %s82
    %s97 = sphi 0, %s83
    %s101 = sphi 0, %s101
    %s103 = sphi 0, %s101
    %s104 = sphi 0, %s103
    %s118 = sphi 0, %s104
    %s122 = sphi 0, %s122
    %s124 = sphi 0, %s122
    %s125 = sphi 0, %s124
    %s139 = sphi 0, %s125
    %s147 = sphi 0, %s149
    %s150 = sphi 0, %s147
    %s151 = sphi 0, %s150
    %s167 = sphi 0, %s151
  $region4: #{temporal_conv_net.8} parent=0 // loop_header_branch
    %14 = sbr.rel (%p12) target = $region8
  $region5: #{temporal_conv_net.8} parent=0 // loop_body
    %s16 = ssub.s32 %s11, 1
    %s17 = ssub.s32 %s11, 2
    %s24 = sadd.s32 1, %s19
    %p25 = scmp.ge.s32.totalorder %s24, 4
    %s26 = scalar_select %p25, 0, %s24
    %s27 = sadd.s32 1, %s18
    %s28 = scalar_select %p25, %s27, %s18
    %p29 = scmp.ge.s32.totalorder %s28, 2
    %s30 = scalar_select %p29, 0, %s28
    %s31 = ssub.s32 %s18, %s30
    %s32 = ssub.s32 %s19, %s26
    %s33 = sor.u32 %s31, %s32
    %p34 = scmp.eq.s32.totalorder %s33, 0
    %s36 = sadd.s32 %s35, 1
    %s37 = scalar_select %p34, %s35, %s36
    %p40 = pneg %p34
    %p41 = scmp.eq.s32.totalorder %s11, 7
    %p42 = por %p40, %p41
    %p43 = scmp.ne.s32.totalorder %s35, %s38
    %p44 = scmp.eq.s32.totalorder %s11, 0
    %p45 = por %p43, %p44
    %p46 = scmp.ne.s32.totalorder %s35, %s38
    %p47 = scmp.eq.s32.totalorder %s16, 7
    %p48 = por %p46, %p47
    %p49 = scmp.ne.s32.totalorder %s38, %s39
    %p50 = scmp.eq.s32.totalorder %s16, 0
    %p51 = por %p49, %p50
    %p52 = scmp.ne.s32.totalorder %s38, %s39
    %p53 = scmp.eq.s32.totalorder %s17, 7
    %p54 = por %p52, %p53
    %p56 = scmp.ne.s32.totalorder %s39, %s55
    %p57 = scmp.eq.s32.totalorder %s17, 0
    %p58 = por %p56, %p57
    %s60 = sadd.s32 %s59, 1
    %p63 = scmp.eq.s32.totalorder %s11, 7
    %p64 = scmp.ne.s32.totalorder %s59, %s61
    %p65 = scmp.eq.s32.totalorder %s11, 0
    %p66 = por %p64, %p65
    %p67 = scmp.ne.s32.totalorder %s59, %s61
    %p68 = scmp.eq.s32.totalorder %s16, 7
    %p69 = por %p67, %p68
    %p70 = scmp.ne.s32.totalorder %s61, %s62
    %p71 = scmp.eq.s32.totalorder %s16, 0
    %p72 = por %p70, %p71
    %p73 = scmp.ne.s32.totalorder %s61, %s62
    %p74 = scmp.eq.s32.totalorder %s17, 7
    %p75 = por %p73, %p74
    %p77 = scmp.ne.s32.totalorder %s62, %s76
    %p78 = scmp.eq.s32.totalorder %s17, 0
    %p79 = por %p77, %p78
    %s81 = sadd.s32 %s80, 1
    %p84 = scmp.eq.s32.totalorder %s11, 7
    %p85 = scmp.ne.s32.totalorder %s80, %s82
    %p86 = scmp.eq.s32.totalorder %s11, 0
    %p87 = por %p85, %p86
    %p88 = scmp.ne.s32.totalorder %s80, %s82
    %p89 = scmp.eq.s32.totalorder %s16, 7
    %p90 = por %p88, %p89
    %p91 = scmp.ne.s32.totalorder %s82, %s83
    %p92 = scmp.eq.s32.totalorder %s16, 0
    %p93 = por %p91, %p92
    %p94 = scmp.ne.s32.totalorder %s82, %s83
    %p95 = scmp.eq.s32.totalorder %s17, 7
    %p96 = por %p94, %p95
    %p98 = scmp.ne.s32.totalorder %s83, %s97
    %p99 = scmp.eq.s32.totalorder %s17, 0
    %p100 = por %p98, %p99
    %s102 = sadd.s32 %s101, 1
    %p105 = scmp.eq.s32.totalorder %s11, 7
    %p106 = scmp.ne.s32.totalorder %s101, %s103
    %p107 = scmp.eq.s32.totalorder %s11, 0
    %p108 = por %p106, %p107
    %p109 = scmp.ne.s32.totalorder %s101, %s103
    %p110 = scmp.eq.s32.totalorder %s16, 7
    %p111 = por %p109, %p110
    %p112 = scmp.ne.s32.totalorder %s103, %s104
    %p113 = scmp.eq.s32.totalorder %s16, 0
    %p114 = por %p112, %p113
    %p115 = scmp.ne.s32.totalorder %s103, %s104
    %p116 = scmp.eq.s32.totalorder %s17, 7
    %p117 = por %p115, %p116
    %p119 = scmp.ne.s32.totalorder %s104, %s118
    %p120 = scmp.eq.s32.totalorder %s17, 0
    %p121 = por %p119, %p120
    %s123 = sadd.s32 %s122, 1
    %p126 = scmp.eq.s32.totalorder %s11, 7
    %p127 = scmp.ne.s32.totalorder %s122, %s124
    %p128 = scmp.eq.s32.totalorder %s11, 0
    %p129 = por %p127, %p128
    %p130 = scmp.ne.s32.totalorder %s122, %s124
    %p131 = scmp.eq.s32.totalorder %s16, 7
    %p132 = por %p130, %p131
    %p133 = scmp.ne.s32.totalorder %s124, %s125
    %p134 = scmp.eq.s32.totalorder %s16, 0
    %p135 = por %p133, %p134
    %p136 = scmp.ne.s32.totalorder %s124, %s125
    %p137 = scmp.eq.s32.totalorder %s17, 7
    %p138 = por %p136, %p137
    %p140 = scmp.ne.s32.totalorder %s125, %s139
    %p141 = scmp.eq.s32.totalorder %s17, 0
    %p142 = por %p140, %p141
    %s143 = ssub.s32 %s18, %s30
    %s144 = ssub.s32 %s19, %s26
    %s145 = sor.u32 %s143, %s144
    %p146 = scmp.eq.s32.totalorder %s145, 0
    %s148 = sadd.s32 %s147, 1
    %s149 = scalar_select %p146, %s147, %s148
    %p152 = pneg %p146
    %p153 = scmp.eq.s32.totalorder %s11, 7
    %p154 = por %p152, %p153
    %p155 = scmp.ne.s32.totalorder %s147, %s150
    %p156 = scmp.eq.s32.totalorder %s11, 0
    %p157 = por %p155, %p156
    %p158 = scmp.ne.s32.totalorder %s147, %s150
    %p159 = scmp.eq.s32.totalorder %s16, 7
    %p160 = por %p158, %p159
    %p161 = scmp.ne.s32.totalorder %s150, %s151
    %p162 = scmp.eq.s32.totalorder %s16, 0
    %p163 = por %p161, %p162
    %p164 = scmp.ne.s32.totalorder %s150, %s151
    %p165 = scmp.eq.s32.totalorder %s17, 7
    %p166 = por %p164, %p165
    %p168 = scmp.ne.s32.totalorder %s151, %s167
    %p169 = scmp.eq.s32.totalorder %s17, 0
    %p170 = por %p168, %p169
    %p171 = scmp.le.s32.totalorder 1, %s11
    %p172 = scmp.lt.s32.totalorder %s11, 9
    %p173 = pnand %p171, %p172
    %p174 = pneg %p173
    // Predicated region
    $region9: #{temporal_conv_net.8} parent=5 // pred_check
      _
    $region10: #{temporal_conv_net.8} parent=5 // pred_check_branch
      %176 = sbr.rel (%p173) target = $region12
    $region11: #{temporal_conv_net.8} parent=5 // pred_region
      %s177 = ssub.s32 %s11, 1
      // Predicated region
      $region13: #{temporal_conv_net.8} parent=11 // pred_check
        %p178 = pneg %p72
      $region14: #{temporal_conv_net.8} parent=11 // pred_check_branch
        %180 = sbr.rel (%p178) target = $region16
      $region15: #{temporal_conv_net.8} parent=11 // pred_region
        _
      $region16: #{temporal_conv_net.8} parent=11 // pred_fallthru
        _
      // Predicated region
      $region17: #{temporal_conv_net.8} parent=11 // pred_check
        %p181 = pneg %p93
      $region18: #{temporal_conv_net.8} parent=11 // pred_check_branch
        %183 = sbr.rel (%p181) target = $region20
      $region19: #{temporal_conv_net.8} parent=11 // pred_region
        _
      $region20: #{temporal_conv_net.8} parent=11 // pred_fallthru
        _
      // Predicated region
      $region21: #{temporal_conv_net.8} parent=11 // pred_check
        %p184 = pneg %p114
      $region22: #{temporal_conv_net.8} parent=11 // pred_check_branch
        %186 = sbr.rel (%p184) target = $region24
      $region23: #{temporal_conv_net.8} parent=11 // pred_region
        _
      $region24: #{temporal_conv_net.8} parent=11 // pred_fallthru
        _
      // Predicated region
      $region25: #{temporal_conv_net.8} parent=11 // pred_check
        %p187 = pneg %p135
      $region26: #{temporal_conv_net.8} parent=11 // pred_check_branch
        %189 = sbr.rel (%p187) target = $region28
      $region27: #{temporal_conv_net.8} parent=11 // pred_region
        _
      $region28: #{temporal_conv_net.8} parent=11 // pred_fallthru
        _
    $region12: #{temporal_conv_net.8} parent=5 // pred_fallthru
      _
    %p190 = scmp.lt.s32.totalorder %s11, 8
    // Predicated region
    $region29: #{temporal_conv_net.8} parent=5 // pred_check
      %p191 = pneg %p190
    $region30: #{temporal_conv_net.8} parent=5 // pred_check_branch
      %193 = sbr.rel (%p191) target = $region32
    $region31: #{temporal_conv_net.8} parent=5 // pred_region
      // Predicated region
      $region33: #{temporal_conv_net.8} parent=31 // pred_check
        %p194 = pneg %p45
      $region34: #{temporal_conv_net.8} parent=31 // pred_check_branch
        %196 = sbr.rel (%p194) target = $region36
      $region35: #{temporal_conv_net.8} parent=31 // pred_region
        %p197 = scmp.lt.s32.totalorder %s18, 1
        %s198 = scalar_select %p197, %s18, 1
        %p199 = scmp.lt.s32.totalorder %s19, 3
        %s200 = scalar_select %p199, %s19, 3
        %s201 = smul.addr %s198, 4
        %s202 = sadd.s32 %s200, %s201
        %s203 = smul.addr %s202, 8
        %s204 = scalar_lea.vmem %s0, %s203
      $region36: #{temporal_conv_net.8} parent=31 // pred_fallthru
        _
    $region32: #{temporal_conv_net.8} parent=5 // pred_fallthru
      _
    %p205 = scmp.le.s32.totalorder 1, %s11
    %p206 = scmp.lt.s32.totalorder %s11, 9
    %p207 = pnand %p205, %p206
    %p208 = pneg %p207
    // Predicated region
    $region37: #{temporal_conv_net.8} parent=5 // pred_check
      _
    $region38: #{temporal_conv_net.8} parent=5 // pred_check_branch
      %210 = sbr.rel (%p207) target = $region40
    $region39: #{temporal_conv_net.8} parent=5 // pred_region
      %s211 = ssub.s32 %s11, 1
      %p212 = scmp.lt.s32.totalorder %s20, 1
      %s213 = scalar_select %p212, %s20, 1
      %p214 = scmp.lt.s32.totalorder %s21, 3
      %s215 = scalar_select %p214, %s21, 3
      %s216 = smul.addr %s213, 4
      %s217 = sadd.s32 %s215, %s216
      %s218 = smul.addr %s217, 8
      %s219 = scalar_lea.vmem %s0, %s218
      %p220 = pneg %p51
      %p221 = pneg %p48
      %p222 = pneg %p72
      %p223 = pneg %p69
      %p224 = pneg %p93
      %p225 = pneg %p90
      %p226 = pneg %p114
      %p227 = pneg %p111
      %p228 = pneg %p135
      %p229 = pneg %p132
      %p230 = pneg %p163
      %p231 = pneg %p160
      %p232 = scmp.lt.s32.totalorder %s20, 1
      %s233 = scalar_select %p232, %s20, 1
      %p234 = scmp.lt.s32.totalorder %s21, 3
      %s235 = scalar_select %p234, %s21, 3
      %s236 = smul.addr %s233, 4
      %s237 = sadd.s32 %s235, %s236
      %s238 = smul.addr %s237, 8
      %s239 = scalar_lea.vmem %s5, %s238
      %p240 = scmp.lt.s32.totalorder %s20, 1
      %s241 = scalar_select %p240, %s20, 1
      %p242 = scmp.lt.s32.totalorder %s21, 3
      %s243 = scalar_select %p242, %s21, 3
      %s244 = smul.addr %s241, 4
      %s245 = sadd.s32 %s243, %s244
      %s246 = smul.addr %s245, 8
      %s247 = scalar_lea.vmem %s0, %s246
      %p248 = scmp.lt.s32.totalorder %s20, 1
      %s249 = scalar_select %p248, %s20, 1
      %p250 = scmp.lt.s32.totalorder %s21, 3
      %s251 = scalar_select %p250, %s21, 3
      %s252 = smul.addr %s249, 4
      %s253 = sadd.s32 %s251, %s252
      %s254 = smul.addr %s253, 8
      %s255 = scalar_lea.vmem %s5, %s254
      %v256 = vld [vmem:[%s247] sm:$0xff]
      %p257 = scmp.eq.s32.totalorder %s21, 0
      // Predicated region
      $region41: #{temporal_conv_net.8} parent=39 // pred_check
        %p258 = pneg %p257
      $region42: #{temporal_conv_net.8} parent=39 // pred_check_branch
        %260 = sbr.rel (%p258) target = $region44
      $region43: #{temporal_conv_net.8} parent=39 // pred_region
        %261 = vst [vmem:[#allocation2] sm:$0xff] 0.0
        %262 = vst [vmem:[#allocation2 + $0x8] sm:$0xff] 0.0
      $region44: #{temporal_conv_net.8} parent=39 // pred_fallthru
        _
      %p263 = scmp.gt.s32.totalorder %s21, 0
      // Predicated region
      $region45: #{temporal_conv_net.8} parent=39 // pred_check
        %p264 = pneg %p263
      $region46: #{temporal_conv_net.8} parent=39 // pred_check_branch
        %266 = sbr.rel (%p264) target = $region48
      $region47: #{temporal_conv_net.8} parent=39 // pred_region
        %v267 = vld [vmem:[#allocation4] sm:$0xff]
        %v268 = vld [vmem:[#allocation4 + $0x8] sm:$0xff]
        %269 = vst [vmem:[#allocation2] sm:$0xff] %v267
        %270 = vst [vmem:[#allocation2 + $0x8] sm:$0xff] %v268
      $region48: #{temporal_conv_net.8} parent=39 // pred_fallthru
        _
      %271 = vst [vmem:[#allocation2 + $0x10] sm:$0xff] %v256
      %v272 = vld [vmem:[#allocation2 + $0x8] sm:$0xff]
      %v273 = vld [vmem:[#allocation2 + $0x10] sm:$0xff]
      %274 = vst [vmem:[#allocation4] sm:$0xff] %v272
      %275 = vst [vmem:[#allocation4 + $0x8] sm:$0xff] %v273
      %v276 = vld [vmem:[#allocation2 + $0x8] sm:$0xff]
      %v277 = vld [vmem:[#allocation2 + $0x10] sm:$0xff]
      %v278 = vld [vmem:[#allocation2] sm:$0xff]
      %v279 = vld [vmem:[#allocation2 + $0x8] sm:$0xff]
      %v280 = vld [vmem:[%s1] sm:$0xff]
      %v281 = vld [vmem:[%s1 + $0x8] sm:$0xff]
      %v282 = vld [vmem:[%s1 + $0x10] sm:$0xff]
      %v283 = vld [vmem:[%s1 + $0x18] sm:$0xff]
      %v284 = vld [vmem:[%s1 + $0x20] sm:$0xff]
      %v285 = vld [vmem:[%s1 + $0x28] sm:$0xff]
      %v286 = vld [vmem:[%s1 + $0x30] sm:$0xff]
      %v287 = vld [vmem:[%s1 + $0x38] sm:$0xff]
      %v288 = vld [vmem:[%s1 + $0x40] sm:$0xff]
      %v289 = vld [vmem:[%s1 + $0x48] sm:$0xff]
      %v290 = vld [vmem:[%s1 + $0x50] sm:$0xff]
      %v291 = vld [vmem:[%s1 + $0x58] sm:$0xff]
      %v292 = vld [vmem:[%s1 + $0x60] sm:$0xff]
      %v293 = vld [vmem:[%s1 + $0x68] sm:$0xff]
      %v294 = vld [vmem:[%s1 + $0x70] sm:$0xff]
      %v295 = vld [vmem:[%s1 + $0x78] sm:$0xff]
      %v296 = vld [vmem:[%s1 + $0x80] sm:$0xff]
      %v297 = vld [vmem:[%s1 + $0x88] sm:$0xff]
      %v298 = vld [vmem:[%s1 + $0x90] sm:$0xff]
      %v299 = vld [vmem:[%s1 + $0x98] sm:$0xff]
      %v300 = vld [vmem:[%s1 + $0xa0] sm:$0xff]
      %v301 = vld [vmem:[%s1 + $0xa8] sm:$0xff]
      %v302 = vld [vmem:[%s1 + $0xb0] sm:$0xff]
      %v303 = vld [vmem:[%s1 + $0xb8] sm:$0xff]
      %v304 = vld [vmem:[%s1 + $0xc0] sm:$0xff]
      %v305 = vld [vmem:[%s1 + $0xc8] sm:$0xff]
      %v306 = vld [vmem:[%s1 + $0xd0] sm:$0xff]
      %v307 = vld [vmem:[%s1 + $0xd8] sm:$0xff]
      %v308 = vld [vmem:[%s1 + $0xe0] sm:$0xff]
      %v309 = vld [vmem:[%s1 + $0xe8] sm:$0xff]
      %v310 = vld [vmem:[%s1 + $0xf0] sm:$0xff]
      %v311 = vld [vmem:[%s1 + $0xf8] sm:$0xff]
      %v312 = vld [vmem:[%s2] sm:$0x1]
      %v314 = vperm.slane %v312, 0
      %316 = vmatpush.msra.mxu0 %v295
      %317 = vmatpush.msra.mxu0 %v294
      %318 = vmatpush.msra.mxu0 %v293
      %319 = vmatpush.msra.mxu0 %v292
      %320 = vmatpush.msra.mxu0 %v291
      %321 = vmatpush.msra.mxu0 %v290
      %322 = vmatpush.msra.mxu0 %v289
      %323 = vmatpush.msra.mxu0 %v288
      %324 = vmatpush.msra.mxu0 %v287
      %325 = vmatpush.msra.mxu0 %v286
      %326 = vmatpush.msra.mxu0 %v285
      %327 = vmatpush.msra.mxu0 %v284
      %328 = vmatpush.msra.mxu0 %v283
      %329 = vmatpush.msra.mxu0 %v282
      %330 = vmatpush.msra.mxu0 %v281
      %331 = vmatpush.msra.mxu0 %v280
      %332 = vmatmul.f32.gmra.mxu0 %v276
      %v333 = vpop.f32.mrf.mxu0
      %v334 = vadd.f32 %v314, %v333
      %335 = vmatmul.f32.gmra.mxu0 %v277
      %v336 = vpop.f32.mrf.mxu0
      %v337 = vadd.f32 %v314, %v336
      %338 = vdwg.mxu0
      %339 = vmatpush.msra.mxu0 %v311
      %340 = vmatpush.msra.mxu0 %v310
      %341 = vmatpush.msra.mxu0 %v309
      %342 = vmatpush.msra.mxu0 %v308
      %343 = vmatpush.msra.mxu0 %v307
      %344 = vmatpush.msra.mxu0 %v306
      %345 = vmatpush.msra.mxu0 %v305
      %346 = vmatpush.msra.mxu0 %v304
      %347 = vmatpush.msra.mxu0 %v303
      %348 = vmatpush.msra.mxu0 %v302
      %349 = vmatpush.msra.mxu0 %v301
      %350 = vmatpush.msra.mxu0 %v300
      %351 = vmatpush.msra.mxu0 %v299
      %352 = vmatpush.msra.mxu0 %v298
      %353 = vmatpush.msra.mxu0 %v297
      %354 = vmatpush.msra.mxu0 %v296
      %355 = vmatmul.f32.gmra.mxu0 %v278
      %v356 = vpop.f32.mrf.mxu0
      %v357 = vadd.f32 %v334, %v356
      %358 = vmatmul.f32.gmra.mxu0 %v279
      %v359 = vpop.f32.mrf.mxu0
      %v360 = vadd.f32 %v337, %v359
      %361 = vdwg.mxu0
      %v362 = vmax.f32 %v357, 0.0
      %v363 = vmax.f32 %v360, 0.0
      %364 = vst [vmem:[#allocation3] sm:$0xff] %v362
      %365 = vst [vmem:[#allocation3 + $0x8] sm:$0xff] %v363
      %s366 = smul.u32 %s21, 8
      %p367 = scmp.lt.s32.totalorder %s366, 8
      // Predicated region
      $region49: #{temporal_conv_net.8} parent=39 // pred_check
        %p368 = pneg %p367
      $region50: #{temporal_conv_net.8} parent=39 // pred_check_branch
        %370 = sbr.rel (%p368) target = $region52
      $region51: #{temporal_conv_net.8} parent=39 // pred_region
        %v371 = vld [vmem:[#allocation3] sm:$0xff]
        %v372 = vlaneseq
        %v373 = vshrl.u32 %v372, 7
        %s374 = ssub.s32 8, %s366
        %v375 = vstv %s374
        %vm376 = vcmp.lt.s32.totalorder %v373, %v375
        %v377 = vsel %vm376, 0.0, %v371
        %378 = vst [vmem:[#allocation3] sm:$0xff] %v377
      $region52: #{temporal_conv_net.8} parent=39 // pred_fallthru
        _
      %v379 = vld [vmem:[#allocation3 + $0x8] sm:$0xff]
      %v380 = vld [vmem:[#allocation3] sm:$0xff]
      %v381 = vld [vmem:[%s3] sm:$0xff]
      %v382 = vld [vmem:[%s3 + $0x8] sm:$0xff]
      %v383 = vld [vmem:[%s3 + $0x10] sm:$0xff]
      %v384 = vld [vmem:[%s3 + $0x18] sm:$0xff]
      %v385 = vld [vmem:[%s3 + $0x20] sm:$0xff]
      %v386 = vld [vmem:[%s3 + $0x28] sm:$0xff]
      %v387 = vld [vmem:[%s3 + $0x30] sm:$0xff]
      %v388 = vld [vmem:[%s3 + $0x38] sm:$0xff]
      %v389 = vld [vmem:[%s3 + $0x40] sm:$0xff]
      %v390 = vld [vmem:[%s3 + $0x48] sm:$0xff]
      %v391 = vld [vmem:[%s3 + $0x50] sm:$0xff]
      %v392 = vld [vmem:[%s3 + $0x58] sm:$0xff]
      %v393 = vld [vmem:[%s3 + $0x60] sm:$0xff]
      %v394 = vld [vmem:[%s3 + $0x68] sm:$0xff]
      %v395 = vld [vmem:[%s3 + $0x70] sm:$0xff]
      %v396 = vld [vmem:[%s3 + $0x78] sm:$0xff]
      %v397 = vld [vmem:[%s3 + $0x80] sm:$0xff]
      %v398 = vld [vmem:[%s3 + $0x88] sm:$0xff]
      %v399 = vld [vmem:[%s3 + $0x90] sm:$0xff]
      %v400 = vld [vmem:[%s3 + $0x98] sm:$0xff]
      %v401 = vld [vmem:[%s3 + $0xa0] sm:$0xff]
      %v402 = vld [vmem:[%s3 + $0xa8] sm:$0xff]
      %v403 = vld [vmem:[%s3 + $0xb0] sm:$0xff]
      %v404 = vld [vmem:[%s3 + $0xb8] sm:$0xff]
      %v405 = vld [vmem:[%s3 + $0xc0] sm:$0xff]
      %v406 = vld [vmem:[%s3 + $0xc8] sm:$0xff]
      %v407 = vld [vmem:[%s3 + $0xd0] sm:$0xff]
      %v408 = vld [vmem:[%s3 + $0xd8] sm:$0xff]
      %v409 = vld [vmem:[%s3 + $0xe0] sm:$0xff]
      %v410 = vld [vmem:[%s3 + $0xe8] sm:$0xff]
      %v411 = vld [vmem:[%s3 + $0xf0] sm:$0xff]
      %v412 = vld [vmem:[%s3 + $0xf8] sm:$0xff]
      %v413 = vld [vmem:[%s4] sm:$0x1]
      %v415 = vperm.slane %v413, 0
      %417 = vmatpush.msra.mxu0 %v396
      %418 = vmatpush.msra.mxu0 %v395
      %419 = vmatpush.msra.mxu0 %v394
      %420 = vmatpush.msra.mxu0 %v393
      %421 = vmatpush.msra.mxu0 %v392
      %422 = vmatpush.msra.mxu0 %v391
      %423 = vmatpush.msra.mxu0 %v390
      %424 = vmatpush.msra.mxu0 %v389
      %425 = vmatpush.msra.mxu0 %v388
      %426 = vmatpush.msra.mxu0 %v387
      %427 = vmatpush.msra.mxu0 %v386
      %428 = vmatpush.msra.mxu0 %v385
      %429 = vmatpush.msra.mxu0 %v384
      %430 = vmatpush.msra.mxu0 %v383
      %431 = vmatpush.msra.mxu0 %v382
      %432 = vmatpush.msra.mxu0 %v381
      %433 = vmatmul.f32.gmra.mxu0 %v379
      %v434 = vpop.f32.mrf.mxu0
      %v435 = vadd.f32 %v415, %v434
      %436 = vdwg.mxu0
      %437 = vmatpush.msra.mxu0 %v412
      %438 = vmatpush.msra.mxu0 %v411
      %439 = vmatpush.msra.mxu0 %v410
      %440 = vmatpush.msra.mxu0 %v409
      %441 = vmatpush.msra.mxu0 %v408
      %442 = vmatpush.msra.mxu0 %v407
      %443 = vmatpush.msra.mxu0 %v406
      %444 = vmatpush.msra.mxu0 %v405
      %445 = vmatpush.msra.mxu0 %v404
      %446 = vmatpush.msra.mxu0 %v403
      %447 = vmatpush.msra.mxu0 %v402
      %448 = vmatpush.msra.mxu0 %v401
      %449 = vmatpush.msra.mxu0 %v400
      %450 = vmatpush.msra.mxu0 %v399
      %451 = vmatpush.msra.mxu0 %v398
      %452 = vmatpush.msra.mxu0 %v397
      %453 = vmatmul.f32.gmra.mxu0 %v380
      %v454 = vpop.f32.mrf.mxu0
      %v455 = vadd.f32 %v435, %v454
      %456 = vdwg.mxu0
      %v457 = vmax.f32 %v455, 0.0
      %v458 = vadd.f32 %v457, %v256
      %v459 = vmax.f32 %v458, 0.0
      %460 = vst [vmem:[%s255] sm:$0xff] %v459
      %p461 = scmp.lt.s32.totalorder %s20, 1
      %s462 = scalar_select %p461, %s20, 1
      %p463 = scmp.lt.s32.totalorder %s21, 3
      %s464 = scalar_select %p463, %s21, 3
      %s465 = smul.addr %s462, 4
      %s466 = sadd.s32 %s464, %s465
      %s467 = smul.addr %s466, 8
      %s468 = scalar_lea.vmem %s5, %s467
      // Predicated region
      $region53: #{temporal_conv_net.8} parent=39 // pred_check
        %p469 = pneg %p160
      $region54: #{temporal_conv_net.8} parent=39 // pred_check_branch
        %471 = sbr.rel (%p469) target = $region56
      $region55: #{temporal_conv_net.8} parent=39 // pred_region
        _
      $region56: #{temporal_conv_net.8} parent=39 // pred_fallthru
        _
    $region40: #{temporal_conv_net.8} parent=5 // pred_fallthru
      _
    %p472 = scmp.le.s32.totalorder 2, %s11
    // Predicated region
    $region57: #{temporal_conv_net.8} parent=5 // pred_check
      %p473 = pneg %p472
    $region58: #{temporal_conv_net.8} parent=5 // pred_check_branch
      %475 = sbr.rel (%p473) target = $region60
    $region59: #{temporal_conv_net.8} parent=5 // pred_region
      %s476 = ssub.s32 %s11, 2
      // Predicated region
      $region61: #{temporal_conv_net.8} parent=59 // pred_check
        %p477 = pneg %p166
      $region62: #{temporal_conv_net.8} parent=59 // pred_check_branch
        %479 = sbr.rel (%p477) target = $region64
      $region63: #{temporal_conv_net.8} parent=59 // pred_region
        %p480 = scmp.lt.s32.totalorder %s22, 1
        %s481 = scalar_select %p480, %s22, 1
        %p482 = scmp.lt.s32.totalorder %s23, 3
        %s483 = scalar_select %p482, %s23, 3
        %s484 = smul.addr %s481, 4
        %s485 = sadd.s32 %s483, %s484
        %s486 = smul.addr %s485, 8
        %s487 = scalar_lea.vmem %s5, %s486
      $region64: #{temporal_conv_net.8} parent=59 // pred_fallthru
        _
    $region60: #{temporal_conv_net.8} parent=5 // pred_fallthru
      _
  $region6: #{temporal_conv_net.8} parent=0 // loop_footer
    %s15 = sadd.s32 1, %s11
  $region7: #{temporal_conv_net.8} parent=0 // loop_footer_branch
    %10 = sbr.rel target = $region3
  $region8: #{temporal_conv_net.8} parent=0 // loop_exit
    _

// kernel: temporal_conv_net.6
$region0: #{temporal_conv_net.6}
  #allocation0 [shape = 'u32[]', space=smem, size = 0x4, offset = 0x4, fixed_abs, tag = 'smem constant byte address 0x4 - core index']
  #allocation1 [shape = 'u32[72,128]{1,0:T(1,128)}', space=vmem, size = 0x9000, scoped, tag = 'internal scratch']
  #allocation2 [shape = 'f32[1,12,128]{2,1,0:T(8,128)}', space=vmem, size = 0x2000, scoped, tag = 'scratch operand']
  #allocation3 [shape = 'f32[1,10,128]{2,1,0:T(8,128)}', space=vmem, size = 0x2000, scoped, tag = 'scratch operand']
  #allocation4 [shape = 'f32[1,4,128]{2,1,0:T(4,128)}', space=vmem, size = 0x800, scoped, tag = 'scratch operand']
  %s0 = inlined_call_operand.vmem [shape: f32[2,32,128], index: 0, kind: input, shape index: {}]
  %s1 = inlined_call_operand.vmem [shape: f32[256,128], index: 1, kind: input, shape index: {}]
  %s2 = inlined_call_operand.vmem [shape: f32[1,128], index: 2, kind: input, shape index: {}]
  %s3 = inlined_call_operand.vmem [shape: f32[256,128], index: 3, kind: input, shape index: {}]
  %s4 = inlined_call_operand.vmem [shape: f32[1,128], index: 4, kind: input, shape index: {}]
  %s5 = inlined_call_operand.vmem [shape: f32[2,32,128], index: 5, kind: output, shape index: {}]
  %s6 = sld [smem:[#allocation0]]
  $region65: #{temporal_conv_net.6} parent=0
    _
  %s8 = ssub.s32 1, %s6
  %s9 = scalar_select 0, %s8, %s6
  loop: start=0, step=1, limit=10
  $region2: #{temporal_conv_net.6} parent=0 // loop_pre_header
    _
  $region3: #{temporal_conv_net.6} parent=0 // loop_header
    %s11 = sphi 0, %s15
    %p12 = scmp.ge.s32.totalorder %s11, 10
    %s18 = sphi 0, %s30
    %s19 = sphi 0, %s26
    %s20 = sphi 0, %s18
    %s21 = sphi 0, %s19
    %s22 = sphi 0, %s20
    %s23 = sphi 0, %s21
    %s35 = sphi 0, %s37
    %s38 = sphi 0, %s35
    %s39 = sphi 0, %s38
    %s55 = sphi 0, %s39
    %s59 = sphi 0, %s59
    %s61 = sphi 0, %s59
    %s62 = sphi 0, %s61
    %s76 = sphi 0, %s62
    %s80 = sphi 0, %s80
    %s82 = sphi 0, %s80
    %s83 = sphi 0, %s82
    %s97 = sphi 0, %s83
    %s101 = sphi 0, %s101
    %s103 = sphi 0, %s101
    %s104 = sphi 0, %s103
    %s118 = sphi 0, %s104
    %s122 = sphi 0, %s122
    %s124 = sphi 0, %s122
    %s125 = sphi 0, %s124
    %s139 = sphi 0, %s125
    %s147 = sphi 0, %s149
    %s150 = sphi 0, %s147
    %s151 = sphi 0, %s150
    %s167 = sphi 0, %s151
  $region4: #{temporal_conv_net.6} parent=0 // loop_header_branch
    %14 = sbr.rel (%p12) target = $region8
  $region5: #{temporal_conv_net.6} parent=0 // loop_body
    %s16 = ssub.s32 %s11, 1
    %s17 = ssub.s32 %s11, 2
    %s24 = sadd.s32 1, %s19
    %p25 = scmp.ge.s32.totalorder %s24, 4
    %s26 = scalar_select %p25, 0, %s24
    %s27 = sadd.s32 1, %s18
    %s28 = scalar_select %p25, %s27, %s18
    %p29 = scmp.ge.s32.totalorder %s28, 2
    %s30 = scalar_select %p29, 0, %s28
    %s31 = ssub.s32 %s18, %s30
    %s32 = ssub.s32 %s19, %s26
    %s33 = sor.u32 %s31, %s32
    %p34 = scmp.eq.s32.totalorder %s33, 0
    %s36 = sadd.s32 %s35, 1
    %s37 = scalar_select %p34, %s35, %s36
    %p40 = pneg %p34
    %p41 = scmp.eq.s32.totalorder %s11, 7
    %p42 = por %p40, %p41
    %p43 = scmp.ne.s32.totalorder %s35, %s38
    %p44 = scmp.eq.s32.totalorder %s11, 0
    %p45 = por %p43, %p44
    %p46 = scmp.ne.s32.totalorder %s35, %s38
    %p47 = scmp.eq.s32.totalorder %s16, 7
    %p48 = por %p46, %p47
    %p49 = scmp.ne.s32.totalorder %s38, %s39
    %p50 = scmp.eq.s32.totalorder %s16, 0
    %p51 = por %p49, %p50
    %p52 = scmp.ne.s32.totalorder %s38, %s39
    %p53 = scmp.eq.s32.totalorder %s17, 7
    %p54 = por %p52, %p53
    %p56 = scmp.ne.s32.totalorder %s39, %s55
    %p57 = scmp.eq.s32.totalorder %s17, 0
    %p58 = por %p56, %p57
    %s60 = sadd.s32 %s59, 1
    %p63 = scmp.eq.s32.totalorder %s11, 7
    %p64 = scmp.ne.s32.totalorder %s59, %s61
    %p65 = scmp.eq.s32.totalorder %s11, 0
    %p66 = por %p64, %p65
    %p67 = scmp.ne.s32.totalorder %s59, %s61
    %p68 = scmp.eq.s32.totalorder %s16, 7
    %p69 = por %p67, %p68
    %p70 = scmp.ne.s32.totalorder %s61, %s62
    %p71 = scmp.eq.s32.totalorder %s16, 0
    %p72 = por %p70, %p71
    %p73 = scmp.ne.s32.totalorder %s61, %s62
    %p74 = scmp.eq.s32.totalorder %s17, 7
    %p75 = por %p73, %p74
    %p77 = scmp.ne.s32.totalorder %s62, %s76
    %p78 = scmp.eq.s32.totalorder %s17, 0
    %p79 = por %p77, %p78
    %s81 = sadd.s32 %s80, 1
    %p84 = scmp.eq.s32.totalorder %s11, 7
    %p85 = scmp.ne.s32.totalorder %s80, %s82
    %p86 = scmp.eq.s32.totalorder %s11, 0
    %p87 = por %p85, %p86
    %p88 = scmp.ne.s32.totalorder %s80, %s82
    %p89 = scmp.eq.s32.totalorder %s16, 7
    %p90 = por %p88, %p89
    %p91 = scmp.ne.s32.totalorder %s82, %s83
    %p92 = scmp.eq.s32.totalorder %s16, 0
    %p93 = por %p91, %p92
    %p94 = scmp.ne.s32.totalorder %s82, %s83
    %p95 = scmp.eq.s32.totalorder %s17, 7
    %p96 = por %p94, %p95
    %p98 = scmp.ne.s32.totalorder %s83, %s97
    %p99 = scmp.eq.s32.totalorder %s17, 0
    %p100 = por %p98, %p99
    %s102 = sadd.s32 %s101, 1
    %p105 = scmp.eq.s32.totalorder %s11, 7
    %p106 = scmp.ne.s32.totalorder %s101, %s103
    %p107 = scmp.eq.s32.totalorder %s11, 0
    %p108 = por %p106, %p107
    %p109 = scmp.ne.s32.totalorder %s101, %s103
    %p110 = scmp.eq.s32.totalorder %s16, 7
    %p111 = por %p109, %p110
    %p112 = scmp.ne.s32.totalorder %s103, %s104
    %p113 = scmp.eq.s32.totalorder %s16, 0
    %p114 = por %p112, %p113
    %p115 = scmp.ne.s32.totalorder %s103, %s104
    %p116 = scmp.eq.s32.totalorder %s17, 7
    %p117 = por %p115, %p116
    %p119 = scmp.ne.s32.totalorder %s104, %s118
    %p120 = scmp.eq.s32.totalorder %s17, 0
    %p121 = por %p119, %p120
    %s123 = sadd.s32 %s122, 1
    %p126 = scmp.eq.s32.totalorder %s11, 7
    %p127 = scmp.ne.s32.totalorder %s122, %s124
    %p128 = scmp.eq.s32.totalorder %s11, 0
    %p129 = por %p127, %p128
    %p130 = scmp.ne.s32.totalorder %s122, %s124
    %p131 = scmp.eq.s32.totalorder %s16, 7
    %p132 = por %p130, %p131
    %p133 = scmp.ne.s32.totalorder %s124, %s125
    %p134 = scmp.eq.s32.totalorder %s16, 0
    %p135 = por %p133, %p134
    %p136 = scmp.ne.s32.totalorder %s124, %s125
    %p137 = scmp.eq.s32.totalorder %s17, 7
    %p138 = por %p136, %p137
    %p140 = scmp.ne.s32.totalorder %s125, %s139
    %p141 = scmp.eq.s32.totalorder %s17, 0
    %p142 = por %p140, %p141
    %s143 = ssub.s32 %s18, %s30
    %s144 = ssub.s32 %s19, %s26
    %s145 = sor.u32 %s143, %s144
    %p146 = scmp.eq.s32.totalorder %s145, 0
    %s148 = sadd.s32 %s147, 1
    %s149 = scalar_select %p146, %s147, %s148
    %p152 = pneg %p146
    %p153 = scmp.eq.s32.totalorder %s11, 7
    %p154 = por %p152, %p153
    %p155 = scmp.ne.s32.totalorder %s147, %s150
    %p156 = scmp.eq.s32.totalorder %s11, 0
    %p157 = por %p155, %p156
    %p158 = scmp.ne.s32.totalorder %s147, %s150
    %p159 = scmp.eq.s32.totalorder %s16, 7
    %p160 = por %p158, %p159
    %p161 = scmp.ne.s32.totalorder %s150, %s151
    %p162 = scmp.eq.s32.totalorder %s16, 0
    %p163 = por %p161, %p162
    %p164 = scmp.ne.s32.totalorder %s150, %s151
    %p165 = scmp.eq.s32.totalorder %s17, 7
    %p166 = por %p164, %p165
    %p168 = scmp.ne.s32.totalorder %s151, %s167
    %p169 = scmp.eq.s32.totalorder %s17, 0
    %p170 = por %p168, %p169
    %p171 = scmp.le.s32.totalorder 1, %s11
    %p172 = scmp.lt.s32.totalorder %s11, 9
    %p173 = pnand %p171, %p172
    %p174 = pneg %p173
    // Predicated region
    $region9: #{temporal_conv_net.6} parent=5 // pred_check
      _
    $region10: #{temporal_conv_net.6} parent=5 // pred_check_branch
      %176 = sbr.rel (%p173) target = $region12
    $region11: #{temporal_conv_net.6} parent=5 // pred_region
      %s177 = ssub.s32 %s11, 1
      // Predicated region
      $region13: #{temporal_conv_net.6} parent=11 // pred_check
        %p178 = pneg %p72
      $region14: #{temporal_conv_net.6} parent=11 // pred_check_branch
        %180 = sbr.rel (%p178) target = $region16
      $region15: #{temporal_conv_net.6} parent=11 // pred_region
        _
      $region16: #{temporal_conv_net.6} parent=11 // pred_fallthru
        _
      // Predicated region
      $region17: #{temporal_conv_net.6} parent=11 // pred_check
        %p181 = pneg %p93
      $region18: #{temporal_conv_net.6} parent=11 // pred_check_branch
        %183 = sbr.rel (%p181) target = $region20
      $region19: #{temporal_conv_net.6} parent=11 // pred_region
        _
      $region20: #{temporal_conv_net.6} parent=11 // pred_fallthru
        _
      // Predicated region
      $region21: #{temporal_conv_net.6} parent=11 // pred_check
        %p184 = pneg %p114
      $region22: #{temporal_conv_net.6} parent=11 // pred_check_branch
        %186 = sbr.rel (%p184) target = $region24
      $region23: #{temporal_conv_net.6} parent=11 // pred_region
        _
      $region24: #{temporal_conv_net.6} parent=11 // pred_fallthru
        _
      // Predicated region
      $region25: #{temporal_conv_net.6} parent=11 // pred_check
        %p187 = pneg %p135
      $region26: #{temporal_conv_net.6} parent=11 // pred_check_branch
        %189 = sbr.rel (%p187) target = $region28
      $region27: #{temporal_conv_net.6} parent=11 // pred_region
        _
      $region28: #{temporal_conv_net.6} parent=11 // pred_fallthru
        _
    $region12: #{temporal_conv_net.6} parent=5 // pred_fallthru
      _
    %p190 = scmp.lt.s32.totalorder %s11, 8
    // Predicated region
    $region29: #{temporal_conv_net.6} parent=5 // pred_check
      %p191 = pneg %p190
    $region30: #{temporal_conv_net.6} parent=5 // pred_check_branch
      %193 = sbr.rel (%p191) target = $region32
    $region31: #{temporal_conv_net.6} parent=5 // pred_region
      // Predicated region
      $region33: #{temporal_conv_net.6} parent=31 // pred_check
        %p194 = pneg %p45
      $region34: #{temporal_conv_net.6} parent=31 // pred_check_branch
        %196 = sbr.rel (%p194) target = $region36
      $region35: #{temporal_conv_net.6} parent=31 // pred_region
        %p197 = scmp.lt.s32.totalorder %s18, 1
        %s198 = scalar_select %p197, %s18, 1
        %p199 = scmp.lt.s32.totalorder %s19, 3
        %s200 = scalar_select %p199, %s19, 3
        %s201 = smul.addr %s198, 4
        %s202 = sadd.s32 %s200, %s201
        %s203 = smul.addr %s202, 8
        %s204 = scalar_lea.vmem %s0, %s203
      $region36: #{temporal_conv_net.6} parent=31 // pred_fallthru
        _
    $region32: #{temporal_conv_net.6} parent=5 // pred_fallthru
      _
    %p205 = scmp.le.s32.totalorder 1, %s11
    %p206 = scmp.lt.s32.totalorder %s11, 9
    %p207 = pnand %p205, %p206
    %p208 = pneg %p207
    // Predicated region
    $region37: #{temporal_conv_net.6} parent=5 // pred_check
      _
    $region38: #{temporal_conv_net.6} parent=5 // pred_check_branch
      %210 = sbr.rel (%p207) target = $region40
    $region39: #{temporal_conv_net.6} parent=5 // pred_region
      %s211 = ssub.s32 %s11, 1
      %p212 = scmp.lt.s32.totalorder %s20, 1
      %s213 = scalar_select %p212, %s20, 1
      %p214 = scmp.lt.s32.totalorder %s21, 3
      %s215 = scalar_select %p214, %s21, 3
      %s216 = smul.addr %s213, 4
      %s217 = sadd.s32 %s215, %s216
      %s218 = smul.addr %s217, 8
      %s219 = scalar_lea.vmem %s0, %s218
      %p220 = pneg %p51
      %p221 = pneg %p48
      %p222 = pneg %p72
      %p223 = pneg %p69
      %p224 = pneg %p93
      %p225 = pneg %p90
      %p226 = pneg %p114
      %p227 = pneg %p111
      %p228 = pneg %p135
      %p229 = pneg %p132
      %p230 = pneg %p163
      %p231 = pneg %p160
      %p232 = scmp.lt.s32.totalorder %s20, 1
      %s233 = scalar_select %p232, %s20, 1
      %p234 = scmp.lt.s32.totalorder %s21, 3
      %s235 = scalar_select %p234, %s21, 3
      %s236 = smul.addr %s233, 4
      %s237 = sadd.s32 %s235, %s236
      %s238 = smul.addr %s237, 8
      %s239 = scalar_lea.vmem %s5, %s238
      %p240 = scmp.lt.s32.totalorder %s20, 1
      %s241 = scalar_select %p240, %s20, 1
      %p242 = scmp.lt.s32.totalorder %s21, 3
      %s243 = scalar_select %p242, %s21, 3
      %s244 = smul.addr %s241, 4
      %s245 = sadd.s32 %s243, %s244
      %s246 = smul.addr %s245, 8
      %s247 = scalar_lea.vmem %s0, %s246
      %p248 = scmp.lt.s32.totalorder %s20, 1
      %s249 = scalar_select %p248, %s20, 1
      %p250 = scmp.lt.s32.totalorder %s21, 3
      %s251 = scalar_select %p250, %s21, 3
      %s252 = smul.addr %s249, 4
      %s253 = sadd.s32 %s251, %s252
      %s254 = smul.addr %s253, 8
      %s255 = scalar_lea.vmem %s5, %s254
      %v256 = vld [vmem:[%s247] sm:$0xff]
      %p257 = scmp.eq.s32.totalorder %s21, 0
      // Predicated region
      $region41: #{temporal_conv_net.6} parent=39 // pred_check
        %p258 = pneg %p257
      $region42: #{temporal_conv_net.6} parent=39 // pred_check_branch
        %260 = sbr.rel (%p258) target = $region44
      $region43: #{temporal_conv_net.6} parent=39 // pred_region
        %261 = vst [vmem:[#allocation2] sm:$0xf] 0.0
      $region44: #{temporal_conv_net.6} parent=39 // pred_fallthru
        _
      %p262 = scmp.gt.s32.totalorder %s21, 0
      // Predicated region
      $region45: #{temporal_conv_net.6} parent=39 // pred_check
        %p263 = pneg %p262
      $region46: #{temporal_conv_net.6} parent=39 // pred_check_branch
        %265 = sbr.rel (%p263) target = $region48
      $region47: #{temporal_conv_net.6} parent=39 // pred_region
        %v266 = vld [vmem:[#allocation4] sm:$0xf]
        %267 = vst [vmem:[#allocation2] sm:$0xf] %v266
      $region48: #{temporal_conv_net.6} parent=39 // pred_fallthru
        _
      %268 = vst [vmem:[#allocation2 + $0x4] sm:$0xff] %v256
      %v269 = vld [vmem:[#allocation2 + $0x8] sm:$0xf]
      %270 = vst [vmem:[#allocation4] sm:$0xf] %v269
      %v271 = vld [vmem:[#allocation2 + $0x2] sm:$0xff]
      %v272 = vld [vmem:[#allocation2 + $0xa] sm:$0x3]
      %v273 = vld [vmem:[#allocation2] sm:$0xff]
      %v274 = vld [vmem:[#allocation2 + $0x8] sm:$0x3]
      %v275 = vld [vmem:[%s1] sm:$0xff]
      %v276 = vld [vmem:[%s1 + $0x8] sm:$0xff]
      %v277 = vld [vmem:[%s1 + $0x10] sm:$0xff]
      %v278 = vld [vmem:[%s1 + $0x18] sm:$0xff]
      %v279 = vld [vmem:[%s1 + $0x20] sm:$0xff]
      %v280 = vld [vmem:[%s1 + $0x28] sm:$0xff]
      %v281 = vld [vmem:[%s1 + $0x30] sm:$0xff]
      %v282 = vld [vmem:[%s1 + $0x38] sm:$0xff]
      %v283 = vld [vmem:[%s1 + $0x40] sm:$0xff]
      %v284 = vld [vmem:[%s1 + $0x48] sm:$0xff]
      %v285 = vld [vmem:[%s1 + $0x50] sm:$0xff]
      %v286 = vld [vmem:[%s1 + $0x58] sm:$0xff]
      %v287 = vld [vmem:[%s1 + $0x60] sm:$0xff]
      %v288 = vld [vmem:[%s1 + $0x68] sm:$0xff]
      %v289 = vld [vmem:[%s1 + $0x70] sm:$0xff]
      %v290 = vld [vmem:[%s1 + $0x78] sm:$0xff]
      %v291 = vld [vmem:[%s1 + $0x80] sm:$0xff]
      %v292 = vld [vmem:[%s1 + $0x88] sm:$0xff]
      %v293 = vld [vmem:[%s1 + $0x90] sm:$0xff]
      %v294 = vld [vmem:[%s1 + $0x98] sm:$0xff]
      %v295 = vld [vmem:[%s1 + $0xa0] sm:$0xff]
      %v296 = vld [vmem:[%s1 + $0xa8] sm:$0xff]
      %v297 = vld [vmem:[%s1 + $0xb0] sm:$0xff]
      %v298 = vld [vmem:[%s1 + $0xb8] sm:$0xff]
      %v299 = vld [vmem:[%s1 + $0xc0] sm:$0xff]
      %v300 = vld [vmem:[%s1 + $0xc8] sm:$0xff]
      %v301 = vld [vmem:[%s1 + $0xd0] sm:$0xff]
      %v302 = vld [vmem:[%s1 + $0xd8] sm:$0xff]
      %v303 = vld [vmem:[%s1 + $0xe0] sm:$0xff]
      %v304 = vld [vmem:[%s1 + $0xe8] sm:$0xff]
      %v305 = vld [vmem:[%s1 + $0xf0] sm:$0xff]
      %v306 = vld [vmem:[%s1 + $0xf8] sm:$0xff]
      %v307 = vld [vmem:[%s2] sm:$0x1]
      %v309 = vperm.slane %v307, 0
      %311 = vmatpush.msra.mxu0 %v290
      %312 = vmatpush.msra.mxu0 %v289
      %313 = vmatpush.msra.mxu0 %v288
      %314 = vmatpush.msra.mxu0 %v287
      %315 = vmatpush.msra.mxu0 %v286
      %316 = vmatpush.msra.mxu0 %v285
      %317 = vmatpush.msra.mxu0 %v284
      %318 = vmatpush.msra.mxu0 %v283
      %319 = vmatpush.msra.mxu0 %v282
      %320 = vmatpush.msra.mxu0 %v281
      %321 = vmatpush.msra.mxu0 %v280
      %322 = vmatpush.msra.mxu0 %v279
      %323 = vmatpush.msra.mxu0 %v278
      %324 = vmatpush.msra.mxu0 %v277
      %325 = vmatpush.msra.mxu0 %v276
      %326 = vmatpush.msra.mxu0 %v275
      %327 = vmatmul.f32.gmra.mxu0 %v271
      %v328 = vpop.f32.mrf.mxu0
      %v329 = vadd.f32 %v309, %v328
      %330 = vmatmul.f32.gmra.mxu0 %v272
      %v331 = vpop.f32.mrf.mxu0
      %v332 = vadd.f32 %v309, %v331
      %333 = vdwg.mxu0
      %334 = vmatpush.msra.mxu0 %v306
      %335 = vmatpush.msra.mxu0 %v305
      %336 = vmatpush.msra.mxu0 %v304
      %337 = vmatpush.msra.mxu0 %v303
      %338 = vmatpush.msra.mxu0 %v302
      %339 = vmatpush.msra.mxu0 %v301
      %340 = vmatpush.msra.mxu0 %v300
      %341 = vmatpush.msra.mxu0 %v299
      %342 = vmatpush.msra.mxu0 %v298
      %343 = vmatpush.msra.mxu0 %v297
      %344 = vmatpush.msra.mxu0 %v296
      %345 = vmatpush.msra.mxu0 %v295
      %346 = vmatpush.msra.mxu0 %v294
      %347 = vmatpush.msra.mxu0 %v293
      %348 = vmatpush.msra.mxu0 %v292
      %349 = vmatpush.msra.mxu0 %v291
      %350 = vmatmul.f32.gmra.mxu0 %v273
      %v351 = vpop.f32.mrf.mxu0
      %v352 = vadd.f32 %v329, %v351
      %353 = vmatmul.f32.gmra.mxu0 %v274
      %v354 = vpop.f32.mrf.mxu0
      %v355 = vadd.f32 %v332, %v354
      %356 = vdwg.mxu0
      %v357 = vmax.f32 %v352, 0.0
      %v358 = vmax.f32 %v355, 0.0
      %359 = vst [vmem:[#allocation3] sm:$0xff] %v357
      %360 = vst [vmem:[#allocation3 + $0x8] sm:$0x3] %v358
      %s361 = smul.u32 %s21, 8
      %p362 = scmp.lt.s32.totalorder %s361, 2
      // Predicated region
      $region49: #{temporal_conv_net.6} parent=39 // pred_check
        %p363 = pneg %p362
      $region50: #{temporal_conv_net.6} parent=39 // pred_check_branch
        %365 = sbr.rel (%p363) target = $region52
      $region51: #{temporal_conv_net.6} parent=39 // pred_region
        %v366 = vld [vmem:[#allocation3] sm:$0x3]
        %v367 = vlaneseq
        %v368 = vshrl.u32 %v367, 7
        %s369 = ssub.s32 2, %s361
        %v370 = vstv %s369
        %vm371 = vcmp.lt.s32.totalorder %v368, %v370
        %v372 = vsel %vm371, 0.0, %v366
        %373 = vst [vmem:[#allocation3] sm:$0x3] %v372
      $region52: #{temporal_conv_net.6} parent=39 // pred_fallthru
        _
      %v374 = vld [vmem:[#allocation3 + $0x2] sm:$0xff]
      %v375 = vld [vmem:[#allocation3] sm:$0xff]
      %v376 = vld [vmem:[%s3] sm:$0xff]
      %v377 = vld [vmem:[%s3 + $0x8] sm:$0xff]
      %v378 = vld [vmem:[%s3 + $0x10] sm:$0xff]
      %v379 = vld [vmem:[%s3 + $0x18] sm:$0xff]
      %v380 = vld [vmem:[%s3 + $0x20] sm:$0xff]
      %v381 = vld [vmem:[%s3 + $0x28] sm:$0xff]
      %v382 = vld [vmem:[%s3 + $0x30] sm:$0xff]
      %v383 = vld [vmem:[%s3 + $0x38] sm:$0xff]
      %v384 = vld [vmem:[%s3 + $0x40] sm:$0xff]
      %v385 = vld [vmem:[%s3 + $0x48] sm:$0xff]
      %v386 = vld [vmem:[%s3 + $0x50] sm:$0xff]
      %v387 = vld [vmem:[%s3 + $0x58] sm:$0xff]
      %v388 = vld [vmem:[%s3 + $0x60] sm:$0xff]
      %v389 = vld [vmem:[%s3 + $0x68] sm:$0xff]
      %v390 = vld [vmem:[%s3 + $0x70] sm:$0xff]
      %v391 = vld [vmem:[%s3 + $0x78] sm:$0xff]
      %v392 = vld [vmem:[%s3 + $0x80] sm:$0xff]
      %v393 = vld [vmem:[%s3 + $0x88] sm:$0xff]
      %v394 = vld [vmem:[%s3 + $0x90] sm:$0xff]
      %v395 = vld [vmem:[%s3 + $0x98] sm:$0xff]
      %v396 = vld [vmem:[%s3 + $0xa0] sm:$0xff]
      %v397 = vld [vmem:[%s3 + $0xa8] sm:$0xff]
      %v398 = vld [vmem:[%s3 + $0xb0] sm:$0xff]
      %v399 = vld [vmem:[%s3 + $0xb8] sm:$0xff]
      %v400 = vld [vmem:[%s3 + $0xc0] sm:$0xff]
      %v401 = vld [vmem:[%s3 + $0xc8] sm:$0xff]
      %v402 = vld [vmem:[%s3 + $0xd0] sm:$0xff]
      %v403 = vld [vmem:[%s3 + $0xd8] sm:$0xff]
      %v404 = vld [vmem:[%s3 + $0xe0] sm:$0xff]
      %v405 = vld [vmem:[%s3 + $0xe8] sm:$0xff]
      %v406 = vld [vmem:[%s3 + $0xf0] sm:$0xff]
      %v407 = vld [vmem:[%s3 + $0xf8] sm:$0xff]
      %v408 = vld [vmem:[%s4] sm:$0x1]
      %v410 = vperm.slane %v408, 0
      %412 = vmatpush.msra.mxu0 %v391
      %413 = vmatpush.msra.mxu0 %v390
      %414 = vmatpush.msra.mxu0 %v389
      %415 = vmatpush.msra.mxu0 %v388
      %416 = vmatpush.msra.mxu0 %v387
      %417 = vmatpush.msra.mxu0 %v386
      %418 = vmatpush.msra.mxu0 %v385
      %419 = vmatpush.msra.mxu0 %v384
      %420 = vmatpush.msra.mxu0 %v383
      %421 = vmatpush.msra.mxu0 %v382
      %422 = vmatpush.msra.mxu0 %v381
      %423 = vmatpush.msra.mxu0 %v380
      %424 = vmatpush.msra.mxu0 %v379
      %425 = vmatpush.msra.mxu0 %v378
      %426 = vmatpush.msra.mxu0 %v377
      %427 = vmatpush.msra.mxu0 %v376
      %428 = vmatmul.f32.gmra.mxu0 %v374
      %v429 = vpop.f32.mrf.mxu0
      %v430 = vadd.f32 %v410, %v429
      %431 = vdwg.mxu0
      %432 = vmatpush.msra.mxu0 %v407
      %433 = vmatpush.msra.mxu0 %v406
      %434 = vmatpush.msra.mxu0 %v405
      %435 = vmatpush.msra.mxu0 %v404
      %436 = vmatpush.msra.mxu0 %v403
      %437 = vmatpush.msra.mxu0 %v402
      %438 = vmatpush.msra.mxu0 %v401
      %439 = vmatpush.msra.mxu0 %v400
      %440 = vmatpush.msra.mxu0 %v399
      %441 = vmatpush.msra.mxu0 %v398
      %442 = vmatpush.msra.mxu0 %v397
      %443 = vmatpush.msra.mxu0 %v396
      %444 = vmatpush.msra.mxu0 %v395
      %445 = vmatpush.msra.mxu0 %v394
      %446 = vmatpush.msra.mxu0 %v393
      %447 = vmatpush.msra.mxu0 %v392
      %448 = vmatmul.f32.gmra.mxu0 %v375
      %v449 = vpop.f32.mrf.mxu0
      %v450 = vadd.f32 %v430, %v449
      %451 = vdwg.mxu0
      %v452 = vmax.f32 %v450, 0.0
      %v453 = vadd.f32 %v452, %v256
      %v454 = vmax.f32 %v453, 0.0
      %455 = vst [vmem:[%s255] sm:$0xff] %v454
      %p456 = scmp.lt.s32.totalorder %s20, 1
      %s457 = scalar_select %p456, %s20, 1
      %p458 = scmp.lt.s32.totalorder %s21, 3
      %s459 = scalar_select %p458, %s21, 3
      %s460 = smul.addr %s457, 4
      %s461 = sadd.s32 %s459, %s460
      %s462 = smul.addr %s461, 8
      %s463 = scalar_lea.vmem %s5, %s462
      // Predicated region
      $region53: #{temporal_conv_net.6} parent=39 // pred_check
        %p464 = pneg %p160
      $region54: #{temporal_conv_net.6} parent=39 // pred_check_branch
        %466 = sbr.rel (%p464) target = $region56
      $region55: #{temporal_conv_net.6} parent=39 // pred_region
        _
      $region56: #{temporal_conv_net.6} parent=39 // pred_fallthru
        _
    $region40: #{temporal_conv_net.6} parent=5 // pred_fallthru
      _
    %p467 = scmp.le.s32.totalorder 2, %s11
    // Predicated region
    $region57: #{temporal_conv_net.6} parent=5 // pred_check
      %p468 = pneg %p467
    $region58: #{temporal_conv_net.6} parent=5 // pred_check_branch
      %470 = sbr.rel (%p468) target = $region60
    $region59: #{temporal_conv_net.6} parent=5 // pred_region
      %s471 = ssub.s32 %s11, 2
      // Predicated region
      $region61: #{temporal_conv_net.6} parent=59 // pred_check
        %p472 = pneg %p166
      $region62: #{temporal_conv_net.6} parent=59 // pred_check_branch
        %474 = sbr.rel (%p472) target = $region64
      $region63: #{temporal_conv_net.6} parent=59 // pred_region
        %p475 = scmp.lt.s32.totalorder %s22, 1
        %s476 = scalar_select %p475, %s22, 1
        %p477 = scmp.lt.s32.totalorder %s23, 3
        %s478 = scalar_select %p477, %s23, 3
        %s479 = smul.addr %s476, 4
        %s480 = sadd.s32 %s478, %s479
        %s481 = smul.addr %s480, 8
        %s482 = scalar_lea.vmem %s5, %s481
      $region64: #{temporal_conv_net.6} parent=59 // pred_fallthru
        _
    $region60: #{temporal_conv_net.6} parent=5 // pred_fallthru
      _
  $region6: #{temporal_conv_net.6} parent=0 // loop_footer
    %s15 = sadd.s32 1, %s11
  $region7: #{temporal_conv_net.6} parent=0 // loop_footer_branch
    %10 = sbr.rel target = $region3
  $region8: #{temporal_conv_net.6} parent=0 // loop_exit
    _

// kernel: temporal_conv_net.5
$region0: #{temporal_conv_net.5}
  #allocation0 [shape = 'u32[]', space=smem, size = 0x4, offset = 0x4, fixed_abs, tag = 'smem constant byte address 0x4 - core index']
  #allocation1 [shape = 'u32[72,128]{1,0:T(1,128)}', space=vmem, size = 0x9000, scoped, tag = 'internal scratch']
  #allocation2 [shape = 'f32[1,10,128]{2,1,0:T(8,128)}', space=vmem, size = 0x2000, scoped, tag = 'scratch operand']
  #allocation3 [shape = 'f32[1,9,128]{2,1,0:T(8,128)}', space=vmem, size = 0x2000, scoped, tag = 'scratch operand']
  #allocation4 [shape = 'f32[1,2,128]{2,1,0:T(2,128)}', space=vmem, size = 0x400, scoped, tag = 'scratch operand']
  %s0 = inlined_call_operand.vmem [shape: f32[2,32,128], index: 0, kind: input, shape index: {}]
  %s1 = inlined_call_operand.vmem [shape: f32[256,128], index: 1, kind: input, shape index: {}]
  %s2 = inlined_call_operand.vmem [shape: f32[1,128], index: 2, kind: input, shape index: {}]
  %s3 = inlined_call_operand.vmem [shape: f32[256,128], index: 3, kind: input, shape index: {}]
  %s4 = inlined_call_operand.vmem [shape: f32[1,128], index: 4, kind: input, shape index: {}]
  %s5 = inlined_call_operand.vmem [shape: f32[128,128], index: 5, kind: input, shape index: {}]
  %s6 = inlined_call_operand.vmem [shape: f32[1,128], index: 6, kind: input, shape index: {}]
  %s7 = inlined_call_operand.vmem [shape: f32[2,32,128], index: 7, kind: output, shape index: {}]
  %s8 = sld [smem:[#allocation0]]
  $region73: #{temporal_conv_net.5} parent=0
    _
  %s10 = ssub.s32 1, %s8
  %s11 = scalar_select 0, %s10, %s8
  loop: start=0, step=1, limit=10
  $region2: #{temporal_conv_net.5} parent=0 // loop_pre_header
    _
  $region3: #{temporal_conv_net.5} parent=0 // loop_header
    %s13 = sphi 0, %s17
    %p14 = scmp.ge.s32.totalorder %s13, 10
    %s20 = sphi 0, %s32
    %s21 = sphi 0, %s28
    %s22 = sphi 0, %s20
    %s23 = sphi 0, %s21
    %s24 = sphi 0, %s22
    %s25 = sphi 0, %s23
    %s37 = sphi 0, %s39
    %s40 = sphi 0, %s37
    %s41 = sphi 0, %s40
    %s57 = sphi 0, %s41
    %s61 = sphi 0, %s61
    %s63 = sphi 0, %s61
    %s64 = sphi 0, %s63
    %s78 = sphi 0, %s64
    %s82 = sphi 0, %s82
    %s84 = sphi 0, %s82
    %s85 = sphi 0, %s84
    %s99 = sphi 0, %s85
    %s103 = sphi 0, %s103
    %s105 = sphi 0, %s103
    %s106 = sphi 0, %s105
    %s120 = sphi 0, %s106
    %s124 = sphi 0, %s124
    %s126 = sphi 0, %s124
    %s127 = sphi 0, %s126
    %s141 = sphi 0, %s127
    %s145 = sphi 0, %s145
    %s147 = sphi 0, %s145
    %s148 = sphi 0, %s147
    %s162 = sphi 0, %s148
    %s166 = sphi 0, %s166
    %s168 = sphi 0, %s166
    %s169 = sphi 0, %s168
    %s183 = sphi 0, %s169
    %s191 = sphi 0, %s193
    %s194 = sphi 0, %s191
    %s195 = sphi 0, %s194
    %s211 = sphi 0, %s195
  $region4: #{temporal_conv_net.5} parent=0 // loop_header_branch
    %16 = sbr.rel (%p14) target = $region8
  $region5: #{temporal_conv_net.5} parent=0 // loop_body
    %s18 = ssub.s32 %s13, 1
    %s19 = ssub.s32 %s13, 2
    %s26 = sadd.s32 1, %s21
    %p27 = scmp.ge.s32.totalorder %s26, 4
    %s28 = scalar_select %p27, 0, %s26
    %s29 = sadd.s32 1, %s20
    %s30 = scalar_select %p27, %s29, %s20
    %p31 = scmp.ge.s32.totalorder %s30, 2
    %s32 = scalar_select %p31, 0, %s30
    %s33 = ssub.s32 %s20, %s32
    %s34 = ssub.s32 %s21, %s28
    %s35 = sor.u32 %s33, %s34
    %p36 = scmp.eq.s32.totalorder %s35, 0
    %s38 = sadd.s32 %s37, 1
    %s39 = scalar_select %p36, %s37, %s38
    %p42 = pneg %p36
    %p43 = scmp.eq.s32.totalorder %s13, 7
    %p44 = por %p42, %p43
    %p45 = scmp.ne.s32.totalorder %s37, %s40
    %p46 = scmp.eq.s32.totalorder %s13, 0
    %p47 = por %p45, %p46
    %p48 = scmp.ne.s32.totalorder %s37, %s40
    %p49 = scmp.eq.s32.totalorder %s18, 7
    %p50 = por %p48, %p49
    %p51 = scmp.ne.s32.totalorder %s40, %s41
    %p52 = scmp.eq.s32.totalorder %s18, 0
    %p53 = por %p51, %p52
    %p54 = scmp.ne.s32.totalorder %s40, %s41
    %p55 = scmp.eq.s32.totalorder %s19, 7
    %p56 = por %p54, %p55
    %p58 = scmp.ne.s32.totalorder %s41, %s57
    %p59 = scmp.eq.s32.totalorder %s19, 0
    %p60 = por %p58, %p59
    %s62 = sadd.s32 %s61, 1
    %p65 = scmp.eq.s32.totalorder %s13, 7
    %p66 = scmp.ne.s32.totalorder %s61, %s63
    %p67 = scmp.eq.s32.totalorder %s13, 0
    %p68 = por %p66, %p67
    %p69 = scmp.ne.s32.totalorder %s61, %s63
    %p70 = scmp.eq.s32.totalorder %s18, 7
    %p71 = por %p69, %p70
    %p72 = scmp.ne.s32.totalorder %s63, %s64
    %p73 = scmp.eq.s32.totalorder %s18, 0
    %p74 = por %p72, %p73
    %p75 = scmp.ne.s32.totalorder %s63, %s64
    %p76 = scmp.eq.s32.totalorder %s19, 7
    %p77 = por %p75, %p76
    %p79 = scmp.ne.s32.totalorder %s64, %s78
    %p80 = scmp.eq.s32.totalorder %s19, 0
    %p81 = por %p79, %p80
    %s83 = sadd.s32 %s82, 1
    %p86 = scmp.eq.s32.totalorder %s13, 7
    %p87 = scmp.ne.s32.totalorder %s82, %s84
    %p88 = scmp.eq.s32.totalorder %s13, 0
    %p89 = por %p87, %p88
    %p90 = scmp.ne.s32.totalorder %s82, %s84
    %p91 = scmp.eq.s32.totalorder %s18, 7
    %p92 = por %p90, %p91
    %p93 = scmp.ne.s32.totalorder %s84, %s85
    %p94 = scmp.eq.s32.totalorder %s18, 0
    %p95 = por %p93, %p94
    %p96 = scmp.ne.s32.totalorder %s84, %s85
    %p97 = scmp.eq.s32.totalorder %s19, 7
    %p98 = por %p96, %p97
    %p100 = scmp.ne.s32.totalorder %s85, %s99
    %p101 = scmp.eq.s32.totalorder %s19, 0
    %p102 = por %p100, %p101
    %s104 = sadd.s32 %s103, 1
    %p107 = scmp.eq.s32.totalorder %s13, 7
    %p108 = scmp.ne.s32.totalorder %s103, %s105
    %p109 = scmp.eq.s32.totalorder %s13, 0
    %p110 = por %p108, %p109
    %p111 = scmp.ne.s32.totalorder %s103, %s105
    %p112 = scmp.eq.s32.totalorder %s18, 7
    %p113 = por %p111, %p112
    %p114 = scmp.ne.s32.totalorder %s105, %s106
    %p115 = scmp.eq.s32.totalorder %s18, 0
    %p116 = por %p114, %p115
    %p117 = scmp.ne.s32.totalorder %s105, %s106
    %p118 = scmp.eq.s32.totalorder %s19, 7
    %p119 = por %p117, %p118
    %p121 = scmp.ne.s32.totalorder %s106, %s120
    %p122 = scmp.eq.s32.totalorder %s19, 0
    %p123 = por %p121, %p122
    %s125 = sadd.s32 %s124, 1
    %p128 = scmp.eq.s32.totalorder %s13, 7
    %p129 = scmp.ne.s32.totalorder %s124, %s126
    %p130 = scmp.eq.s32.totalorder %s13, 0
    %p131 = por %p129, %p130
    %p132 = scmp.ne.s32.totalorder %s124, %s126
    %p133 = scmp.eq.s32.totalorder %s18, 7
    %p134 = por %p132, %p133
    %p135 = scmp.ne.s32.totalorder %s126, %s127
    %p136 = scmp.eq.s32.totalorder %s18, 0
    %p137 = por %p135, %p136
    %p138 = scmp.ne.s32.totalorder %s126, %s127
    %p139 = scmp.eq.s32.totalorder %s19, 7
    %p140 = por %p138, %p139
    %p142 = scmp.ne.s32.totalorder %s127, %s141
    %p143 = scmp.eq.s32.totalorder %s19, 0
    %p144 = por %p142, %p143
    %s146 = sadd.s32 %s145, 1
    %p149 = scmp.eq.s32.totalorder %s13, 7
    %p150 = scmp.ne.s32.totalorder %s145, %s147
    %p151 = scmp.eq.s32.totalorder %s13, 0
    %p152 = por %p150, %p151
    %p153 = scmp.ne.s32.totalorder %s145, %s147
    %p154 = scmp.eq.s32.totalorder %s18, 7
    %p155 = por %p153, %p154
    %p156 = scmp.ne.s32.totalorder %s147, %s148
    %p157 = scmp.eq.s32.totalorder %s18, 0
    %p158 = por %p156, %p157
    %p159 = scmp.ne.s32.totalorder %s147, %s148
    %p160 = scmp.eq.s32.totalorder %s19, 7
    %p161 = por %p159, %p160
    %p163 = scmp.ne.s32.totalorder %s148, %s162
    %p164 = scmp.eq.s32.totalorder %s19, 0
    %p165 = por %p163, %p164
    %s167 = sadd.s32 %s166, 1
    %p170 = scmp.eq.s32.totalorder %s13, 7
    %p171 = scmp.ne.s32.totalorder %s166, %s168
    %p172 = scmp.eq.s32.totalorder %s13, 0
    %p173 = por %p171, %p172
    %p174 = scmp.ne.s32.totalorder %s166, %s168
    %p175 = scmp.eq.s32.totalorder %s18, 7
    %p176 = por %p174, %p175
    %p177 = scmp.ne.s32.totalorder %s168, %s169
    %p178 = scmp.eq.s32.totalorder %s18, 0
    %p179 = por %p177, %p178
    %p180 = scmp.ne.s32.totalorder %s168, %s169
    %p181 = scmp.eq.s32.totalorder %s19, 7
    %p182 = por %p180, %p181
    %p184 = scmp.ne.s32.totalorder %s169, %s183
    %p185 = scmp.eq.s32.totalorder %s19, 0
    %p186 = por %p184, %p185
    %s187 = ssub.s32 %s20, %s32
    %s188 = ssub.s32 %s21, %s28
    %s189 = sor.u32 %s187, %s188
    %p190 = scmp.eq.s32.totalorder %s189, 0
    %s192 = sadd.s32 %s191, 1
    %s193 = scalar_select %p190, %s191, %s192
    %p196 = pneg %p190
    %p197 = scmp.eq.s32.totalorder %s13, 7
    %p198 = por %p196, %p197
    %p199 = scmp.ne.s32.totalorder %s191, %s194
    %p200 = scmp.eq.s32.totalorder %s13, 0
    %p201 = por %p199, %p200
    %p202 = scmp.ne.s32.totalorder %s191, %s194
    %p203 = scmp.eq.s32.totalorder %s18, 7
    %p204 = por %p202, %p203
    %p205 = scmp.ne.s32.totalorder %s194, %s195
    %p206 = scmp.eq.s32.totalorder %s18, 0
    %p207 = por %p205, %p206
    %p208 = scmp.ne.s32.totalorder %s194, %s195
    %p209 = scmp.eq.s32.totalorder %s19, 7
    %p210 = por %p208, %p209
    %p212 = scmp.ne.s32.totalorder %s195, %s211
    %p213 = scmp.eq.s32.totalorder %s19, 0
    %p214 = por %p212, %p213
    %p215 = scmp.le.s32.totalorder 1, %s13
    %p216 = scmp.lt.s32.totalorder %s13, 9
    %p217 = pnand %p215, %p216
    %p218 = pneg %p217
    // Predicated region
    $region9: #{temporal_conv_net.5} parent=5 // pred_check
      _
    $region10: #{temporal_conv_net.5} parent=5 // pred_check_branch
      %220 = sbr.rel (%p217) target = $region12
    $region11: #{temporal_conv_net.5} parent=5 // pred_region
      %s221 = ssub.s32 %s13, 1
      // Predicated region
      $region13: #{temporal_conv_net.5} parent=11 // pred_check
        %p222 = pneg %p74
      $region14: #{temporal_conv_net.5} parent=11 // pred_check_branch
        %224 = sbr.rel (%p222) target = $region16
      $region15: #{temporal_conv_net.5} parent=11 // pred_region
        _
      $region16: #{temporal_conv_net.5} parent=11 // pred_fallthru
        _
      // Predicated region
      $region17: #{temporal_conv_net.5} parent=11 // pred_check
        %p225 = pneg %p95
      $region18: #{temporal_conv_net.5} parent=11 // pred_check_branch
        %227 = sbr.rel (%p225) target = $region20
      $region19: #{temporal_conv_net.5} parent=11 // pred_region
        _
      $region20: #{temporal_conv_net.5} parent=11 // pred_fallthru
        _
      // Predicated region
      $region21: #{temporal_conv_net.5} parent=11 // pred_check
        %p228 = pneg %p116
      $region22: #{temporal_conv_net.5} parent=11 // pred_check_branch
        %230 = sbr.rel (%p228) target = $region24
      $region23: #{temporal_conv_net.5} parent=11 // pred_region
        _
      $region24: #{temporal_conv_net.5} parent=11 // pred_fallthru
        _
      // Predicated region
      $region25: #{temporal_conv_net.5} parent=11 // pred_check
        %p231 = pneg %p137
      $region26: #{temporal_conv_net.5} parent=11 // pred_check_branch
        %233 = sbr.rel (%p231) target = $region28
      $region27: #{temporal_conv_net.5} parent=11 // pred_region
        _
      $region28: #{temporal_conv_net.5} parent=11 // pred_fallthru
        _
      // Predicated region
      $region29: #{temporal_conv_net.5} parent=11 // pred_check
        %p234 = pneg %p158
      $region30: #{temporal_conv_net.5} parent=11 // pred_check_branch
        %236 = sbr.rel (%p234) target = $region32
      $region31: #{temporal_conv_net.5} parent=11 // pred_region
        _
      $region32: #{temporal_conv_net.5} parent=11 // pred_fallthru
        _
      // Predicated region
      $region33: #{temporal_conv_net.5} parent=11 // pred_check
        %p237 = pneg %p179
      $region34: #{temporal_conv_net.5} parent=11 // pred_check_branch
        %239 = sbr.rel (%p237) target = $region36
      $region35: #{temporal_conv_net.5} parent=11 // pred_region
        _
      $region36: #{temporal_conv_net.5} parent=11 // pred_fallthru
        _
    $region12: #{temporal_conv_net.5} parent=5 // pred_fallthru
      _
    %p240 = scmp.lt.s32.totalorder %s13, 8
    // Predicated region
    $region37: #{temporal_conv_net.5} parent=5 // pred_check
      %p241 = pneg %p240
    $region38: #{temporal_conv_net.5} parent=5 // pred_check_branch
      %243 = sbr.rel (%p241) target = $region40
    $region39: #{temporal_conv_net.5} parent=5 // pred_region
      // Predicated region
      $region41: #{temporal_conv_net.5} parent=39 // pred_check
        %p244 = pneg %p47
      $region42: #{temporal_conv_net.5} parent=39 // pred_check_branch
        %246 = sbr.rel (%p244) target = $region44
      $region43: #{temporal_conv_net.5} parent=39 // pred_region
        %p247 = scmp.lt.s32.totalorder %s20, 1
        %s248 = scalar_select %p247, %s20, 1
        %p249 = scmp.lt.s32.totalorder %s21, 3
        %s250 = scalar_select %p249, %s21, 3
        %s251 = smul.addr %s248, 4
        %s252 = sadd.s32 %s250, %s251
        %s253 = smul.addr %s252, 8
        %s254 = scalar_lea.vmem %s0, %s253
      $region44: #{temporal_conv_net.5} parent=39 // pred_fallthru
        _
    $region40: #{temporal_conv_net.5} parent=5 // pred_fallthru
      _
    %p255 = scmp.le.s32.totalorder 1, %s13
    %p256 = scmp.lt.s32.totalorder %s13, 9
    %p257 = pnand %p255, %p256
    %p258 = pneg %p257
    // Predicated region
    $region45: #{temporal_conv_net.5} parent=5 // pred_check
      _
    $region46: #{temporal_conv_net.5} parent=5 // pred_check_branch
      %260 = sbr.rel (%p257) target = $region48
    $region47: #{temporal_conv_net.5} parent=5 // pred_region
      %s261 = ssub.s32 %s13, 1
      %p262 = scmp.lt.s32.totalorder %s22, 1
      %s263 = scalar_select %p262, %s22, 1
      %p264 = scmp.lt.s32.totalorder %s23, 3
      %s265 = scalar_select %p264, %s23, 3
      %s266 = smul.addr %s263, 4
      %s267 = sadd.s32 %s265, %s266
      %s268 = smul.addr %s267, 8
      %s269 = scalar_lea.vmem %s0, %s268
      %p270 = pneg %p53
      %p271 = pneg %p50
      %p272 = pneg %p74
      %p273 = pneg %p71
      %p274 = pneg %p95
      %p275 = pneg %p92
      %p276 = pneg %p116
      %p277 = pneg %p113
      %p278 = pneg %p137
      %p279 = pneg %p134
      %p280 = pneg %p158
      %p281 = pneg %p155
      %p282 = pneg %p179
      %p283 = pneg %p176
      %p284 = pneg %p207
      %p285 = pneg %p204
      %p286 = scmp.lt.s32.totalorder %s22, 1
      %s287 = scalar_select %p286, %s22, 1
      %p288 = scmp.lt.s32.totalorder %s23, 3
      %s289 = scalar_select %p288, %s23, 3
      %s290 = smul.addr %s287, 4
      %s291 = sadd.s32 %s289, %s290
      %s292 = smul.addr %s291, 8
      %s293 = scalar_lea.vmem %s7, %s292
      %p294 = scmp.lt.s32.totalorder %s22, 1
      %s295 = scalar_select %p294, %s22, 1
      %p296 = scmp.lt.s32.totalorder %s23, 3
      %s297 = scalar_select %p296, %s23, 3
      %s298 = smul.addr %s295, 4
      %s299 = sadd.s32 %s297, %s298
      %s300 = smul.addr %s299, 8
      %s301 = scalar_lea.vmem %s0, %s300
      %p302 = scmp.lt.s32.totalorder %s22, 1
      %s303 = scalar_select %p302, %s22, 1
      %p304 = scmp.lt.s32.totalorder %s23, 3
      %s305 = scalar_select %p304, %s23, 3
      %s306 = smul.addr %s303, 4
      %s307 = sadd.s32 %s305, %s306
      %s308 = smul.addr %s307, 8
      %s309 = scalar_lea.vmem %s7, %s308
      %v310 = vld [vmem:[%s301] sm:$0xff]
      %p311 = scmp.eq.s32.totalorder %s23, 0
      // Predicated region
      $region49: #{temporal_conv_net.5} parent=47 // pred_check
        %p312 = pneg %p311
      $region50: #{temporal_conv_net.5} parent=47 // pred_check_branch
        %314 = sbr.rel (%p312) target = $region52
      $region51: #{temporal_conv_net.5} parent=47 // pred_region
        %315 = vst [vmem:[#allocation2] sm:$0x3] 0.0
      $region52: #{temporal_conv_net.5} parent=47 // pred_fallthru
        _
      %p316 = scmp.gt.s32.totalorder %s23, 0
      // Predicated region
      $region53: #{temporal_conv_net.5} parent=47 // pred_check
        %p317 = pneg %p316
      $region54: #{temporal_conv_net.5} parent=47 // pred_check_branch
        %319 = sbr.rel (%p317) target = $region56
      $region55: #{temporal_conv_net.5} parent=47 // pred_region
        %v320 = vld [vmem:[#allocation4] sm:$0x3]
        %321 = vst [vmem:[#allocation2] sm:$0x3] %v320
      $region56: #{temporal_conv_net.5} parent=47 // pred_fallthru
        _
      %322 = vst [vmem:[#allocation2 + $0x2] sm:$0xff] %v310
      %v323 = vld [vmem:[#allocation2 + $0x8] sm:$0x3]
      %324 = vst [vmem:[#allocation4] sm:$0x3] %v323
      %v325 = vld [vmem:[#allocation2 + $0x1] sm:$0xff]
      %v326 = vld [vmem:[#allocation2 + $0x9] sm:$0x1]
      %v327 = vld [vmem:[#allocation2] sm:$0xff]
      %v328 = vld [vmem:[#allocation2 + $0x8] sm:$0x1]
      %v329 = vld [vmem:[%s1] sm:$0xff]
      %v330 = vld [vmem:[%s1 + $0x8] sm:$0xff]
      %v331 = vld [vmem:[%s1 + $0x10] sm:$0xff]
      %v332 = vld [vmem:[%s1 + $0x18] sm:$0xff]
      %v333 = vld [vmem:[%s1 + $0x20] sm:$0xff]
      %v334 = vld [vmem:[%s1 + $0x28] sm:$0xff]
      %v335 = vld [vmem:[%s1 + $0x30] sm:$0xff]
      %v336 = vld [vmem:[%s1 + $0x38] sm:$0xff]
      %v337 = vld [vmem:[%s1 + $0x40] sm:$0xff]
      %v338 = vld [vmem:[%s1 + $0x48] sm:$0xff]
      %v339 = vld [vmem:[%s1 + $0x50] sm:$0xff]
      %v340 = vld [vmem:[%s1 + $0x58] sm:$0xff]
      %v341 = vld [vmem:[%s1 + $0x60] sm:$0xff]
      %v342 = vld [vmem:[%s1 + $0x68] sm:$0xff]
      %v343 = vld [vmem:[%s1 + $0x70] sm:$0xff]
      %v344 = vld [vmem:[%s1 + $0x78] sm:$0xff]
      %v345 = vld [vmem:[%s1 + $0x80] sm:$0xff]
      %v346 = vld [vmem:[%s1 + $0x88] sm:$0xff]
      %v347 = vld [vmem:[%s1 + $0x90] sm:$0xff]
      %v348 = vld [vmem:[%s1 + $0x98] sm:$0xff]
      %v349 = vld [vmem:[%s1 + $0xa0] sm:$0xff]
      %v350 = vld [vmem:[%s1 + $0xa8] sm:$0xff]
      %v351 = vld [vmem:[%s1 + $0xb0] sm:$0xff]
      %v352 = vld [vmem:[%s1 + $0xb8] sm:$0xff]
      %v353 = vld [vmem:[%s1 + $0xc0] sm:$0xff]
      %v354 = vld [vmem:[%s1 + $0xc8] sm:$0xff]
      %v355 = vld [vmem:[%s1 + $0xd0] sm:$0xff]
      %v356 = vld [vmem:[%s1 + $0xd8] sm:$0xff]
      %v357 = vld [vmem:[%s1 + $0xe0] sm:$0xff]
      %v358 = vld [vmem:[%s1 + $0xe8] sm:$0xff]
      %v359 = vld [vmem:[%s1 + $0xf0] sm:$0xff]
      %v360 = vld [vmem:[%s1 + $0xf8] sm:$0xff]
      %v361 = vld [vmem:[%s2] sm:$0x1]
      %v363 = vperm.slane %v361, 0
      %365 = vmatpush.msra.mxu0 %v344
      %366 = vmatpush.msra.mxu0 %v343
      %367 = vmatpush.msra.mxu0 %v342
      %368 = vmatpush.msra.mxu0 %v341
      %369 = vmatpush.msra.mxu0 %v340
      %370 = vmatpush.msra.mxu0 %v339
      %371 = vmatpush.msra.mxu0 %v338
      %372 = vmatpush.msra.mxu0 %v337
      %373 = vmatpush.msra.mxu0 %v336
      %374 = vmatpush.msra.mxu0 %v335
      %375 = vmatpush.msra.mxu0 %v334
      %376 = vmatpush.msra.mxu0 %v333
      %377 = vmatpush.msra.mxu0 %v332
      %378 = vmatpush.msra.mxu0 %v331
      %379 = vmatpush.msra.mxu0 %v330
      %380 = vmatpush.msra.mxu0 %v329
      %381 = vmatmul.f32.gmra.mxu0 %v325
      %v382 = vpop.f32.mrf.mxu0
      %v383 = vadd.f32 %v363, %v382
      %384 = vmatmul.f32.gmra.mxu0 %v326
      %v385 = vpop.f32.mrf.mxu0
      %v386 = vadd.f32 %v363, %v385
      %387 = vdwg.mxu0
      %388 = vmatpush.msra.mxu0 %v360
      %389 = vmatpush.msra.mxu0 %v359
      %390 = vmatpush.msra.mxu0 %v358
      %391 = vmatpush.msra.mxu0 %v357
      %392 = vmatpush.msra.mxu0 %v356
      %393 = vmatpush.msra.mxu0 %v355
      %394 = vmatpush.msra.mxu0 %v354
      %395 = vmatpush.msra.mxu0 %v353
      %396 = vmatpush.msra.mxu0 %v352
      %397 = vmatpush.msra.mxu0 %v351
      %398 = vmatpush.msra.mxu0 %v350
      %399 = vmatpush.msra.mxu0 %v349
      %400 = vmatpush.msra.mxu0 %v348
      %401 = vmatpush.msra.mxu0 %v347
      %402 = vmatpush.msra.mxu0 %v346
      %403 = vmatpush.msra.mxu0 %v345
      %404 = vmatmul.f32.gmra.mxu0 %v327
      %v405 = vpop.f32.mrf.mxu0
      %v406 = vadd.f32 %v383, %v405
      %407 = vmatmul.f32.gmra.mxu0 %v328
      %v408 = vpop.f32.mrf.mxu0
      %v409 = vadd.f32 %v386, %v408
      %410 = vdwg.mxu0
      %v411 = vmax.f32 %v406, 0.0
      %v412 = vmax.f32 %v409, 0.0
      %413 = vst [vmem:[#allocation3] sm:$0xff] %v411
      %414 = vst [vmem:[#allocation3 + $0x8] sm:$0x1] %v412
      %s415 = smul.u32 %s23, 8
      %p416 = scmp.lt.s32.totalorder %s415, 1
      // Predicated region
      $region57: #{temporal_conv_net.5} parent=47 // pred_check
        %p417 = pneg %p416
      $region58: #{temporal_conv_net.5} parent=47 // pred_check_branch
        %419 = sbr.rel (%p417) target = $region60
      $region59: #{temporal_conv_net.5} parent=47 // pred_region
        %v420 = vld [vmem:[#allocation3] sm:$0x1]
        %v421 = vlaneseq
        %v422 = vshrl.u32 %v421, 7
        %s423 = ssub.s32 1, %s415
        %v424 = vstv %s423
        %vm425 = vcmp.lt.s32.totalorder %v422, %v424
        %v426 = vsel %vm425, 0.0, %v420
        %427 = vst [vmem:[#allocation3] sm:$0x1] %v426
      $region60: #{temporal_conv_net.5} parent=47 // pred_fallthru
        _
      %v428 = vld [vmem:[#allocation3 + $0x1] sm:$0xff]
      %v429 = vld [vmem:[#allocation3] sm:$0xff]
      %v430 = vld [vmem:[%s3] sm:$0xff]
      %v431 = vld [vmem:[%s3 + $0x8] sm:$0xff]
      %v432 = vld [vmem:[%s3 + $0x10] sm:$0xff]
      %v433 = vld [vmem:[%s3 + $0x18] sm:$0xff]
      %v434 = vld [vmem:[%s3 + $0x20] sm:$0xff]
      %v435 = vld [vmem:[%s3 + $0x28] sm:$0xff]
      %v436 = vld [vmem:[%s3 + $0x30] sm:$0xff]
      %v437 = vld [vmem:[%s3 + $0x38] sm:$0xff]
      %v438 = vld [vmem:[%s3 + $0x40] sm:$0xff]
      %v439 = vld [vmem:[%s3 + $0x48] sm:$0xff]
      %v440 = vld [vmem:[%s3 + $0x50] sm:$0xff]
      %v441 = vld [vmem:[%s3 + $0x58] sm:$0xff]
      %v442 = vld [vmem:[%s3 + $0x60] sm:$0xff]
      %v443 = vld [vmem:[%s3 + $0x68] sm:$0xff]
      %v444 = vld [vmem:[%s3 + $0x70] sm:$0xff]
      %v445 = vld [vmem:[%s3 + $0x78] sm:$0xff]
      %v446 = vld [vmem:[%s3 + $0x80] sm:$0xff]
      %v447 = vld [vmem:[%s3 + $0x88] sm:$0xff]
      %v448 = vld [vmem:[%s3 + $0x90] sm:$0xff]
      %v449 = vld [vmem:[%s3 + $0x98] sm:$0xff]
      %v450 = vld [vmem:[%s3 + $0xa0] sm:$0xff]
      %v451 = vld [vmem:[%s3 + $0xa8] sm:$0xff]
      %v452 = vld [vmem:[%s3 + $0xb0] sm:$0xff]
      %v453 = vld [vmem:[%s3 + $0xb8] sm:$0xff]
      %v454 = vld [vmem:[%s3 + $0xc0] sm:$0xff]
      %v455 = vld [vmem:[%s3 + $0xc8] sm:$0xff]
      %v456 = vld [vmem:[%s3 + $0xd0] sm:$0xff]
      %v457 = vld [vmem:[%s3 + $0xd8] sm:$0xff]
      %v458 = vld [vmem:[%s3 + $0xe0] sm:$0xff]
      %v459 = vld [vmem:[%s3 + $0xe8] sm:$0xff]
      %v460 = vld [vmem:[%s3 + $0xf0] sm:$0xff]
      %v461 = vld [vmem:[%s3 + $0xf8] sm:$0xff]
      %v462 = vld [vmem:[%s4] sm:$0x1]
      %v464 = vperm.slane %v462, 0
      %466 = vmatpush.msra.mxu0 %v445
      %467 = vmatpush.msra.mxu0 %v444
      %468 = vmatpush.msra.mxu0 %v443
      %469 = vmatpush.msra.mxu0 %v442
      %470 = vmatpush.msra.mxu0 %v441
      %471 = vmatpush.msra.mxu0 %v440
      %472 = vmatpush.msra.mxu0 %v439
      %473 = vmatpush.msra.mxu0 %v438
      %474 = vmatpush.msra.mxu0 %v437
      %475 = vmatpush.msra.mxu0 %v436
      %476 = vmatpush.msra.mxu0 %v435
      %477 = vmatpush.msra.mxu0 %v434
      %478 = vmatpush.msra.mxu0 %v433
      %479 = vmatpush.msra.mxu0 %v432
      %480 = vmatpush.msra.mxu0 %v431
      %481 = vmatpush.msra.mxu0 %v430
      %482 = vmatmul.f32.gmra.mxu0 %v428
      %v483 = vpop.f32.mrf.mxu0
      %v484 = vadd.f32 %v464, %v483
      %485 = vdwg.mxu0
      %486 = vmatpush.msra.mxu0 %v461
      %487 = vmatpush.msra.mxu0 %v460
      %488 = vmatpush.msra.mxu0 %v459
      %489 = vmatpush.msra.mxu0 %v458
      %490 = vmatpush.msra.mxu0 %v457
      %491 = vmatpush.msra.mxu0 %v456
      %492 = vmatpush.msra.mxu0 %v455
      %493 = vmatpush.msra.mxu0 %v454
      %494 = vmatpush.msra.mxu0 %v453
      %495 = vmatpush.msra.mxu0 %v452
      %496 = vmatpush.msra.mxu0 %v451
      %497 = vmatpush.msra.mxu0 %v450
      %498 = vmatpush.msra.mxu0 %v449
      %499 = vmatpush.msra.mxu0 %v448
      %500 = vmatpush.msra.mxu0 %v447
      %501 = vmatpush.msra.mxu0 %v446
      %502 = vmatmul.f32.gmra.mxu0 %v429
      %v503 = vpop.f32.mrf.mxu0
      %v504 = vadd.f32 %v484, %v503
      %505 = vdwg.mxu0
      %v506 = vmax.f32 %v504, 0.0
      %v507 = vld [vmem:[%s5] sm:$0xff]
      %v508 = vld [vmem:[%s5 + $0x8] sm:$0xff]
      %v509 = vld [vmem:[%s5 + $0x10] sm:$0xff]
      %v510 = vld [vmem:[%s5 + $0x18] sm:$0xff]
      %v511 = vld [vmem:[%s5 + $0x20] sm:$0xff]
      %v512 = vld [vmem:[%s5 + $0x28] sm:$0xff]
      %v513 = vld [vmem:[%s5 + $0x30] sm:$0xff]
      %v514 = vld [vmem:[%s5 + $0x38] sm:$0xff]
      %v515 = vld [vmem:[%s5 + $0x40] sm:$0xff]
      %v516 = vld [vmem:[%s5 + $0x48] sm:$0xff]
      %v517 = vld [vmem:[%s5 + $0x50] sm:$0xff]
      %v518 = vld [vmem:[%s5 + $0x58] sm:$0xff]
      %v519 = vld [vmem:[%s5 + $0x60] sm:$0xff]
      %v520 = vld [vmem:[%s5 + $0x68] sm:$0xff]
      %v521 = vld [vmem:[%s5 + $0x70] sm:$0xff]
      %v522 = vld [vmem:[%s5 + $0x78] sm:$0xff]
      %v523 = vld [vmem:[%s6] sm:$0x1]
      %v525 = vperm.slane %v523, 0
      %527 = vmatpush.msra.mxu0 %v522
      %528 = vmatpush.msra.mxu0 %v521
      %529 = vmatpush.msra.mxu0 %v520
      %530 = vmatpush.msra.mxu0 %v519
      %531 = vmatpush.msra.mxu0 %v518
      %532 = vmatpush.msra.mxu0 %v517
      %533 = vmatpush.msra.mxu0 %v516
      %534 = vmatpush.msra.mxu0 %v515
      %535 = vmatpush.msra.mxu0 %v514
      %536 = vmatpush.msra.mxu0 %v513
      %537 = vmatpush.msra.mxu0 %v512
      %538 = vmatpush.msra.mxu0 %v511
      %539 = vmatpush.msra.mxu0 %v510
      %540 = vmatpush.msra.mxu0 %v509
      %541 = vmatpush.msra.mxu0 %v508
      %542 = vmatpush.msra.mxu0 %v507
      %543 = vmatmul.f32.gmra.mxu0 %v310
      %v544 = vpop.f32.mrf.mxu0
      %v545 = vadd.f32 %v525, %v544
      %546 = vdwg.mxu0
      %v547 = vadd.f32 %v506, %v545
      %v548 = vmax.f32 %v547, 0.0
      %549 = vst [vmem:[%s309] sm:$0xff] %v548
      %p550 = scmp.lt.s32.totalorder %s22, 1
      %s551 = scalar_select %p550, %s22, 1
      %p552 = scmp.lt.s32.totalorder %s23, 3
      %s553 = scalar_select %p552, %s23, 3
      %s554 = smul.addr %s551, 4
      %s555 = sadd.s32 %s553, %s554
      %s556 = smul.addr %s555, 8
      %s557 = scalar_lea.vmem %s7, %s556
      // Predicated region
      $region61: #{temporal_conv_net.5} parent=47 // pred_check
        %p558 = pneg %p204
      $region62: #{temporal_conv_net.5} parent=47 // pred_check_branch
        %560 = sbr.rel (%p558) target = $region64
      $region63: #{temporal_conv_net.5} parent=47 // pred_region
        _
      $region64: #{temporal_conv_net.5} parent=47 // pred_fallthru
        _
    $region48: #{temporal_conv_net.5} parent=5 // pred_fallthru
      _
    %p561 = scmp.le.s32.totalorder 2, %s13
    // Predicated region
    $region65: #{temporal_conv_net.5} parent=5 // pred_check
      %p562 = pneg %p561
    $region66: #{temporal_conv_net.5} parent=5 // pred_check_branch
      %564 = sbr.rel (%p562) target = $region68
    $region67: #{temporal_conv_net.5} parent=5 // pred_region
      %s565 = ssub.s32 %s13, 2
      // Predicated region
      $region69: #{temporal_conv_net.5} parent=67 // pred_check
        %p566 = pneg %p210
      $region70: #{temporal_conv_net.5} parent=67 // pred_check_branch
        %568 = sbr.rel (%p566) target = $region72
      $region71: #{temporal_conv_net.5} parent=67 // pred_region
        %p569 = scmp.lt.s32.totalorder %s24, 1
        %s570 = scalar_select %p569, %s24, 1
        %p571 = scmp.lt.s32.totalorder %s25, 3
        %s572 = scalar_select %p571, %s25, 3
        %s573 = smul.addr %s570, 4
        %s574 = sadd.s32 %s572, %s573
        %s575 = smul.addr %s574, 8
        %s576 = scalar_lea.vmem %s7, %s575
      $region72: #{temporal_conv_net.5} parent=67 // pred_fallthru
        _
    $region68: #{temporal_conv_net.5} parent=5 // pred_fallthru
      _
  $region6: #{temporal_conv_net.5} parent=0 // loop_footer
    %s17 = sadd.s32 1, %s13
  $region7: #{temporal_conv_net.5} parent=0 // loop_footer_branch
    %12 = sbr.rel target = $region3
  $region8: #{temporal_conv_net.5} parent=0 // loop_exit
    _

// kernel: temporal_conv_net.9
$region0: #{temporal_conv_net.9}
  #allocation0 [shape = 'u32[]', space=smem, size = 0x4, offset = 0x4, fixed_abs, tag = 'smem constant byte address 0x4 - core index']
  #allocation1 [shape = 'u32[72,128]{1,0:T(1,128)}', space=vmem, size = 0x9000, scoped, tag = 'internal scratch']
  #allocation2 [shape = 'f32[1,40,128]{2,1,0:T(8,128)}', space=vmem, size = 0x5000, scoped, tag = 'scratch operand']
  #allocation3 [shape = 'f32[1,24,128]{2,1,0:T(8,128)}', space=vmem, size = 0x3000, scoped, tag = 'scratch operand']
  #allocation4 [shape = 'f32[1,32,128]{2,1,0:T(8,128)}', space=vmem, size = 0x4000, scoped, tag = 'scratch operand']
  %s0 = inlined_call_operand.vmem [shape: f32[2,32,128], index: 0, kind: input, shape index: {}]
  %s1 = inlined_call_operand.vmem [shape: f32[256,128], index: 1, kind: input, shape index: {}]
  %s2 = inlined_call_operand.vmem [shape: f32[1,128], index: 2, kind: input, shape index: {}]
  %s3 = inlined_call_operand.vmem [shape: f32[256,128], index: 3, kind: input, shape index: {}]
  %s4 = inlined_call_operand.vmem [shape: f32[1,128], index: 4, kind: input, shape index: {}]
  %s5 = inlined_call_operand.vmem [shape: f32[2,32,128], index: 5, kind: output, shape index: {}]
  %s6 = sld [smem:[#allocation0]]
  $region65: #{temporal_conv_net.9} parent=0
    _
  %s8 = ssub.s32 1, %s6
  %s9 = scalar_select 0, %s8, %s6
  loop: start=0, step=1, limit=10
  $region2: #{temporal_conv_net.9} parent=0 // loop_pre_header
    _
  $region3: #{temporal_conv_net.9} parent=0 // loop_header
    %s11 = sphi 0, %s15
    %p12 = scmp.ge.s32.totalorder %s11, 10
    %s18 = sphi 0, %s30
    %s19 = sphi 0, %s26
    %s20 = sphi 0, %s18
    %s21 = sphi 0, %s19
    %s22 = sphi 0, %s20
    %s23 = sphi 0, %s21
    %s35 = sphi 0, %s37
    %s38 = sphi 0, %s35
    %s39 = sphi 0, %s38
    %s55 = sphi 0, %s39
    %s59 = sphi 0, %s59
    %s61 = sphi 0, %s59
    %s62 = sphi 0, %s61
    %s76 = sphi 0, %s62
    %s80 = sphi 0, %s80
    %s82 = sphi 0, %s80
    %s83 = sphi 0, %s82
    %s97 = sphi 0, %s83
    %s101 = sphi 0, %s101
    %s103 = sphi 0, %s101
    %s104 = sphi 0, %s103
    %s118 = sphi 0, %s104
    %s122 = sphi 0, %s122
    %s124 = sphi 0, %s122
    %s125 = sphi 0, %s124
    %s139 = sphi 0, %s125
    %s147 = sphi 0, %s149
    %s150 = sphi 0, %s147
    %s151 = sphi 0, %s150
    %s167 = sphi 0, %s151
  $region4: #{temporal_conv_net.9} parent=0 // loop_header_branch
    %14 = sbr.rel (%p12) target = $region8
  $region5: #{temporal_conv_net.9} parent=0 // loop_body
    %s16 = ssub.s32 %s11, 1
    %s17 = ssub.s32 %s11, 2
    %s24 = sadd.s32 1, %s19
    %p25 = scmp.ge.s32.totalorder %s24, 4
    %s26 = scalar_select %p25, 0, %s24
    %s27 = sadd.s32 1, %s18
    %s28 = scalar_select %p25, %s27, %s18
    %p29 = scmp.ge.s32.totalorder %s28, 2
    %s30 = scalar_select %p29, 0, %s28
    %s31 = ssub.s32 %s18, %s30
    %s32 = ssub.s32 %s19, %s26
    %s33 = sor.u32 %s31, %s32
    %p34 = scmp.eq.s32.totalorder %s33, 0
    %s36 = sadd.s32 %s35, 1
    %s37 = scalar_select %p34, %s35, %s36
    %p40 = pneg %p34
    %p41 = scmp.eq.s32.totalorder %s11, 7
    %p42 = por %p40, %p41
    %p43 = scmp.ne.s32.totalorder %s35, %s38
    %p44 = scmp.eq.s32.totalorder %s11, 0
    %p45 = por %p43, %p44
    %p46 = scmp.ne.s32.totalorder %s35, %s38
    %p47 = scmp.eq.s32.totalorder %s16, 7
    %p48 = por %p46, %p47
    %p49 = scmp.ne.s32.totalorder %s38, %s39
    %p50 = scmp.eq.s32.totalorder %s16, 0
    %p51 = por %p49, %p50
    %p52 = scmp.ne.s32.totalorder %s38, %s39
    %p53 = scmp.eq.s32.totalorder %s17, 7
    %p54 = por %p52, %p53
    %p56 = scmp.ne.s32.totalorder %s39, %s55
    %p57 = scmp.eq.s32.totalorder %s17, 0
    %p58 = por %p56, %p57
    %s60 = sadd.s32 %s59, 1
    %p63 = scmp.eq.s32.totalorder %s11, 7
    %p64 = scmp.ne.s32.totalorder %s59, %s61
    %p65 = scmp.eq.s32.totalorder %s11, 0
    %p66 = por %p64, %p65
    %p67 = scmp.ne.s32.totalorder %s59, %s61
    %p68 = scmp.eq.s32.totalorder %s16, 7
    %p69 = por %p67, %p68
    %p70 = scmp.ne.s32.totalorder %s61, %s62
    %p71 = scmp.eq.s32.totalorder %s16, 0
    %p72 = por %p70, %p71
    %p73 = scmp.ne.s32.totalorder %s61, %s62
    %p74 = scmp.eq.s32.totalorder %s17, 7
    %p75 = por %p73, %p74
    %p77 = scmp.ne.s32.totalorder %s62, %s76
    %p78 = scmp.eq.s32.totalorder %s17, 0
    %p79 = por %p77, %p78
    %s81 = sadd.s32 %s80, 1
    %p84 = scmp.eq.s32.totalorder %s11, 7
    %p85 = scmp.ne.s32.totalorder %s80, %s82
    %p86 = scmp.eq.s32.totalorder %s11, 0
    %p87 = por %p85, %p86
    %p88 = scmp.ne.s32.totalorder %s80, %s82
    %p89 = scmp.eq.s32.totalorder %s16, 7
    %p90 = por %p88, %p89
    %p91 = scmp.ne.s32.totalorder %s82, %s83
    %p92 = scmp.eq.s32.totalorder %s16, 0
    %p93 = por %p91, %p92
    %p94 = scmp.ne.s32.totalorder %s82, %s83
    %p95 = scmp.eq.s32.totalorder %s17, 7
    %p96 = por %p94, %p95
    %p98 = scmp.ne.s32.totalorder %s83, %s97
    %p99 = scmp.eq.s32.totalorder %s17, 0
    %p100 = por %p98, %p99
    %s102 = sadd.s32 %s101, 1
    %p105 = scmp.eq.s32.totalorder %s11, 7
    %p106 = scmp.ne.s32.totalorder %s101, %s103
    %p107 = scmp.eq.s32.totalorder %s11, 0
    %p108 = por %p106, %p107
    %p109 = scmp.ne.s32.totalorder %s101, %s103
    %p110 = scmp.eq.s32.totalorder %s16, 7
    %p111 = por %p109, %p110
    %p112 = scmp.ne.s32.totalorder %s103, %s104
    %p113 = scmp.eq.s32.totalorder %s16, 0
    %p114 = por %p112, %p113
    %p115 = scmp.ne.s32.totalorder %s103, %s104
    %p116 = scmp.eq.s32.totalorder %s17, 7
    %p117 = por %p115, %p116
    %p119 = scmp.ne.s32.totalorder %s104, %s118
    %p120 = scmp.eq.s32.totalorder %s17, 0
    %p121 = por %p119, %p120
    %s123 = sadd.s32 %s122, 1
    %p126 = scmp.eq.s32.totalorder %s11, 7
    %p127 = scmp.ne.s32.totalorder %s122, %s124
    %p128 = scmp.eq.s32.totalorder %s11, 0
    %p129 = por %p127, %p128
    %p130 = scmp.ne.s32.totalorder %s122, %s124
    %p131 = scmp.eq.s32.totalorder %s16, 7
    %p132 = por %p130, %p131
    %p133 = scmp.ne.s32.totalorder %s124, %s125
    %p134 = scmp.eq.s32.totalorder %s16, 0
    %p135 = por %p133, %p134
    %p136 = scmp.ne.s32.totalorder %s124, %s125
    %p137 = scmp.eq.s32.totalorder %s17, 7
    %p138 = por %p136, %p137
    %p140 = scmp.ne.s32.totalorder %s125, %s139
    %p141 = scmp.eq.s32.totalorder %s17, 0
    %p142 = por %p140, %p141
    %s143 = ssub.s32 %s18, %s30
    %s144 = ssub.s32 %s19, %s26
    %s145 = sor.u32 %s143, %s144
    %p146 = scmp.eq.s32.totalorder %s145, 0
    %s148 = sadd.s32 %s147, 1
    %s149 = scalar_select %p146, %s147, %s148
    %p152 = pneg %p146
    %p153 = scmp.eq.s32.totalorder %s11, 7
    %p154 = por %p152, %p153
    %p155 = scmp.ne.s32.totalorder %s147, %s150
    %p156 = scmp.eq.s32.totalorder %s11, 0
    %p157 = por %p155, %p156
    %p158 = scmp.ne.s32.totalorder %s147, %s150
    %p159 = scmp.eq.s32.totalorder %s16, 7
    %p160 = por %p158, %p159
    %p161 = scmp.ne.s32.totalorder %s150, %s151
    %p162 = scmp.eq.s32.totalorder %s16, 0
    %p163 = por %p161, %p162
    %p164 = scmp.ne.s32.totalorder %s150, %s151
    %p165 = scmp.eq.s32.totalorder %s17, 7
    %p166 = por %p164, %p165
    %p168 = scmp.ne.s32.totalorder %s151, %s167
    %p169 = scmp.eq.s32.totalorder %s17, 0
    %p170 = por %p168, %p169
    %p171 = scmp.le.s32.totalorder 1, %s11
    %p172 = scmp.lt.s32.totalorder %s11, 9
    %p173 = pnand %p171, %p172
    %p174 = pneg %p173
    // Predicated region
    $region9: #{temporal_conv_net.9} parent=5 // pred_check
      _
    $region10: #{temporal_conv_net.9} parent=5 // pred_check_branch
      %176 = sbr.rel (%p173) target = $region12
    $region11: #{temporal_conv_net.9} parent=5 // pred_region
      %s177 = ssub.s32 %s11, 1
      // Predicated region
      $region13: #{temporal_conv_net.9} parent=11 // pred_check
        %p178 = pneg %p72
      $region14: #{temporal_conv_net.9} parent=11 // pred_check_branch
        %180 = sbr.rel (%p178) target = $region16
      $region15: #{temporal_conv_net.9} parent=11 // pred_region
        _
      $region16: #{temporal_conv_net.9} parent=11 // pred_fallthru
        _
      // Predicated region
      $region17: #{temporal_conv_net.9} parent=11 // pred_check
        %p181 = pneg %p93
      $region18: #{temporal_conv_net.9} parent=11 // pred_check_branch
        %183 = sbr.rel (%p181) target = $region20
      $region19: #{temporal_conv_net.9} parent=11 // pred_region
        _
      $region20: #{temporal_conv_net.9} parent=11 // pred_fallthru
        _
      // Predicated region
      $region21: #{temporal_conv_net.9} parent=11 // pred_check
        %p184 = pneg %p114
      $region22: #{temporal_conv_net.9} parent=11 // pred_check_branch
        %186 = sbr.rel (%p184) target = $region24
      $region23: #{temporal_conv_net.9} parent=11 // pred_region
        _
      $region24: #{temporal_conv_net.9} parent=11 // pred_fallthru
        _
      // Predicated region
      $region25: #{temporal_conv_net.9} parent=11 // pred_check
        %p187 = pneg %p135
      $region26: #{temporal_conv_net.9} parent=11 // pred_check_branch
        %189 = sbr.rel (%p187) target = $region28
      $region27: #{temporal_conv_net.9} parent=11 // pred_region
        _
      $region28: #{temporal_conv_net.9} parent=11 // pred_fallthru
        _
    $region12: #{temporal_conv_net.9} parent=5 // pred_fallthru
      _
    %p190 = scmp.lt.s32.totalorder %s11, 8
    // Predicated region
    $region29: #{temporal_conv_net.9} parent=5 // pred_check
      %p191 = pneg %p190
    $region30: #{temporal_conv_net.9} parent=5 // pred_check_branch
      %193 = sbr.rel (%p191) target = $region32
    $region31: #{temporal_conv_net.9} parent=5 // pred_region
      // Predicated region
      $region33: #{temporal_conv_net.9} parent=31 // pred_check
        %p194 = pneg %p45
      $region34: #{temporal_conv_net.9} parent=31 // pred_check_branch
        %196 = sbr.rel (%p194) target = $region36
      $region35: #{temporal_conv_net.9} parent=31 // pred_region
        %p197 = scmp.lt.s32.totalorder %s18, 1
        %s198 = scalar_select %p197, %s18, 1
        %p199 = scmp.lt.s32.totalorder %s19, 3
        %s200 = scalar_select %p199, %s19, 3
        %s201 = smul.addr %s198, 4
        %s202 = sadd.s32 %s200, %s201
        %s203 = smul.addr %s202, 8
        %s204 = scalar_lea.vmem %s0, %s203
      $region36: #{temporal_conv_net.9} parent=31 // pred_fallthru
        _
    $region32: #{temporal_conv_net.9} parent=5 // pred_fallthru
      _
    %p205 = scmp.le.s32.totalorder 1, %s11
    %p206 = scmp.lt.s32.totalorder %s11, 9
    %p207 = pnand %p205, %p206
    %p208 = pneg %p207
    // Predicated region
    $region37: #{temporal_conv_net.9} parent=5 // pred_check
      _
    $region38: #{temporal_conv_net.9} parent=5 // pred_check_branch
      %210 = sbr.rel (%p207) target = $region40
    $region39: #{temporal_conv_net.9} parent=5 // pred_region
      %s211 = ssub.s32 %s11, 1
      %p212 = scmp.lt.s32.totalorder %s20, 1
      %s213 = scalar_select %p212, %s20, 1
      %p214 = scmp.lt.s32.totalorder %s21, 3
      %s215 = scalar_select %p214, %s21, 3
      %s216 = smul.addr %s213, 4
      %s217 = sadd.s32 %s215, %s216
      %s218 = smul.addr %s217, 8
      %s219 = scalar_lea.vmem %s0, %s218
      %p220 = pneg %p51
      %p221 = pneg %p48
      %p222 = pneg %p72
      %p223 = pneg %p69
      %p224 = pneg %p93
      %p225 = pneg %p90
      %p226 = pneg %p114
      %p227 = pneg %p111
      %p228 = pneg %p135
      %p229 = pneg %p132
      %p230 = pneg %p163
      %p231 = pneg %p160
      %p232 = scmp.lt.s32.totalorder %s20, 1
      %s233 = scalar_select %p232, %s20, 1
      %p234 = scmp.lt.s32.totalorder %s21, 3
      %s235 = scalar_select %p234, %s21, 3
      %s236 = smul.addr %s233, 4
      %s237 = sadd.s32 %s235, %s236
      %s238 = smul.addr %s237, 8
      %s239 = scalar_lea.vmem %s5, %s238
      %p240 = scmp.lt.s32.totalorder %s20, 1
      %s241 = scalar_select %p240, %s20, 1
      %p242 = scmp.lt.s32.totalorder %s21, 3
      %s243 = scalar_select %p242, %s21, 3
      %s244 = smul.addr %s241, 4
      %s245 = sadd.s32 %s243, %s244
      %s246 = smul.addr %s245, 8
      %s247 = scalar_lea.vmem %s0, %s246
      %p248 = scmp.lt.s32.totalorder %s20, 1
      %s249 = scalar_select %p248, %s20, 1
      %p250 = scmp.lt.s32.totalorder %s21, 3
      %s251 = scalar_select %p250, %s21, 3
      %s252 = smul.addr %s249, 4
      %s253 = sadd.s32 %s251, %s252
      %s254 = smul.addr %s253, 8
      %s255 = scalar_lea.vmem %s5, %s254
      %v256 = vld [vmem:[%s247] sm:$0xff]
      %p257 = scmp.eq.s32.totalorder %s21, 0
      // Predicated region
      $region41: #{temporal_conv_net.9} parent=39 // pred_check
        %p258 = pneg %p257
      $region42: #{temporal_conv_net.9} parent=39 // pred_check_branch
        %260 = sbr.rel (%p258) target = $region44
      $region43: #{temporal_conv_net.9} parent=39 // pred_region
        %261 = vst [vmem:[#allocation2] sm:$0xff] 0.0
        %262 = vst [vmem:[#allocation2 + $0x8] sm:$0xff] 0.0
        %263 = vst [vmem:[#allocation2 + $0x10] sm:$0xff] 0.0
        %264 = vst [vmem:[#allocation2 + $0x18] sm:$0xff] 0.0
      $region44: #{temporal_conv_net.9} parent=39 // pred_fallthru
        _
      %p265 = scmp.gt.s32.totalorder %s21, 0
      // Predicated region
      $region45: #{temporal_conv_net.9} parent=39 // pred_check
        %p266 = pneg %p265
      $region46: #{temporal_conv_net.9} parent=39 // pred_check_branch
        %268 = sbr.rel (%p266) target = $region48
      $region47: #{temporal_conv_net.9} parent=39 // pred_region
        %v269 = vld [vmem:[#allocation4] sm:$0xff]
        %v270 = vld [vmem:[#allocation4 + $0x8] sm:$0xff]
        %v271 = vld [vmem:[#allocation4 + $0x10] sm:$0xff]
        %v272 = vld [vmem:[#allocation4 + $0x18] sm:$0xff]
        %273 = vst [vmem:[#allocation2] sm:$0xff] %v269
        %274 = vst [vmem:[#allocation2 + $0x8] sm:$0xff] %v270
        %275 = vst [vmem:[#allocation2 + $0x10] sm:$0xff] %v271
        %276 = vst [vmem:[#allocation2 + $0x18] sm:$0xff] %v272
      $region48: #{temporal_conv_net.9} parent=39 // pred_fallthru
        _
      %277 = vst [vmem:[#allocation2 + $0x20] sm:$0xff] %v256
      %v278 = vld [vmem:[#allocation2 + $0x8] sm:$0xff]
      %v279 = vld [vmem:[#allocation2 + $0x10] sm:$0xff]
      %v280 = vld [vmem:[#allocation2 + $0x18] sm:$0xff]
      %v281 = vld [vmem:[#allocation2 + $0x20] sm:$0xff]
      %282 = vst [vmem:[#allocation4] sm:$0xff] %v278
      %283 = vst [vmem:[#allocation4 + $0x8] sm:$0xff] %v279
      %284 = vst [vmem:[#allocation4 + $0x10] sm:$0xff] %v280
      %285 = vst [vmem:[#allocation4 + $0x18] sm:$0xff] %v281
      %v286 = vld [vmem:[#allocation2 + $0x10] sm:$0xff]
      %v287 = vld [vmem:[#allocation2 + $0x18] sm:$0xff]
      %v288 = vld [vmem:[#allocation2 + $0x20] sm:$0xff]
      %v289 = vld [vmem:[#allocation2] sm:$0xff]
      %v290 = vld [vmem:[#allocation2 + $0x8] sm:$0xff]
      %v291 = vld [vmem:[#allocation2 + $0x10] sm:$0xff]
      %v292 = vld [vmem:[%s1] sm:$0xff]
      %v293 = vld [vmem:[%s1 + $0x8] sm:$0xff]
      %v294 = vld [vmem:[%s1 + $0x10] sm:$0xff]
      %v295 = vld [vmem:[%s1 + $0x18] sm:$0xff]
      %v296 = vld [vmem:[%s1 + $0x20] sm:$0xff]
      %v297 = vld [vmem:[%s1 + $0x28] sm:$0xff]
      %v298 = vld [vmem:[%s1 + $0x30] sm:$0xff]
      %v299 = vld [vmem:[%s1 + $0x38] sm:$0xff]
      %v300 = vld [vmem:[%s1 + $0x40] sm:$0xff]
      %v301 = vld [vmem:[%s1 + $0x48] sm:$0xff]
      %v302 = vld [vmem:[%s1 + $0x50] sm:$0xff]
      %v303 = vld [vmem:[%s1 + $0x58] sm:$0xff]
      %v304 = vld [vmem:[%s1 + $0x60] sm:$0xff]
      %v305 = vld [vmem:[%s1 + $0x68] sm:$0xff]
      %v306 = vld [vmem:[%s1 + $0x70] sm:$0xff]
      %v307 = vld [vmem:[%s1 + $0x78] sm:$0xff]
      %v308 = vld [vmem:[%s1 + $0x80] sm:$0xff]
      %v309 = vld [vmem:[%s1 + $0x88] sm:$0xff]
      %v310 = vld [vmem:[%s1 + $0x90] sm:$0xff]
      %v311 = vld [vmem:[%s1 + $0x98] sm:$0xff]
      %v312 = vld [vmem:[%s1 + $0xa0] sm:$0xff]
      %v313 = vld [vmem:[%s1 + $0xa8] sm:$0xff]
      %v314 = vld [vmem:[%s1 + $0xb0] sm:$0xff]
      %v315 = vld [vmem:[%s1 + $0xb8] sm:$0xff]
      %v316 = vld [vmem:[%s1 + $0xc0] sm:$0xff]
      %v317 = vld [vmem:[%s1 + $0xc8] sm:$0xff]
      %v318 = vld [vmem:[%s1 + $0xd0] sm:$0xff]
      %v319 = vld [vmem:[%s1 + $0xd8] sm:$0xff]
      %v320 = vld [vmem:[%s1 + $0xe0] sm:$0xff]
      %v321 = vld [vmem:[%s1 + $0xe8] sm:$0xff]
      %v322 = vld [vmem:[%s1 + $0xf0] sm:$0xff]
      %v323 = vld [vmem:[%s1 + $0xf8] sm:$0xff]
      %v324 = vld [vmem:[%s2] sm:$0x1]
      %v326 = vperm.slane %v324, 0
      %328 = vmatpush.msra.mxu0 %v307
      %329 = vmatpush.msra.mxu0 %v306
      %330 = vmatpush.msra.mxu0 %v305
      %331 = vmatpush.msra.mxu0 %v304
      %332 = vmatpush.msra.mxu0 %v303
      %333 = vmatpush.msra.mxu0 %v302
      %334 = vmatpush.msra.mxu0 %v301
      %335 = vmatpush.msra.mxu0 %v300
      %336 = vmatpush.msra.mxu0 %v299
      %337 = vmatpush.msra.mxu0 %v298
      %338 = vmatpush.msra.mxu0 %v297
      %339 = vmatpush.msra.mxu0 %v296
      %340 = vmatpush.msra.mxu0 %v295
      %341 = vmatpush.msra.mxu0 %v294
      %342 = vmatpush.msra.mxu0 %v293
      %343 = vmatpush.msra.mxu0 %v292
      %344 = vmatmul.f32.gmra.mxu0 %v286
      %v345 = vpop.f32.mrf.mxu0
      %v346 = vadd.f32 %v326, %v345
      %347 = vmatmul.f32.gmra.mxu0 %v287
      %v348 = vpop.f32.mrf.mxu0
      %v349 = vadd.f32 %v326, %v348
      %350 = vmatmul.f32.gmra.mxu0 %v288
      %v351 = vpop.f32.mrf.mxu0
      %v352 = vadd.f32 %v326, %v351
      %353 = vdwg.mxu0
      %354 = vmatpush.msra.mxu0 %v323
      %355 = vmatpush.msra.mxu0 %v322
      %356 = vmatpush.msra.mxu0 %v321
      %357 = vmatpush.msra.mxu0 %v320
      %358 = vmatpush.msra.mxu0 %v319
      %359 = vmatpush.msra.mxu0 %v318
      %360 = vmatpush.msra.mxu0 %v317
      %361 = vmatpush.msra.mxu0 %v316
      %362 = vmatpush.msra.mxu0 %v315
      %363 = vmatpush.msra.mxu0 %v314
      %364 = vmatpush.msra.mxu0 %v313
      %365 = vmatpush.msra.mxu0 %v312
      %366 = vmatpush.msra.mxu0 %v311
      %367 = vmatpush.msra.mxu0 %v310
      %368 = vmatpush.msra.mxu0 %v309
      %369 = vmatpush.msra.mxu0 %v308
      %370 = vmatmul.f32.gmra.mxu0 %v289
      %v371 = vpop.f32.mrf.mxu0
      %v372 = vadd.f32 %v346, %v371
      %373 = vmatmul.f32.gmra.mxu0 %v290
      %v374 = vpop.f32.mrf.mxu0
      %v375 = vadd.f32 %v349, %v374
      %376 = vmatmul.f32.gmra.mxu0 %v291
      %v377 = vpop.f32.mrf.mxu0
      %v378 = vadd.f32 %v352, %v377
      %379 = vdwg.mxu0
      %v380 = vmax.f32 %v372, 0.0
      %v381 = vmax.f32 %v375, 0.0
      %v382 = vmax.f32 %v378, 0.0
      %383 = vst [vmem:[#allocation3] sm:$0xff] %v380
      %384 = vst [vmem:[#allocation3 + $0x8] sm:$0xff] %v381
      %385 = vst [vmem:[#allocation3 + $0x10] sm:$0xff] %v382
      %s386 = smul.u32 %s21, 8
      %p387 = scmp.lt.s32.totalorder %s386, 16
      // Predicated region
      $region49: #{temporal_conv_net.9} parent=39 // pred_check
        %p388 = pneg %p387
      $region50: #{temporal_conv_net.9} parent=39 // pred_check_branch
        %390 = sbr.rel (%p388) target = $region52
      $region51: #{temporal_conv_net.9} parent=39 // pred_region
        %v391 = vld [vmem:[#allocation3] sm:$0xff]
        %v392 = vld [vmem:[#allocation3 + $0x8] sm:$0xff]
        %v393 = vlaneseq
        %v394 = vshrl.u32 %v393, 7
        %v395 = vadd.s32 %v394, 8
        %s396 = ssub.s32 16, %s386
        %v397 = vstv %s396
        %vm398 = vcmp.lt.s32.totalorder %v394, %v397
        %vm399 = vcmp.lt.s32.totalorder %v395, %v397
        %v400 = vsel %vm398, 0.0, %v391
        %v401 = vsel %vm399, 0.0, %v392
        %402 = vst [vmem:[#allocation3] sm:$0xff] %v400
        %403 = vst [vmem:[#allocation3 + $0x8] sm:$0xff] %v401
      $region52: #{temporal_conv_net.9} parent=39 // pred_fallthru
        _
      %v404 = vld [vmem:[#allocation3 + $0x10] sm:$0xff]
      %v405 = vld [vmem:[#allocation3] sm:$0xff]
      %v406 = vld [vmem:[%s3] sm:$0xff]
      %v407 = vld [vmem:[%s3 + $0x8] sm:$0xff]
      %v408 = vld [vmem:[%s3 + $0x10] sm:$0xff]
      %v409 = vld [vmem:[%s3 + $0x18] sm:$0xff]
      %v410 = vld [vmem:[%s3 + $0x20] sm:$0xff]
      %v411 = vld [vmem:[%s3 + $0x28] sm:$0xff]
      %v412 = vld [vmem:[%s3 + $0x30] sm:$0xff]
      %v413 = vld [vmem:[%s3 + $0x38] sm:$0xff]
      %v414 = vld [vmem:[%s3 + $0x40] sm:$0xff]
      %v415 = vld [vmem:[%s3 + $0x48] sm:$0xff]
      %v416 = vld [vmem:[%s3 + $0x50] sm:$0xff]
      %v417 = vld [vmem:[%s3 + $0x58] sm:$0xff]
      %v418 = vld [vmem:[%s3 + $0x60] sm:$0xff]
      %v419 = vld [vmem:[%s3 + $0x68] sm:$0xff]
      %v420 = vld [vmem:[%s3 + $0x70] sm:$0xff]
      %v421 = vld [vmem:[%s3 + $0x78] sm:$0xff]
      %v422 = vld [vmem:[%s3 + $0x80] sm:$0xff]
      %v423 = vld [vmem:[%s3 + $0x88] sm:$0xff]
      %v424 = vld [vmem:[%s3 + $0x90] sm:$0xff]
      %v425 = vld [vmem:[%s3 + $0x98] sm:$0xff]
      %v426 = vld [vmem:[%s3 + $0xa0] sm:$0xff]
      %v427 = vld [vmem:[%s3 + $0xa8] sm:$0xff]
      %v428 = vld [vmem:[%s3 + $0xb0] sm:$0xff]
      %v429 = vld [vmem:[%s3 + $0xb8] sm:$0xff]
      %v430 = vld [vmem:[%s3 + $0xc0] sm:$0xff]
      %v431 = vld [vmem:[%s3 + $0xc8] sm:$0xff]
      %v432 = vld [vmem:[%s3 + $0xd0] sm:$0xff]
      %v433 = vld [vmem:[%s3 + $0xd8] sm:$0xff]
      %v434 = vld [vmem:[%s3 + $0xe0] sm:$0xff]
      %v435 = vld [vmem:[%s3 + $0xe8] sm:$0xff]
      %v436 = vld [vmem:[%s3 + $0xf0] sm:$0xff]
      %v437 = vld [vmem:[%s3 + $0xf8] sm:$0xff]
      %v438 = vld [vmem:[%s4] sm:$0x1]
      %v440 = vperm.slane %v438, 0
      %442 = vmatpush.msra.mxu0 %v421
      %443 = vmatpush.msra.mxu0 %v420
      %444 = vmatpush.msra.mxu0 %v419
      %445 = vmatpush.msra.mxu0 %v418
      %446 = vmatpush.msra.mxu0 %v417
      %447 = vmatpush.msra.mxu0 %v416
      %448 = vmatpush.msra.mxu0 %v415
      %449 = vmatpush.msra.mxu0 %v414
      %450 = vmatpush.msra.mxu0 %v413
      %451 = vmatpush.msra.mxu0 %v412
      %452 = vmatpush.msra.mxu0 %v411
      %453 = vmatpush.msra.mxu0 %v410
      %454 = vmatpush.msra.mxu0 %v409
      %455 = vmatpush.msra.mxu0 %v408
      %456 = vmatpush.msra.mxu0 %v407
      %457 = vmatpush.msra.mxu0 %v406
      %458 = vmatmul.f32.gmra.mxu0 %v404
      %v459 = vpop.f32.mrf.mxu0
      %v460 = vadd.f32 %v440, %v459
      %461 = vdwg.mxu0
      %462 = vmatpush.msra.mxu0 %v437
      %463 = vmatpush.msra.mxu0 %v436
      %464 = vmatpush.msra.mxu0 %v435
      %465 = vmatpush.msra.mxu0 %v434
      %466 = vmatpush.msra.mxu0 %v433
      %467 = vmatpush.msra.mxu0 %v432
      %468 = vmatpush.msra.mxu0 %v431
      %469 = vmatpush.msra.mxu0 %v430
      %470 = vmatpush.msra.mxu0 %v429
      %471 = vmatpush.msra.mxu0 %v428
      %472 = vmatpush.msra.mxu0 %v427
      %473 = vmatpush.msra.mxu0 %v426
      %474 = vmatpush.msra.mxu0 %v425
      %475 = vmatpush.msra.mxu0 %v424
      %476 = vmatpush.msra.mxu0 %v423
      %477 = vmatpush.msra.mxu0 %v422
      %478 = vmatmul.f32.gmra.mxu0 %v405
      %v479 = vpop.f32.mrf.mxu0
      %v480 = vadd.f32 %v460, %v479
      %481 = vdwg.mxu0
      %v482 = vmax.f32 %v480, 0.0
      %v483 = vadd.f32 %v482, %v256
      %v484 = vmax.f32 %v483, 0.0
      %485 = vst [vmem:[%s255] sm:$0xff] %v484
      %p486 = scmp.lt.s32.totalorder %s20, 1
      %s487 = scalar_select %p486, %s20, 1
      %p488 = scmp.lt.s32.totalorder %s21, 3
      %s489 = scalar_select %p488, %s21, 3
      %s490 = smul.addr %s487, 4
      %s491 = sadd.s32 %s489, %s490
      %s492 = smul.addr %s491, 8
      %s493 = scalar_lea.vmem %s5, %s492
      // Predicated region
      $region53: #{temporal_conv_net.9} parent=39 // pred_check
        %p494 = pneg %p160
      $region54: #{temporal_conv_net.9} parent=39 // pred_check_branch
        %496 = sbr.rel (%p494) target = $region56
      $region55: #{temporal_conv_net.9} parent=39 // pred_region
        _
      $region56: #{temporal_conv_net.9} parent=39 // pred_fallthru
        _
    $region40: #{temporal_conv_net.9} parent=5 // pred_fallthru
      _
    %p497 = scmp.le.s32.totalorder 2, %s11
    // Predicated region
    $region57: #{temporal_conv_net.9} parent=5 // pred_check
      %p498 = pneg %p497
    $region58: #{temporal_conv_net.9} parent=5 // pred_check_branch
      %500 = sbr.rel (%p498) target = $region60
    $region59: #{temporal_conv_net.9} parent=5 // pred_region
      %s501 = ssub.s32 %s11, 2
      // Predicated region
      $region61: #{temporal_conv_net.9} parent=59 // pred_check
        %p502 = pneg %p166
      $region62: #{temporal_conv_net.9} parent=59 // pred_check_branch
        %504 = sbr.rel (%p502) target = $region64
      $region63: #{temporal_conv_net.9} parent=59 // pred_region
        %p505 = scmp.lt.s32.totalorder %s22, 1
        %s506 = scalar_select %p505, %s22, 1
        %p507 = scmp.lt.s32.totalorder %s23, 3
        %s508 = scalar_select %p507, %s23, 3
        %s509 = smul.addr %s506, 4
        %s510 = sadd.s32 %s508, %s509
        %s511 = smul.addr %s510, 8
        %s512 = scalar_lea.vmem %s5, %s511
      $region64: #{temporal_conv_net.9} parent=59 // pred_fallthru
        _
    $region60: #{temporal_conv_net.9} parent=5 // pred_fallthru
      _
  $region6: #{temporal_conv_net.9} parent=0 // loop_footer
    %s15 = sadd.s32 1, %s11
  $region7: #{temporal_conv_net.9} parent=0 // loop_footer_branch
    %10 = sbr.rel target = $region3
  $region8: #{temporal_conv_net.9} parent=0 // loop_exit
    _

</llo_original>
